<compile_context>
chip_gen: v7x
topology: tpu7x:2x2x1
jax: 0.10.0
libtpu: 0.0.40
codegen_flags: <defaults>
</compile_context>

<pallas_src>
import functools

import numpy as np
import jax
import jax.numpy as jnp
from jax import lax
from jax.experimental import pallas as pl
from jax.experimental.pallas import tpu as pltpu


# ----------------------------------------------------------------------------
# Helpers
# ----------------------------------------------------------------------------
def _round_up(x, m):
    return ((x + m - 1) // m) * m


def _num_taps(k, s, p):
    """Number of kernel taps kh in [0, k) with kh == p (mod s)."""
    return (k - 1 - p) // s + 1


# ----------------------------------------------------------------------------
# Pallas kernel: single-K-block GEMM with fused bias (+ optional ReLU).
# No accumulator scratch, no pl.when phases -- K is one block (K <= 8192 for
# this decoder even at full scale), so the dot, bias add, ReLU and store are
# emitted directly.  Epilogue math stays in f32; cast only at the store.
# ----------------------------------------------------------------------------
def _gemm_bias_act_kernel(apply_relu, x_ref, w_ref, b_ref, o_ref):
    acc = jnp.dot(x_ref[...], w_ref[...], preferred_element_type=jnp.float32)
    out = acc + b_ref[...]                      # (1, tn) bias broadcast, f32
    if apply_relu:
        out = jnp.maximum(out, 0.0)
    o_ref[...] = out.astype(o_ref.dtype)


def gemm_bias_act(x, w, b, *, apply_relu, out_dtype):
    """Fused GEMM + bias (+ ReLU).

    x: (M, K) bf16 (cast here if not), w: (K, N) bf16 with N % 128 == 0,
    b: (1, N) f32.  Returns (M, N) in `out_dtype`.
    """
    if x.dtype != jnp.bfloat16:
        x = x.astype(jnp.bfloat16)
    m, k = x.shape
    k2, n = w.shape
    assert k == k2 and n % 128 == 0, (x.shape, w.shape)

    # tm multiple of 16 (bf16 sublane packing); 128 for large M so the M axis
    # splits into enough tiles for both v7x TensorCores.
    tm = _round_up(m, 16) if m <= 128 else 128
    mp = _round_up(m, tm)
    # tn=256 fills the 256-wide MXU on v6e/v7x; 128 is native on v5e.
    tn = 256 if n % 256 == 0 else 128

    if mp != m:
        x = jnp.pad(x, ((0, mp - m), (0, 0)))

    grid = (mp // tm, n // tn)
    out = pl.pallas_call(
        functools.partial(_gemm_bias_act_kernel, apply_relu),
        out_shape=jax.ShapeDtypeStruct((mp, n), out_dtype),
        grid_spec=pltpu.PrefetchScalarGridSpec(
            num_scalar_prefetch=0,
            grid=grid,
            in_specs=[
                pl.BlockSpec((tm, k), lambda i, j: (i, 0)),   # K = one block
                pl.BlockSpec((k, tn), lambda i, j: (0, j)),
                pl.BlockSpec((1, tn), lambda i, j: (0, j)),
            ],
            out_specs=pl.BlockSpec((tm, tn), lambda i, j: (i, j)),
        ),
        compiler_params=pltpu.CompilerParams(
            dimension_semantics=("parallel", "parallel"),
            vmem_limit_bytes=32 * 1024 * 1024,
        ),
    )(x, w, b)
    return out[:m] if mp != m else out


# ----------------------------------------------------------------------------
# One-time weight preparation (outside the forward pass).
# ----------------------------------------------------------------------------
def prepare_decoder_params(params):
    """Builds phase-stacked, lane-dense, bf16 weight matrices once.

    Polyphase math: with the input zero-padded by (mh_max-1) on every side
    (mh_max = ceil(k/s)), every output phase (p, q) of the transposed conv is
    the SAME max-tap correlation window; only the weights differ:
        tap (t_h, t_w), channel ci  ->  W[ci, co, p + m*s, q + n*s]
        where m = mh_max-1-t_h (if m < mh_p, else 0-weight), likewise n.
    So all s^2 phases share one im2col and their weights stack along N.
    """
    arrays, meta = {}, {}

    # fc: PyTorch Linear stores weight as (out, in) -> transpose to (in, out).
    w_fc = jnp.asarray(params['fc_w']).T.astype(jnp.bfloat16)
    n_fc = int(w_fc.shape[1])
    np_fc = _round_up(n_fc, 128)
    w_fc = jnp.pad(w_fc, ((0, 0), (0, np_fc - n_fc)))
    b_fc = jnp.zeros((1, np_fc), jnp.float32).at[0, :n_fc].set(
        jnp.asarray(params['fc_b'], jnp.float32))
    arrays['fc'] = (w_fc, b_fc)
    meta['fc'] = {'n_real': n_fc}

    layer_keys = [('w1', 'b1', 2, True), ('w2', 'b2', 2, True),
                  ('w3', 'b3', 2, True), ('w4', 'b4', 2, False)]
    arrays['layers'], meta['layers'] = [], []
    for wk, bk, s, relu in layer_keys:
        w_t = np.asarray(params[wk], np.float32)      # (Cin, Cout, k, k) torch
        bias = np.asarray(params[bk], np.float32)
        cin, cout, k, _ = w_t.shape
        mh_max = (k + s - 1) // s                     # ceil(k/s) taps per axis
        np_c = _round_up(cout, 128)
        n_stacked = s * s * np_c

        w_stack = np.zeros((mh_max, mh_max, cin, n_stacked), np.float32)
        b_stack = np.zeros((1, n_stacked), np.float32)
        for p in range(s):
            for q in range(s):
                col0 = (p * s + q) * np_c
                mh, mw = _num_taps(k, s, p), _num_taps(k, s, q)
                for t_h in range(mh_max):
                    m = mh_max - 1 - t_h
                    if m >= mh:
                        continue
                    for t_w in range(mh_max):
                        n = mh_max - 1 - t_w
                        if n >= mw:
                            continue
                        w_stack[t_h, t_w, :, col0:col0 + cout] = \
                            w_t[:, :, p + m * s, q + n * s]
                b_stack[0, col0:col0 + cout] = bias

        kdim = mh_max * mh_max * cin
        arrays['layers'].append(
            (jnp.asarray(w_stack.reshape(kdim, n_stacked), jnp.bfloat16),
             jnp.asarray(b_stack)))
        meta['layers'].append({'k': int(k), 'stride': int(s), 'relu': relu,
                               'cin': int(cin), 'cout': int(cout),
                               'mh_max': int(mh_max), 'np_c': int(np_c)})
    return arrays, meta


# ----------------------------------------------------------------------------
# ConvTranspose2d (stride s, padding 0) = one fused Pallas GEMM per layer.
# ----------------------------------------------------------------------------
def conv_transpose2d_fused(x, w_stack, b_stack, lmeta):
    bsz, h, w, cin = x.shape
    k, s, relu = lmeta['k'], lmeta['stride'], lmeta['relu']
    cout, mh_max, np_c = lmeta['cout'], lmeta['mh_max'], lmeta['np_c']
    oh = (h - 1) * s + k
    ow = (w - 1) * s + k
    ohp = h + mh_max - 1                      # padded per-phase output height
    owp = w + mh_max - 1

    # Shared zero padding: every phase reads the same (mh_max x mh_max) window.
    pad = mh_max - 1
    x_pad = jnp.pad(x, ((0, 0), (pad, pad), (pad, pad), (0, 0)))

    # Single phase-shared im2col (tap order = (t_h, t_w, cin), matching the
    # stacked weight rows).
    # TODO(synk): move this window extraction into the GEMM kernel
    # (Element-offset index_maps / in-kernel pl.ds) to drop the HBM copy.
    patches = [x_pad[:, th:th + ohp, tw:tw + owp, :]
               for th in range(mh_max) for tw in range(mh_max)]
    cols = jnp.concatenate(patches, axis=-1) if len(patches) > 1 else patches[0]
    cols = cols.reshape(bsz * ohp * owp, mh_max * mh_max * cin)

    out_dtype = jnp.bfloat16 if relu else jnp.float32
    y = gemm_bias_act(cols, w_stack, b_stack, apply_relu=relu,
                      out_dtype=out_dtype)                  # (M, s*s*np_c)

    # Single interleave of the s*s phase outputs (replaces 4 strided scatters).
    y = y.reshape(bsz, ohp, owp, s, s, np_c)
    y = jnp.transpose(y, (0, 1, 3, 2, 4, 5)).reshape(bsz, ohp * s, owp * s, np_c)
    return y[:, :oh, :ow, :cout]


# ----------------------------------------------------------------------------
# Decoder forward (matches torch module semantics; NCHW in/out).
# ----------------------------------------------------------------------------
def decoder_forward(z, arrays, *, meta, c0):
    bsz = z.shape[0]
    w_fc, b_fc = arrays['fc']
    h = gemm_bias_act(z.astype(jnp.bfloat16), w_fc, b_fc,
                      apply_relu=False, out_dtype=jnp.bfloat16)
    h = h[:, :meta['fc']['n_real']]
    x = h.reshape(bsz, c0, 2, 2)                 # torch .view semantics (NCHW)
    x = jnp.transpose(x, (0, 2, 3, 1))           # NHWC: channels on lane axis

    for (w_stack, b_stack), lmeta in zip(arrays['layers'], meta['layers']):
        x = conv_transpose2d_fused(x, w_stack, b_stack, lmeta)

    return jnp.transpose(x, (0, 3, 1, 2))        # back to NCHW f32 logits


# ----------------------------------------------------------------------------
# Pure-JAX/XLA reference (independent formulation via conv_general_dilated).
# ----------------------------------------------------------------------------
def decoder_reference(z, params, c0):
    bsz = z.shape[0]
    h = z @ params['fc_w'].T + params['fc_b']    # Linear with torch (out,in) W
    x = h.reshape(bsz, c0, 2, 2)
    layers = [(params['w1'], params['b1'], 2, True),
              (params['w2'], params['b2'], 2, True),
              (params['w3'], params['b3'], 2, True),
              (params['w4'], params['b4'], 2, False)]
    for w, b, s, relu in layers:
        k = w.shape[2]
        w_r = jnp.transpose(w, (1, 0, 2, 3))[:, :, ::-1, ::-1]   # OIHW, flipped
        x = lax.conv_general_dilated(
            x, w_r, window_strides=(1, 1),
            padding=[(k - 1, k - 1), (k - 1, k - 1)],
            lhs_dilation=(s, s),
            dimension_numbers=('NCHW', 'OIHW', 'NCHW'))
        x = x + b.reshape(1, -1, 1, 1)
        if relu:
            x = jnp.maximum(x, 0.0)
    return x


# ----------------------------------------------------------------------------
# Deterministic synthetic parameter init (shapes follow the torch __init__,
# channel counts scaled down for a small runnable example).
# ----------------------------------------------------------------------------
def init_decoder_params(key, n_latent, c0, c1, c2, c3, c_out=3):
    ks = jax.random.split(key, 10)

    def rnd(k, shape, fan_in):
        return jax.random.normal(k, shape, jnp.float32) / np.sqrt(float(fan_in))

    return {
        # Linear in PyTorch layout (out_features, in_features)
        'fc_w': rnd(ks[0], (c0 * 2 * 2, n_latent), n_latent),
        'fc_b': rnd(ks[1], (c0 * 2 * 2,), n_latent),
        # ConvTranspose2d weights in PyTorch layout (Cin, Cout, k, k)
        'w1': rnd(ks[2], (c0, c1, 3, 3), c0 * 9),
        'b1': rnd(ks[3], (c1,), c0 * 9),
        'w2': rnd(ks[4], (c1, c2, 3, 3), c1 * 9),
        'b2': rnd(ks[5], (c2,), c1 * 9),
        'w3': rnd(ks[6], (c2, c3, 5, 5), c2 * 25),
        'b3': rnd(ks[7], (c3,), c2 * 25),
        'w4': rnd(ks[8], (c3, c_out, 5, 5), c3 * 25),
        'b4': rnd(ks[9], (c_out,), c3 * 25),
    }


if __name__ == "__main__":
    # Small shapes consistent with the module (channels scaled down from
    # 2048/1024/512/256 -> 64/32/16/8); spatial path 2 -> 5 -> 11 -> 25 -> 53.
    B, N_LATENT = 2, 32
    C0, C1, C2, C3 = 64, 32, 16, 8

    key = jax.random.PRNGKey(0)
    kz, kp = jax.random.split(key)
    z = jax.random.normal(kz, (B, N_LATENT), jnp.float32)
    params = init_decoder_params(kp, N_LATENT, C0, C1, C2, C3)

    # One-time weight layout prep (transpose/flip/phase-stack/pad/bf16).
    arrays, meta = prepare_decoder_params(params)
    fwd = jax.jit(functools.partial(decoder_forward, meta=meta, c0=C0))

    logits = jax.block_until_ready(fwd(z, arrays))
    assert logits.shape == (B, 3, 53, 53), logits.shape

    ref = jax.block_until_ready(decoder_reference(z, params, C0))
    # bf16 MXU inputs + bf16 inter-layer activations vs f32 XLA reference.
    np.testing.assert_allclose(np.asarray(logits), np.asarray(ref),
                               rtol=5e-2, atol=5e-2)

    print("KERNEL_OK")
</pallas_src>

<mosaic_0001>
module attributes {stable_mosaic.version = 11 : i64} {
  func.func @_gemm_bias_act_kernel(%arg0: i32, %arg1: i32, %arg2: memref<16x32xbf16, #tpu.memory_space<vmem>>, %arg3: memref<32x256xbf16, #tpu.memory_space<vmem>>, %arg4: memref<1x256xf32, #tpu.memory_space<vmem>>, %arg5: memref<16x256xbf16, #tpu.memory_space<vmem>>) attributes {dimension_semantics = [#tpu.dimension_semantics<parallel>, #tpu.dimension_semantics<parallel>], iteration_bounds = array<i64: 1, 1>, scalar_prefetch = 0 : i64, scratch_operands = 0 : i64, tpu.core_type = #tpu.core_type<tc>, window_params = [{transform_indices = @transform_0, window_bounds = array<i64: 16, 32>}, {transform_indices = @transform_1, window_bounds = array<i64: 32, 256>}, {transform_indices = @transform_2, window_bounds = array<i64: 1, 256>}, {transform_indices = @transform_3, window_bounds = array<i64: 16, 256>}]} {
    %c0 = arith.constant 0 : index
    %c0_0 = arith.constant 0 : index
    %0 = vector.load %arg2[%c0, %c0_0] : memref<16x32xbf16, #tpu.memory_space<vmem>>, vector<16x32xbf16>
    %c0_1 = arith.constant 0 : index
    %c0_2 = arith.constant 0 : index
    %1 = vector.load %arg3[%c0_1, %c0_2] : memref<32x256xbf16, #tpu.memory_space<vmem>>, vector<32x256xbf16>
    %cst = arith.constant dense<0.000000e+00> : vector<16x256xf32>
    %2 = tpu.matmul %0, %1, %cst {dimension_numbers = #tpu.dot_dimension_numbers<[1], [0], [0], [1], [0, 0, 1, 1], [], []>} : vector<16x32xbf16>, vector<32x256xbf16>, vector<16x256xf32> -> vector<16x256xf32>
    %c0_3 = arith.constant 0 : index
    %c0_4 = arith.constant 0 : index
    %3 = vector.load %arg4[%c0_3, %c0_4] : memref<1x256xf32, #tpu.memory_space<vmem>>, vector<1x256xf32>
    %4 = vector.broadcast %3 : vector<1x256xf32> to vector<16x256xf32>
    %5 = arith.addf %2, %4 : vector<16x256xf32>
    %6 = arith.truncf %5 : vector<16x256xf32> to vector<16x256xbf16>
    %c0_5 = arith.constant 0 : index
    %c0_6 = arith.constant 0 : index
    %7 = vector.load %arg5[%c0_5, %c0_6] : memref<16x256xbf16, #tpu.memory_space<vmem>>, vector<16x256xbf16>
    tpu.vector_store %arg5[%c0_5, %c0_6], %6 {strides = array<i32>} : memref<16x256xbf16, #tpu.memory_space<vmem>>, vector<16x256xbf16>,
    return
  }
  func.func @transform_0(%arg0: i32, %arg1: i32) -> (i32, i32) {
    %c0_i32 = arith.constant 0 : i32
    %c0_i32_0 = arith.constant 0 : i32
    return %arg0, %c0_i32 : i32, i32
  }
  func.func @transform_1(%arg0: i32, %arg1: i32) -> (i32, i32) {
    %c0_i32 = arith.constant 0 : i32
    %c0_i32_0 = arith.constant 0 : i32
    return %c0_i32, %arg1 : i32, i32
  }
  func.func @transform_2(%arg0: i32, %arg1: i32) -> (i32, i32) {
    %c0_i32 = arith.constant 0 : i32
    %c0_i32_0 = arith.constant 0 : i32
    return %c0_i32, %arg1 : i32, i32
  }
  func.func @transform_3(%arg0: i32, %arg1: i32) -> (i32, i32) {
    %c0_i32 = arith.constant 0 : i32
    return %arg0, %arg1 : i32, i32
  }
}

module attributes {stable_mosaic.version = 11 : i64} {
  func.func @_gemm_bias_act_kernel(%arg0: i32, %arg1: i32, %arg2: memref<32x256xbf16, #tpu.memory_space<vmem>>, %arg3: memref<256x256xbf16, #tpu.memory_space<vmem>>, %arg4: memref<1x256xf32, #tpu.memory_space<vmem>>, %arg5: memref<32x256xbf16, #tpu.memory_space<vmem>>) attributes {dimension_semantics = [#tpu.dimension_semantics<parallel>, #tpu.dimension_semantics<parallel>], iteration_bounds = array<i64: 1, 2>, scalar_prefetch = 0 : i64, scratch_operands = 0 : i64, tpu.core_type = #tpu.core_type<tc>, window_params = [{transform_indices = @transform_0, window_bounds = array<i64: 32, 256>}, {transform_indices = @transform_1, window_bounds = array<i64: 256, 256>}, {transform_indices = @transform_2, window_bounds = array<i64: 1, 256>}, {transform_indices = @transform_3, window_bounds = array<i64: 32, 256>}]} {
    %c0 = arith.constant 0 : index
    %c0_0 = arith.constant 0 : index
    %0 = vector.load %arg2[%c0, %c0_0] : memref<32x256xbf16, #tpu.memory_space<vmem>>, vector<32x256xbf16>
    %c0_1 = arith.constant 0 : index
    %c0_2 = arith.constant 0 : index
    %1 = vector.load %arg3[%c0_1, %c0_2] : memref<256x256xbf16, #tpu.memory_space<vmem>>, vector<256x256xbf16>
    %cst = arith.constant dense<0.000000e+00> : vector<32x256xf32>
    %2 = tpu.matmul %0, %1, %cst {dimension_numbers = #tpu.dot_dimension_numbers<[1], [0], [0], [1], [0, 0, 1, 1], [], []>} : vector<32x256xbf16>, vector<256x256xbf16>, vector<32x256xf32> -> vector<32x256xf32>
    %c0_3 = arith.constant 0 : index
    %c0_4 = arith.constant 0 : index
    %3 = vector.load %arg4[%c0_3, %c0_4] : memref<1x256xf32, #tpu.memory_space<vmem>>, vector<1x256xf32>
    %4 = vector.broadcast %3 : vector<1x256xf32> to vector<32x256xf32>
    %5 = arith.addf %2, %4 : vector<32x256xf32>
    %cst_5 = arith.constant 0.000000e+00 : f32
    %6 = vector.broadcast %cst_5 : f32 to vector<32x256xf32>
    %7 = arith.maximumf %5, %6 : vector<32x256xf32>
    %8 = arith.truncf %7 : vector<32x256xf32> to vector<32x256xbf16>
    %c0_6 = arith.constant 0 : index
    %c0_7 = arith.constant 0 : index
    %9 = vector.load %arg5[%c0_6, %c0_7] : memref<32x256xbf16, #tpu.memory_space<vmem>>, vector<32x256xbf16>
    tpu.vector_store %arg5[%c0_6, %c0_7], %8 {strides = array<i32>} : memref<32x256xbf16, #tpu.memory_space<vmem>>, vector<32x256xbf16>,
    return
  }
  func.func @transform_0(%arg0: i32, %arg1: i32) -> (i32, i32) {
    %c0_i32 = arith.constant 0 : i32
    %c0_i32_0 = arith.constant 0 : i32
    return %arg0, %c0_i32 : i32, i32
  }
  func.func @transform_1(%arg0: i32, %arg1: i32) -> (i32, i32) {
    %c0_i32 = arith.constant 0 : i32
    %c0_i32_0 = arith.constant 0 : i32
    return %c0_i32, %arg1 : i32, i32
  }
  func.func @transform_2(%arg0: i32, %arg1: i32) -> (i32, i32) {
    %c0_i32 = arith.constant 0 : i32
    %c0_i32_0 = arith.constant 0 : i32
    return %c0_i32, %arg1 : i32, i32
  }
  func.func @transform_3(%arg0: i32, %arg1: i32) -> (i32, i32) {
    %c0_i32 = arith.constant 0 : i32
    return %arg0, %arg1 : i32, i32
  }
}

module attributes {stable_mosaic.version = 11 : i64} {
  func.func @_gemm_bias_act_kernel(%arg0: i32, %arg1: i32, %arg2: memref<80x128xbf16, #tpu.memory_space<vmem>>, %arg3: memref<128x256xbf16, #tpu.memory_space<vmem>>, %arg4: memref<1x256xf32, #tpu.memory_space<vmem>>, %arg5: memref<80x256xbf16, #tpu.memory_space<vmem>>) attributes {dimension_semantics = [#tpu.dimension_semantics<parallel>, #tpu.dimension_semantics<parallel>], iteration_bounds = array<i64: 1, 2>, scalar_prefetch = 0 : i64, scratch_operands = 0 : i64, tpu.core_type = #tpu.core_type<tc>, window_params = [{transform_indices = @transform_0, window_bounds = array<i64: 80, 128>}, {transform_indices = @transform_1, window_bounds = array<i64: 128, 256>}, {transform_indices = @transform_2, window_bounds = array<i64: 1, 256>}, {transform_indices = @transform_3, window_bounds = array<i64: 80, 256>}]} {
    %c0 = arith.constant 0 : index
    %c0_0 = arith.constant 0 : index
    %0 = vector.load %arg2[%c0, %c0_0] : memref<80x128xbf16, #tpu.memory_space<vmem>>, vector<80x128xbf16>
    %c0_1 = arith.constant 0 : index
    %c0_2 = arith.constant 0 : index
    %1 = vector.load %arg3[%c0_1, %c0_2] : memref<128x256xbf16, #tpu.memory_space<vmem>>, vector<128x256xbf16>
    %cst = arith.constant dense<0.000000e+00> : vector<80x256xf32>
    %2 = tpu.matmul %0, %1, %cst {dimension_numbers = #tpu.dot_dimension_numbers<[1], [0], [0], [1], [0, 0, 1, 1], [], []>} : vector<80x128xbf16>, vector<128x256xbf16>, vector<80x256xf32> -> vector<80x256xf32>
    %c0_3 = arith.constant 0 : index
    %c0_4 = arith.constant 0 : index
    %3 = vector.load %arg4[%c0_3, %c0_4] : memref<1x256xf32, #tpu.memory_space<vmem>>, vector<1x256xf32>
    %4 = vector.broadcast %3 : vector<1x256xf32> to vector<80x256xf32>
    %5 = arith.addf %2, %4 : vector<80x256xf32>
    %cst_5 = arith.constant 0.000000e+00 : f32
    %6 = vector.broadcast %cst_5 : f32 to vector<80x256xf32>
    %7 = arith.maximumf %5, %6 : vector<80x256xf32>
    %8 = arith.truncf %7 : vector<80x256xf32> to vector<80x256xbf16>
    %c0_6 = arith.constant 0 : index
    %c0_7 = arith.constant 0 : index
    %9 = vector.load %arg5[%c0_6, %c0_7] : memref<80x256xbf16, #tpu.memory_space<vmem>>, vector<80x256xbf16>
    tpu.vector_store %arg5[%c0_6, %c0_7], %8 {strides = array<i32>} : memref<80x256xbf16, #tpu.memory_space<vmem>>, vector<80x256xbf16>,
    return
  }
  func.func @transform_0(%arg0: i32, %arg1: i32) -> (i32, i32) {
    %c0_i32 = arith.constant 0 : i32
    %c0_i32_0 = arith.constant 0 : i32
    return %arg0, %c0_i32 : i32, i32
  }
  func.func @transform_1(%arg0: i32, %arg1: i32) -> (i32, i32) {
    %c0_i32 = arith.constant 0 : i32
    %c0_i32_0 = arith.constant 0 : i32
    return %c0_i32, %arg1 : i32, i32
  }
  func.func @transform_2(%arg0: i32, %arg1: i32) -> (i32, i32) {
    %c0_i32 = arith.constant 0 : i32
    %c0_i32_0 = arith.constant 0 : i32
    return %c0_i32, %arg1 : i32, i32
  }
  func.func @transform_3(%arg0: i32, %arg1: i32) -> (i32, i32) {
    %c0_i32 = arith.constant 0 : i32
    return %arg0, %arg1 : i32, i32
  }
}

module attributes {stable_mosaic.version = 11 : i64} {
  func.func @_gemm_bias_act_kernel(%arg0: i32, %arg1: i32, %arg2: memref<128x144xbf16, #tpu.memory_space<vmem>>, %arg3: memref<144x256xbf16, #tpu.memory_space<vmem>>, %arg4: memref<1x256xf32, #tpu.memory_space<vmem>>, %arg5: memref<128x256xbf16, #tpu.memory_space<vmem>>) attributes {dimension_semantics = [#tpu.dimension_semantics<parallel>, #tpu.dimension_semantics<parallel>], iteration_bounds = array<i64: 3, 2>, scalar_prefetch = 0 : i64, scratch_operands = 0 : i64, tpu.core_type = #tpu.core_type<tc>, window_params = [{transform_indices = @transform_0, window_bounds = array<i64: 128, 144>}, {transform_indices = @transform_1, window_bounds = array<i64: 144, 256>}, {transform_indices = @transform_2, window_bounds = array<i64: 1, 256>}, {transform_indices = @transform_3, window_bounds = array<i64: 128, 256>}]} {
    %c0 = arith.constant 0 : index
    %c0_0 = arith.constant 0 : index
    %0 = vector.load %arg2[%c0, %c0_0] : memref<128x144xbf16, #tpu.memory_space<vmem>>, vector<128x144xbf16>
    %c0_1 = arith.constant 0 : index
    %c0_2 = arith.constant 0 : index
    %1 = vector.load %arg3[%c0_1, %c0_2] : memref<144x256xbf16, #tpu.memory_space<vmem>>, vector<144x256xbf16>
    %cst = arith.constant dense<0.000000e+00> : vector<128x256xf32>
    %2 = tpu.matmul %0, %1, %cst {dimension_numbers = #tpu.dot_dimension_numbers<[1], [0], [0], [1], [0, 0, 1, 1], [], []>} : vector<128x144xbf16>, vector<144x256xbf16>, vector<128x256xf32> -> vector<128x256xf32>
    %c0_3 = arith.constant 0 : index
    %c0_4 = arith.constant 0 : index
    %3 = vector.load %arg4[%c0_3, %c0_4] : memref<1x256xf32, #tpu.memory_space<vmem>>, vector<1x256xf32>
    %4 = vector.broadcast %3 : vector<1x256xf32> to vector<128x256xf32>
    %5 = arith.addf %2, %4 : vector<128x256xf32>
    %cst_5 = arith.constant 0.000000e+00 : f32
    %6 = vector.broadcast %cst_5 : f32 to vector<128x256xf32>
    %7 = arith.maximumf %5, %6 : vector<128x256xf32>
    %8 = arith.truncf %7 : vector<128x256xf32> to vector<128x256xbf16>
    %c0_6 = arith.constant 0 : index
    %c0_7 = arith.constant 0 : index
    %9 = vector.load %arg5[%c0_6, %c0_7] : memref<128x256xbf16, #tpu.memory_space<vmem>>, vector<128x256xbf16>
    tpu.vector_store %arg5[%c0_6, %c0_7], %8 {strides = array<i32>} : memref<128x256xbf16, #tpu.memory_space<vmem>>, vector<128x256xbf16>,
    return
  }
  func.func @transform_0(%arg0: i32, %arg1: i32) -> (i32, i32) {
    %c0_i32 = arith.constant 0 : i32
    %c0_i32_0 = arith.constant 0 : i32
    return %arg0, %c0_i32 : i32, i32
  }
  func.func @transform_1(%arg0: i32, %arg1: i32) -> (i32, i32) {
    %c0_i32 = arith.constant 0 : i32
    %c0_i32_0 = arith.constant 0 : i32
    return %c0_i32, %arg1 : i32, i32
  }
  func.func @transform_2(%arg0: i32, %arg1: i32) -> (i32, i32) {
    %c0_i32 = arith.constant 0 : i32
    %c0_i32_0 = arith.constant 0 : i32
    return %c0_i32, %arg1 : i32, i32
  }
  func.func @transform_3(%arg0: i32, %arg1: i32) -> (i32, i32) {
    %c0_i32 = arith.constant 0 : i32
    return %arg0, %arg1 : i32, i32
  }
}

module attributes {stable_mosaic.version = 11 : i64} {
  func.func @_gemm_bias_act_kernel(%arg0: i32, %arg1: i32, %arg2: memref<128x72xbf16, #tpu.memory_space<vmem>>, %arg3: memref<72x256xbf16, #tpu.memory_space<vmem>>, %arg4: memref<1x256xf32, #tpu.memory_space<vmem>>, %arg5: memref<128x256xf32, #tpu.memory_space<vmem>>) attributes {dimension_semantics = [#tpu.dimension_semantics<parallel>, #tpu.dimension_semantics<parallel>], iteration_bounds = array<i64: 12, 2>, scalar_prefetch = 0 : i64, scratch_operands = 0 : i64, tpu.core_type = #tpu.core_type<tc>, window_params = [{transform_indices = @transform_0, window_bounds = array<i64: 128, 72>}, {transform_indices = @transform_1, window_bounds = array<i64: 72, 256>}, {transform_indices = @transform_2, window_bounds = array<i64: 1, 256>}, {transform_indices = @transform_3, window_bounds = array<i64: 128, 256>}]} {
    %c0 = arith.constant 0 : index
    %c0_0 = arith.constant 0 : index
    %0 = vector.load %arg2[%c0, %c0_0] : memref<128x72xbf16, #tpu.memory_space<vmem>>, vector<128x72xbf16>
    %c0_1 = arith.constant 0 : index
    %c0_2 = arith.constant 0 : index
    %1 = vector.load %arg3[%c0_1, %c0_2] : memref<72x256xbf16, #tpu.memory_space<vmem>>, vector<72x256xbf16>
    %cst = arith.constant dense<0.000000e+00> : vector<128x256xf32>
    %2 = tpu.matmul %0, %1, %cst {dimension_numbers = #tpu.dot_dimension_numbers<[1], [0], [0], [1], [0, 0, 1, 1], [], []>} : vector<128x72xbf16>, vector<72x256xbf16>, vector<128x256xf32> -> vector<128x256xf32>
    %c0_3 = arith.constant 0 : index
    %c0_4 = arith.constant 0 : index
    %3 = vector.load %arg4[%c0_3, %c0_4] : memref<1x256xf32, #tpu.memory_space<vmem>>, vector<1x256xf32>
    %4 = vector.broadcast %3 : vector<1x256xf32> to vector<128x256xf32>
    %5 = arith.addf %2, %4 : vector<128x256xf32>
    %c0_5 = arith.constant 0 : index
    %c0_6 = arith.constant 0 : index
    %6 = vector.load %arg5[%c0_5, %c0_6] : memref<128x256xf32, #tpu.memory_space<vmem>>, vector<128x256xf32>
    tpu.vector_store %arg5[%c0_5, %c0_6], %5 {strides = array<i32>} : memref<128x256xf32, #tpu.memory_space<vmem>>, vector<128x256xf32>,
    return
  }
  func.func @transform_0(%arg0: i32, %arg1: i32) -> (i32, i32) {
    %c0_i32 = arith.constant 0 : i32
    %c0_i32_0 = arith.constant 0 : i32
    return %arg0, %c0_i32 : i32, i32
  }
  func.func @transform_1(%arg0: i32, %arg1: i32) -> (i32, i32) {
    %c0_i32 = arith.constant 0 : i32
    %c0_i32_0 = arith.constant 0 : i32
    return %c0_i32, %arg1 : i32, i32
  }
  func.func @transform_2(%arg0: i32, %arg1: i32) -> (i32, i32) {
    %c0_i32 = arith.constant 0 : i32
    %c0_i32_0 = arith.constant 0 : i32
    return %c0_i32, %arg1 : i32, i32
  }
  func.func @transform_3(%arg0: i32, %arg1: i32) -> (i32, i32) {
    %c0_i32 = arith.constant 0 : i32
    return %arg0, %arg1 : i32, i32
  }
}

</mosaic_0001>

<llo_original>
// kernel: decoder_forward.5
$region0: #{decoder_forward.5}
  #allocation0 [shape = 'u32[]', space=smem, size = 0x4, offset = 0x4, fixed_abs, tag = 'smem constant byte address 0x4 - core index']
  #allocation1 [shape = 'u32[144,128]{1,0:T(1,128)}', space=vmem, size = 0x12000, scoped, tag = 'internal scratch']
  %s0 = inlined_call_operand.vmem [shape: bf16[16,32], index: 0, kind: input, shape index: {}]
  %s1 = inlined_call_operand.hbm [shape: bf16[32,256], index: 1, kind: input, shape index: {}]
  %s2 = inlined_call_operand.hbm [shape: f32[1,256], index: 2, kind: input, shape index: {}]
  %s3 = inlined_call_operand.vmem [shape: bf16[16,256], index: 3, kind: output, shape index: {}]
  %s4 = sld [smem:[#allocation0]]
  $region30: #{decoder_forward.5} parent=0
    _
  %s6 = ssub.s32 1, %s4
  %s7 = scalar_select 0, %s6, %s4
  $region1: #{decoder_forward.5} parent=0
    #allocation2 [shape = 'u8[16384]{0}', space=vmem, size = 0x4000, scoped, tag = 'input window, operand 1, single buffered']
    #allocation3 [shape = 's32[1]{0}', space=sflag, size = 0x4, scoped, tag = 'scoped memory for decoder_forward.5']
    #allocation4 [shape = 'u8[1024]{0}', space=vmem, size = 0x400, scoped, tag = 'input window, operand 2, single buffered']
    #allocation5 [shape = 's32[1]{0}', space=sflag, size = 0x4, scoped, tag = 'scoped memory for decoder_forward.5']
    %8 = vsyncpa [#allocation3], 0
    %9 = vsyncpa [#allocation5], 0
    // Predicated region
    $region2: #{decoder_forward.5} parent=1 // pred_check
      _
    $region3: #{decoder_forward.5} parent=1 // pred_check_branch
      %11 = sbr.rel (0) target = $region5
    $region4: #{decoder_forward.5} parent=1 // pred_region
      _
    $region5: #{decoder_forward.5} parent=1 // pred_fallthru
      _
    // Predicated region
    $region6: #{decoder_forward.5} parent=1 // pred_check
      _
    $region7: #{decoder_forward.5} parent=1 // pred_check_branch
      %13 = sbr.rel (0) target = $region9
    $region8: #{decoder_forward.5} parent=1 // pred_region
      %s15 = ssub.s32 512, 512
      %16 = vsyncadd [#allocation3], %s15
      %s17 = sshll.u32 [#allocation2], 4
      %s18 = int_to_ptr.vmem [resolvable:$true] %s17
      %23 = dma.hbm_to_vmem [thread:$0]  %s1, 512, %s18, [#allocation3], 128, 128, 8
    $region9: #{decoder_forward.5} parent=1 // pred_fallthru
      _
    // Predicated region
    $region10: #{decoder_forward.5} parent=1 // pred_check
      _
    $region11: #{decoder_forward.5} parent=1 // pred_check_branch
      %25 = sbr.rel (0) target = $region13
    $region12: #{decoder_forward.5} parent=1 // pred_region
      %s27 = ssub.s32 32, 32
      %28 = vsyncadd [#allocation5], %s27
      %s30 = sshll.u32 [#allocation4], 4
      %s31 = int_to_ptr.vmem [resolvable:$true] %s30
      %33 = dma.hbm_to_vmem [thread:$0]  %s2, 32, %s31, [#allocation5]
    $region13: #{decoder_forward.5} parent=1 // pred_fallthru
      _
    // Predicated region
    $region14: #{decoder_forward.5} parent=1 // pred_check
      _
    $region15: #{decoder_forward.5} parent=1 // pred_check_branch
      %35 = sbr.rel (0) target = $region17
    $region16: #{decoder_forward.5} parent=1 // pred_region
      %36 = dma.done [#allocation3], 512
    $region17: #{decoder_forward.5} parent=1 // pred_fallthru
      _
    // Predicated region
    $region18: #{decoder_forward.5} parent=1 // pred_check
      _
    $region19: #{decoder_forward.5} parent=1 // pred_check_branch
      %38 = sbr.rel (0) target = $region21
    $region20: #{decoder_forward.5} parent=1 // pred_region
      %39 = dma.done [#allocation5], 32
    $region21: #{decoder_forward.5} parent=1 // pred_fallthru
      _
    %v41 = vld [vmem:[%s0] sm:$0xf]
    %v42 = vld [vmem:[%s0 + $0x4] sm:$0xf]
    %v43 = vld [vmem:[#allocation2] sm:$0xff]
    %v44 = vld [vmem:[#allocation2 + $0x8] sm:$0xff]
    %v45 = vld [vmem:[#allocation2 + $0x10] sm:$0xff]
    %v46 = vld [vmem:[#allocation2 + $0x18] sm:$0xff]
    %v47 = vld [vmem:[#allocation4] sm:$0x3]
    %v49 = vlaneseq
    %v50 = vshrl.u32 %v49, 7
    %v51 = vsub.s32 0, %v50
    %v52 = vrot.slane %v47, %v51
    %v53 = vlaneseq
    %v54 = vshrl.u32 %v53, 7
    %v55 = vsub.s32 1, %v54
    %v56 = vrot.slane %v47, %v55
    %v61 = vunpack.c.l.b16 %v41
    %v62 = vunpack.c.l.b16 %v42
    %v63 = vpack.c.b16 %v62, %v61
    %v68 = vunpack.c.l.b16 %v43
    %v69 = vunpack.c.h.b16 %v43
    %v70 = vunpack.c.l.b16 %v44
    %v71 = vunpack.c.h.b16 %v44
    %v72 = vunpack.c.l.b16 %v45
    %v73 = vunpack.c.h.b16 %v45
    %v74 = vunpack.c.l.b16 %v46
    %v75 = vunpack.c.h.b16 %v46
    %v76 = vpack.c.b16 %v70, %v68
    %v77 = vpack.c.b16 %v71, %v69
    %v78 = vpack.c.b16 %v74, %v72
    %v79 = vpack.c.b16 %v75, %v73
    %vm84 = vcmask 261120
    %v86 = vsel %vm84, %v63, 0
    %88 = vmatprep.subr.bf16.mxu0 %v77
    %89 = vmatpush1.bf16.msra.mxu0 %v76
    %90 = vmatprep.subr.bf16.mxu0 %v79
    %91 = vmatpush1.bf16.msra.mxu0 %v78
    %92 = vmatprep.subr.bf16.mxu0 0
    %93 = vmatpush1.bf16.msra.mxu0 0
    %94 = vmatprep.subr.bf16.mxu0 0
    %95 = vmatpush1.bf16.msra.mxu0 0
    %96 = vmatprep.subr.bf16.mxu0 0
    %97 = vmatpush1.bf16.msra.mxu0 0
    %98 = vmatprep.subr.bf16.mxu0 0
    %99 = vmatpush1.bf16.msra.mxu0 0
    %100 = vmatprep.subr.bf16.mxu0 0
    %101 = vmatpush1.bf16.msra.mxu0 0
    %102 = vmatprep.subr.bf16.mxu0 0
    %103 = vmatpush1.bf16.msra.mxu0 0
    %104 = vmatprep.subr.bf16.mxu0 0
    %105 = vmatpush1.bf16.msra.mxu0 0
    %106 = vmatprep.subr.bf16.mxu0 0
    %107 = vmatpush1.bf16.msra.mxu0 0
    %108 = vmatprep.subr.bf16.mxu0 0
    %109 = vmatpush1.bf16.msra.mxu0 0
    %110 = vmatprep.subr.bf16.mxu0 0
    %111 = vmatpush1.bf16.msra.mxu0 0
    %112 = vmatprep.subr.bf16.mxu0 0
    %113 = vmatpush1.bf16.msra.mxu0 0
    %114 = vmatprep.subr.bf16.mxu0 0
    %115 = vmatpush1.bf16.msra.mxu0 0
    %116 = vmatprep.subr.bf16.mxu0 0
    %117 = vmatpush1.bf16.msra.mxu0 0
    %118 = vmatprep.subr.bf16.mxu0 0
    %119 = vmatpush1.bf16.msra.mxu0 0
    %120 = vmatprep.mubr.bf16.mxu0 0
    %121 = vmatmul.mubr.bf16.gmra.mrb[0].mxu0 %v86
    %v122 = vpop.f32.mrb[0].mxu0
    %v123 = vadd.f32 %v52, %v122
    %v124 = vpop.f32.mrb[0].mxu0
    %v125 = vadd.f32 %v56, %v124
    %v126 = vpop.f32.mrb[0].mxu0
    %v127 = vadd.f32 %v52, %v126
    %v128 = vpop.f32.mrb[0].mxu0
    %v129 = vadd.f32 %v56, %v128
    %130 = vdwg.mxu0
    %v131 = vpack.c.bf16 %v127, %v123
    %v132 = vpack.c.bf16 %v129, %v125
    %v135 = vunpack.c.l.b16 %v131
    %v136 = vunpack.c.l.b16 %v132
    %v137 = vunpack.c.h.b16 %v131
    %v138 = vunpack.c.h.b16 %v132
    %v139 = vpack.c.b16 %v136, %v135
    %v140 = vpack.c.b16 %v138, %v137
    %143 = vst [vmem:[%s3] sm:$0xff] %v139
    %144 = vst [vmem:[%s3 + $0x8] sm:$0xff] %v140
    // Predicated region
    $region22: #{decoder_forward.5} parent=1 // pred_check
      _
    $region23: #{decoder_forward.5} parent=1 // pred_check_branch
      %146 = sbr.rel (0) target = $region25
    $region24: #{decoder_forward.5} parent=1 // pred_region
      _
    $region25: #{decoder_forward.5} parent=1 // pred_fallthru
      _
    // Predicated region
    $region26: #{decoder_forward.5} parent=1 // pred_check
      _
    $region27: #{decoder_forward.5} parent=1 // pred_check_branch
      %148 = sbr.rel (0) target = $region29
    $region28: #{decoder_forward.5} parent=1 // pred_region
      _
    $region29: #{decoder_forward.5} parent=1 // pred_fallthru
      _
    %149 = vsyncpa [#allocation3], 1
    %150 = vsyncpa [#allocation5], 1

// kernel: decoder_forward.6
$region0: #{decoder_forward.6}
  #allocation0 [shape = 'u32[]', space=smem, size = 0x4, offset = 0x4, fixed_abs, tag = 'smem constant byte address 0x4 - core index']
  #allocation1 [shape = 'u32[144,128]{1,0:T(1,128)}', space=vmem, size = 0x12000, scoped, tag = 'internal scratch']
  %s0 = inlined_call_operand.vmem [shape: bf16[32,256], index: 0, kind: input, shape index: {}]
  %s1 = inlined_call_operand.hbm [shape: bf16[256,512], index: 1, kind: input, shape index: {}]
  %s2 = inlined_call_operand.hbm [shape: f32[1,512], index: 2, kind: input, shape index: {}]
  %s3 = inlined_call_operand.vmem [shape: bf16[32,512], index: 3, kind: output, shape index: {}]
  %s4 = sld [smem:[#allocation0]]
  $region87: #{decoder_forward.6} parent=0
    _
  %s6 = ssub.s32 1, %s4
  %s7 = scalar_select 0, %s6, %s4
  $region1: #{decoder_forward.6} parent=0
    #allocation2 [shape = 'u8[262144]{0}', space=vmem, size = 0x40000, scoped, tag = 'input window, operand 1']
    #allocation3 [shape = 's32[2]{0}', space=sflag, size = 0x8, scoped, tag = 'scoped memory for decoder_forward.6']
    #allocation4 [shape = 'u8[2048]{0}', space=vmem, size = 0x800, scoped, tag = 'input window, operand 2']
    #allocation5 [shape = 's32[2]{0}', space=sflag, size = 0x8, scoped, tag = 'scoped memory for decoder_forward.6']
    #allocation6 [shape = 'u8[32768]{0}', space=vmem, size = 0x8000, scoped, tag = 'output window, operand 0']
    %8 = vsyncpa [#allocation3], 0
    %s9 = scalar_lea.sflag [#allocation3], 1
    %10 = vsyncpa %s9, 0
    %11 = vsyncpa [#allocation5], 0
    %s12 = scalar_lea.sflag [#allocation5], 1
    %13 = vsyncpa %s12, 0
    loop: start=0, step=1, limit=4
    $region2: #{decoder_forward.6} parent=1 // loop_pre_header
      _
    $region3: #{decoder_forward.6} parent=1 // loop_header
      %s15 = sphi 0, %s19
      %p16 = scmp.ge.s32.totalorder %s15, 4
      %s22 = sphi 0, %s34
      %s23 = sphi 0, %s30
      %s24 = sphi 0, %s22
      %s25 = sphi 0, %s23
      %s26 = sphi 0, %s24
      %s27 = sphi 0, %s25
      %s37 = sphi 0, %s39
      %s40 = sphi 0, %s37
      %s41 = sphi 0, %s40
      %s57 = sphi 0, %s41
      %s63 = sphi 0, %s65
      %s66 = sphi 0, %s63
      %s67 = sphi 0, %s66
      %s83 = sphi 0, %s67
      %s89 = sphi 0, %s91
      %s92 = sphi 0, %s89
      %s93 = sphi 0, %s92
      %s109 = sphi 0, %s93
      %s117 = sphi 0, %s119
      %s120 = sphi 0, %s117
      %s121 = sphi 0, %s120
      %s137 = sphi 0, %s121
    $region4: #{decoder_forward.6} parent=1 // loop_header_branch
      %18 = sbr.rel (%p16) target = $region8
    $region5: #{decoder_forward.6} parent=1 // loop_body
      %s20 = ssub.s32 %s15, 1
      %s21 = ssub.s32 %s15, 2
      %s28 = sadd.s32 1, %s23
      %p29 = scmp.ge.s32.totalorder %s28, 2
      %s30 = scalar_select %p29, 0, %s28
      %s31 = sadd.s32 1, %s22
      %s32 = scalar_select %p29, %s31, %s22
      %p33 = scmp.ge.s32.totalorder %s32, 1
      %s34 = scalar_select %p33, 0, %s32
      %s35 = ssub.s32 %s22, %s34
      %p36 = scmp.eq.s32.totalorder %s35, 0
      %s38 = sadd.s32 %s37, 1
      %s39 = scalar_select %p36, %s37, %s38
      %p42 = pneg %p36
      %p43 = scmp.eq.s32.totalorder %s15, 1
      %p44 = por %p42, %p43
      %p45 = scmp.ne.s32.totalorder %s37, %s40
      %p46 = scmp.eq.s32.totalorder %s15, 0
      %p47 = por %p45, %p46
      %p48 = scmp.ne.s32.totalorder %s37, %s40
      %p49 = scmp.eq.s32.totalorder %s20, 1
      %p50 = por %p48, %p49
      %p51 = scmp.ne.s32.totalorder %s40, %s41
      %p52 = scmp.eq.s32.totalorder %s20, 0
      %p53 = por %p51, %p52
      %p54 = scmp.ne.s32.totalorder %s40, %s41
      %p55 = scmp.eq.s32.totalorder %s21, 1
      %p56 = por %p54, %p55
      %p58 = scmp.ne.s32.totalorder %s41, %s57
      %p59 = scmp.eq.s32.totalorder %s21, 0
      %p60 = por %p58, %p59
      %s61 = ssub.s32 %s23, %s30
      %p62 = scmp.eq.s32.totalorder %s61, 0
      %s64 = sadd.s32 %s63, 1
      %s65 = scalar_select %p62, %s63, %s64
      %p68 = pneg %p62
      %p69 = scmp.eq.s32.totalorder %s15, 1
      %p70 = por %p68, %p69
      %p71 = scmp.ne.s32.totalorder %s63, %s66
      %p72 = scmp.eq.s32.totalorder %s15, 0
      %p73 = por %p71, %p72
      %p74 = scmp.ne.s32.totalorder %s63, %s66
      %p75 = scmp.eq.s32.totalorder %s20, 1
      %p76 = por %p74, %p75
      %p77 = scmp.ne.s32.totalorder %s66, %s67
      %p78 = scmp.eq.s32.totalorder %s20, 0
      %p79 = por %p77, %p78
      %p80 = scmp.ne.s32.totalorder %s66, %s67
      %p81 = scmp.eq.s32.totalorder %s21, 1
      %p82 = por %p80, %p81
      %p84 = scmp.ne.s32.totalorder %s67, %s83
      %p85 = scmp.eq.s32.totalorder %s21, 0
      %p86 = por %p84, %p85
      %s87 = ssub.s32 %s23, %s30
      %p88 = scmp.eq.s32.totalorder %s87, 0
      %s90 = sadd.s32 %s89, 1
      %s91 = scalar_select %p88, %s89, %s90
      %p94 = pneg %p88
      %p95 = scmp.eq.s32.totalorder %s15, 1
      %p96 = por %p94, %p95
      %p97 = scmp.ne.s32.totalorder %s89, %s92
      %p98 = scmp.eq.s32.totalorder %s15, 0
      %p99 = por %p97, %p98
      %p100 = scmp.ne.s32.totalorder %s89, %s92
      %p101 = scmp.eq.s32.totalorder %s20, 1
      %p102 = por %p100, %p101
      %p103 = scmp.ne.s32.totalorder %s92, %s93
      %p104 = scmp.eq.s32.totalorder %s20, 0
      %p105 = por %p103, %p104
      %p106 = scmp.ne.s32.totalorder %s92, %s93
      %p107 = scmp.eq.s32.totalorder %s21, 1
      %p108 = por %p106, %p107
      %p110 = scmp.ne.s32.totalorder %s93, %s109
      %p111 = scmp.eq.s32.totalorder %s21, 0
      %p112 = por %p110, %p111
      %s113 = ssub.s32 %s22, %s34
      %s114 = ssub.s32 %s23, %s30
      %s115 = sor.u32 %s113, %s114
      %p116 = scmp.eq.s32.totalorder %s115, 0
      %s118 = sadd.s32 %s117, 1
      %s119 = scalar_select %p116, %s117, %s118
      %p122 = pneg %p116
      %p123 = scmp.eq.s32.totalorder %s15, 1
      %p124 = por %p122, %p123
      %p125 = scmp.ne.s32.totalorder %s117, %s120
      %p126 = scmp.eq.s32.totalorder %s15, 0
      %p127 = por %p125, %p126
      %p128 = scmp.ne.s32.totalorder %s117, %s120
      %p129 = scmp.eq.s32.totalorder %s20, 1
      %p130 = por %p128, %p129
      %p131 = scmp.ne.s32.totalorder %s120, %s121
      %p132 = scmp.eq.s32.totalorder %s20, 0
      %p133 = por %p131, %p132
      %p134 = scmp.ne.s32.totalorder %s120, %s121
      %p135 = scmp.eq.s32.totalorder %s21, 1
      %p136 = por %p134, %p135
      %p138 = scmp.ne.s32.totalorder %s121, %s137
      %p139 = scmp.eq.s32.totalorder %s21, 0
      %p140 = por %p138, %p139
      %p141 = scmp.le.s32.totalorder 1, %s15
      %p142 = scmp.lt.s32.totalorder %s15, 3
      %p143 = pnand %p141, %p142
      %p144 = pneg %p143
      // Predicated region
      $region9: #{decoder_forward.6} parent=5 // pred_check
        _
      $region10: #{decoder_forward.6} parent=5 // pred_check_branch
        %146 = sbr.rel (%p143) target = $region12
      $region11: #{decoder_forward.6} parent=5 // pred_region
        %s147 = ssub.s32 %s15, 1
        // Predicated region
        $region13: #{decoder_forward.6} parent=11 // pred_check
          %p148 = pneg %p53
        $region14: #{decoder_forward.6} parent=11 // pred_check_branch
          %150 = sbr.rel (%p148) target = $region16
        $region15: #{decoder_forward.6} parent=11 // pred_region
          %s151 = smul.u32 4, %s24
          %p152 = scmp.lt.s32.totalorder %s151, 3
          %s153 = scalar_select %p152, %s151, 3
          %s154 = smul.addr %s153, 2
          %s155 = smul.addr %s154, 4
          %s156 = scalar_lea.vmem %s0, %s155
          %s157 = smul.u32 4, %s24
        $region16: #{decoder_forward.6} parent=11 // pred_fallthru
          _
      $region12: #{decoder_forward.6} parent=5 // pred_fallthru
        _
      %p158 = scmp.lt.s32.totalorder %s15, 2
      // Predicated region
      $region17: #{decoder_forward.6} parent=5 // pred_check
        %p159 = pneg %p158
      $region18: #{decoder_forward.6} parent=5 // pred_check_branch
        %161 = sbr.rel (%p159) target = $region20
      $region19: #{decoder_forward.6} parent=5 // pred_region
        // Predicated region
        $region21: #{decoder_forward.6} parent=19 // pred_check
          %p162 = pneg %p73
        $region22: #{decoder_forward.6} parent=19 // pred_check_branch
          %164 = sbr.rel (%p162) target = $region24
        $region23: #{decoder_forward.6} parent=19 // pred_region
          %s165 = sand.u32 %s63, 1
          %s166 = scalar_lea.sflag [#allocation3], %s165
          %s167 = sand.u32 %s63, 1
          %s168 = smul.addr %s167, 256
          %s169 = scalar_lea.vmem [#allocation2], %s168
          %s170 = smul.u32 2, %s23
          %s172 = ssub.s32 4096, 4096
          %173 = vsyncadd %s166, %s172
          %s174 = smul.addr %s170, 64
          %s175 = scalar_lea.hbm %s1, %s174
          %s176 = sshll.u32 %s169, 4
          %s177 = int_to_ptr.vmem [resolvable:$true] %s176
          %182 = dma.hbm_to_vmem [thread:$0]  %s175, 4096, %s177, %s166, 256, 128, 8
        $region24: #{decoder_forward.6} parent=19 // pred_fallthru
          _
        // Predicated region
        $region25: #{decoder_forward.6} parent=19 // pred_check
          %p183 = pneg %p99
        $region26: #{decoder_forward.6} parent=19 // pred_check_branch
          %185 = sbr.rel (%p183) target = $region28
        $region27: #{decoder_forward.6} parent=19 // pred_region
          %s186 = sand.u32 %s89, 1
          %s187 = scalar_lea.sflag [#allocation5], %s186
          %s188 = sand.u32 %s89, 1
          %s189 = smul.addr %s188, 2
          %s190 = scalar_lea.vmem [#allocation4], %s189
          %s191 = smul.u32 2, %s23
          %s193 = ssub.s32 32, 32
          %194 = vsyncadd %s187, %s193
          %s195 = smul.addr %s191, 16
          %s196 = scalar_lea.hbm %s2, %s195
          %s198 = sshll.u32 %s190, 4
          %s199 = int_to_ptr.vmem [resolvable:$true] %s198
          %201 = dma.hbm_to_vmem [thread:$0]  %s196, 32, %s199, %s187
        $region28: #{decoder_forward.6} parent=19 // pred_fallthru
          _
      $region20: #{decoder_forward.6} parent=5 // pred_fallthru
        _
      %p202 = scmp.le.s32.totalorder 1, %s15
      %p203 = scmp.lt.s32.totalorder %s15, 3
      %p204 = pnand %p202, %p203
      %p205 = pneg %p204
      // Predicated region
      $region29: #{decoder_forward.6} parent=5 // pred_check
        _
      $region30: #{decoder_forward.6} parent=5 // pred_check_branch
        %207 = sbr.rel (%p204) target = $region32
      $region31: #{decoder_forward.6} parent=5 // pred_region
        %s208 = ssub.s32 %s15, 1
        %s209 = sand.u32 %s66, 1
        %s210 = scalar_lea.sflag [#allocation3], %s209
        %s211 = sand.u32 %s66, 1
        %s212 = smul.addr %s211, 256
        %s213 = scalar_lea.vmem [#allocation2], %s212
        // Predicated region
        $region33: #{decoder_forward.6} parent=31 // pred_check
          %p214 = pneg %p79
        $region34: #{decoder_forward.6} parent=31 // pred_check_branch
          %216 = sbr.rel (%p214) target = $region36
        $region35: #{decoder_forward.6} parent=31 // pred_region
          %217 = dma.done %s210, 4096
        $region36: #{decoder_forward.6} parent=31 // pred_fallthru
          _
        %s218 = sand.u32 %s92, 1
        %s219 = scalar_lea.sflag [#allocation5], %s218
        %s220 = sand.u32 %s92, 1
        %s221 = smul.addr %s220, 2
        %s222 = scalar_lea.vmem [#allocation4], %s221
        // Predicated region
        $region37: #{decoder_forward.6} parent=31 // pred_check
          %p223 = pneg %p105
        $region38: #{decoder_forward.6} parent=31 // pred_check_branch
          %225 = sbr.rel (%p223) target = $region40
        $region39: #{decoder_forward.6} parent=31 // pred_region
          %226 = dma.done %s219, 32
        $region40: #{decoder_forward.6} parent=31 // pred_fallthru
          _
        %s227 = smul.u32 4, %s24
        %p228 = scmp.lt.s32.totalorder %s227, 3
        %s229 = scalar_select %p228, %s227, 3
        %s230 = smul.addr %s229, 2
        %s231 = smul.addr %s230, 4
        %s232 = scalar_lea.vmem %s0, %s231
        %p233 = pneg %p53
        %p234 = pneg %p50
        %s235 = sand.u32 %s66, 1
        %s236 = scalar_lea.sflag [#allocation3], %s235
        %s237 = sand.u32 %s66, 1
        %s238 = smul.addr %s237, 256
        %s239 = scalar_lea.vmem [#allocation2], %s238
        %p240 = pneg %p79
        %p241 = pneg %p76
        %s242 = sand.u32 %s92, 1
        %s243 = scalar_lea.sflag [#allocation5], %s242
        %s244 = sand.u32 %s92, 1
        %s245 = smul.addr %s244, 2
        %s246 = scalar_lea.vmem [#allocation4], %s245
        %p247 = pneg %p105
        %p248 = pneg %p102
        %p249 = pneg %p133
        %p250 = pneg %p130
        %s251 = sand.u32 %s120, 1
        %s252 = sand.u32 %s120, 1
        %s253 = smul.addr %s252, 32
        %s254 = scalar_lea.vmem [#allocation6], %s253
        %s255 = smul.u32 4, %s24
        %p256 = scmp.lt.s32.totalorder %s255, 3
        %s257 = scalar_select %p256, %s255, 3
        %s258 = smul.addr %s257, 2
        %s259 = smul.addr %s258, 4
        %s260 = scalar_lea.vmem %s0, %s259
        %s261 = smul.u32 4, %s24
        %s262 = smul.u32 2, %s25
        %s263 = smul.u32 2, %s25
        %s264 = smul.u32 4, %s24
        %s265 = smul.u32 2, %s25
        %v266 = vld [vmem:[%s260] sm:$0xff]
        %v267 = vld [vmem:[%s260 + $0x8] sm:$0xff]
        %v268 = vld [vmem:[%s260 + $0x10] sm:$0xff]
        %v269 = vld [vmem:[%s260 + $0x18] sm:$0xff]
        %v270 = vld [vmem:[%s213] sm:$0xff]
        %v271 = vld [vmem:[%s213 + $0x8] sm:$0xff]
        %v272 = vld [vmem:[%s213 + $0x10] sm:$0xff]
        %v273 = vld [vmem:[%s213 + $0x18] sm:$0xff]
        %v274 = vld [vmem:[%s213 + $0x20] sm:$0xff]
        %v275 = vld [vmem:[%s213 + $0x28] sm:$0xff]
        %v276 = vld [vmem:[%s213 + $0x30] sm:$0xff]
        %v277 = vld [vmem:[%s213 + $0x38] sm:$0xff]
        %v278 = vld [vmem:[%s213 + $0x40] sm:$0xff]
        %v279 = vld [vmem:[%s213 + $0x48] sm:$0xff]
        %v280 = vld [vmem:[%s213 + $0x50] sm:$0xff]
        %v281 = vld [vmem:[%s213 + $0x58] sm:$0xff]
        %v282 = vld [vmem:[%s213 + $0x60] sm:$0xff]
        %v283 = vld [vmem:[%s213 + $0x68] sm:$0xff]
        %v284 = vld [vmem:[%s213 + $0x70] sm:$0xff]
        %v285 = vld [vmem:[%s213 + $0x78] sm:$0xff]
        %v286 = vld [vmem:[%s213 + $0x80] sm:$0xff]
        %v287 = vld [vmem:[%s213 + $0x88] sm:$0xff]
        %v288 = vld [vmem:[%s213 + $0x90] sm:$0xff]
        %v289 = vld [vmem:[%s213 + $0x98] sm:$0xff]
        %v290 = vld [vmem:[%s213 + $0xa0] sm:$0xff]
        %v291 = vld [vmem:[%s213 + $0xa8] sm:$0xff]
        %v292 = vld [vmem:[%s213 + $0xb0] sm:$0xff]
        %v293 = vld [vmem:[%s213 + $0xb8] sm:$0xff]
        %v294 = vld [vmem:[%s213 + $0xc0] sm:$0xff]
        %v295 = vld [vmem:[%s213 + $0xc8] sm:$0xff]
        %v296 = vld [vmem:[%s213 + $0xd0] sm:$0xff]
        %v297 = vld [vmem:[%s213 + $0xd8] sm:$0xff]
        %v298 = vld [vmem:[%s213 + $0xe0] sm:$0xff]
        %v299 = vld [vmem:[%s213 + $0xe8] sm:$0xff]
        %v300 = vld [vmem:[%s213 + $0xf0] sm:$0xff]
        %v301 = vld [vmem:[%s213 + $0xf8] sm:$0xff]
        %v302 = vld [vmem:[%s222] sm:$0x3]
        %v304 = vlaneseq
        %v305 = vshrl.u32 %v304, 7
        %v306 = vsub.s32 0, %v305
        %v307 = vrot.slane %v302, %v306
        %v308 = vlaneseq
        %v309 = vshrl.u32 %v308, 7
        %v310 = vsub.s32 1, %v309
        %v311 = vrot.slane %v302, %v310
        %v318 = vunpack.c.l.b16 %v266
        %v319 = vunpack.c.h.b16 %v266
        %v320 = vunpack.c.l.b16 %v267
        %v321 = vunpack.c.h.b16 %v267
        %v322 = vunpack.c.l.b16 %v268
        %v323 = vunpack.c.h.b16 %v268
        %v324 = vunpack.c.l.b16 %v269
        %v325 = vunpack.c.h.b16 %v269
        %v326 = vpack.c.b16 %v320, %v318
        %v327 = vpack.c.b16 %v321, %v319
        %v328 = vpack.c.b16 %v324, %v322
        %v329 = vpack.c.b16 %v325, %v323
        %v366 = vunpack.c.l.b16 %v270
        %v367 = vunpack.c.h.b16 %v270
        %v368 = vunpack.c.l.b16 %v271
        %v369 = vunpack.c.h.b16 %v271
        %v370 = vunpack.c.l.b16 %v272
        %v371 = vunpack.c.h.b16 %v272
        %v372 = vunpack.c.l.b16 %v273
        %v373 = vunpack.c.h.b16 %v273
        %v374 = vunpack.c.l.b16 %v274
        %v375 = vunpack.c.h.b16 %v274
        %v376 = vunpack.c.l.b16 %v275
        %v377 = vunpack.c.h.b16 %v275
        %v378 = vunpack.c.l.b16 %v276
        %v379 = vunpack.c.h.b16 %v276
        %v380 = vunpack.c.l.b16 %v277
        %v381 = vunpack.c.h.b16 %v277
        %v382 = vunpack.c.l.b16 %v278
        %v383 = vunpack.c.h.b16 %v278
        %v384 = vunpack.c.l.b16 %v279
        %v385 = vunpack.c.h.b16 %v279
        %v386 = vunpack.c.l.b16 %v280
        %v387 = vunpack.c.h.b16 %v280
        %v388 = vunpack.c.l.b16 %v281
        %v389 = vunpack.c.h.b16 %v281
        %v390 = vunpack.c.l.b16 %v282
        %v391 = vunpack.c.h.b16 %v282
        %v392 = vunpack.c.l.b16 %v283
        %v393 = vunpack.c.h.b16 %v283
        %v394 = vunpack.c.l.b16 %v284
        %v395 = vunpack.c.h.b16 %v284
        %v396 = vunpack.c.l.b16 %v285
        %v397 = vunpack.c.h.b16 %v285
        %v398 = vunpack.c.l.b16 %v286
        %v399 = vunpack.c.h.b16 %v286
        %v400 = vunpack.c.l.b16 %v287
        %v401 = vunpack.c.h.b16 %v287
        %v402 = vunpack.c.l.b16 %v288
        %v403 = vunpack.c.h.b16 %v288
        %v404 = vunpack.c.l.b16 %v289
        %v405 = vunpack.c.h.b16 %v289
        %v406 = vunpack.c.l.b16 %v290
        %v407 = vunpack.c.h.b16 %v290
        %v408 = vunpack.c.l.b16 %v291
        %v409 = vunpack.c.h.b16 %v291
        %v410 = vunpack.c.l.b16 %v292
        %v411 = vunpack.c.h.b16 %v292
        %v412 = vunpack.c.l.b16 %v293
        %v413 = vunpack.c.h.b16 %v293
        %v414 = vunpack.c.l.b16 %v294
        %v415 = vunpack.c.h.b16 %v294
        %v416 = vunpack.c.l.b16 %v295
        %v417 = vunpack.c.h.b16 %v295
        %v418 = vunpack.c.l.b16 %v296
        %v419 = vunpack.c.h.b16 %v296
        %v420 = vunpack.c.l.b16 %v297
        %v421 = vunpack.c.h.b16 %v297
        %v422 = vunpack.c.l.b16 %v298
        %v423 = vunpack.c.h.b16 %v298
        %v424 = vunpack.c.l.b16 %v299
        %v425 = vunpack.c.h.b16 %v299
        %v426 = vunpack.c.l.b16 %v300
        %v427 = vunpack.c.h.b16 %v300
        %v428 = vunpack.c.l.b16 %v301
        %v429 = vunpack.c.h.b16 %v301
        %v430 = vpack.c.b16 %v368, %v366
        %v431 = vpack.c.b16 %v369, %v367
        %v432 = vpack.c.b16 %v372, %v370
        %v433 = vpack.c.b16 %v373, %v371
        %v434 = vpack.c.b16 %v376, %v374
        %v435 = vpack.c.b16 %v377, %v375
        %v436 = vpack.c.b16 %v380, %v378
        %v437 = vpack.c.b16 %v381, %v379
        %v438 = vpack.c.b16 %v384, %v382
        %v439 = vpack.c.b16 %v385, %v383
        %v440 = vpack.c.b16 %v388, %v386
        %v441 = vpack.c.b16 %v389, %v387
        %v442 = vpack.c.b16 %v392, %v390
        %v443 = vpack.c.b16 %v393, %v391
        %v444 = vpack.c.b16 %v396, %v394
        %v445 = vpack.c.b16 %v397, %v395
        %v446 = vpack.c.b16 %v400, %v398
        %v447 = vpack.c.b16 %v401, %v399
        %v448 = vpack.c.b16 %v404, %v402
        %v449 = vpack.c.b16 %v405, %v403
        %v450 = vpack.c.b16 %v408, %v406
        %v451 = vpack.c.b16 %v409, %v407
        %v452 = vpack.c.b16 %v412, %v410
        %v453 = vpack.c.b16 %v413, %v411
        %v454 = vpack.c.b16 %v416, %v414
        %v455 = vpack.c.b16 %v417, %v415
        %v456 = vpack.c.b16 %v420, %v418
        %v457 = vpack.c.b16 %v421, %v419
        %v458 = vpack.c.b16 %v424, %v422
        %v459 = vpack.c.b16 %v425, %v423
        %v460 = vpack.c.b16 %v428, %v426
        %v461 = vpack.c.b16 %v429, %v427
        %494 = vmatprep.subr.bf16.mxu0 %v431
        %495 = vmatpush1.bf16.msra.mxu0 %v430
        %496 = vmatprep.subr.bf16.mxu0 %v433
        %497 = vmatpush1.bf16.msra.mxu0 %v432
        %498 = vmatprep.subr.bf16.mxu0 %v435
        %499 = vmatpush1.bf16.msra.mxu0 %v434
        %500 = vmatprep.subr.bf16.mxu0 %v437
        %501 = vmatpush1.bf16.msra.mxu0 %v436
        %502 = vmatprep.subr.bf16.mxu0 %v439
        %503 = vmatpush1.bf16.msra.mxu0 %v438
        %504 = vmatprep.subr.bf16.mxu0 %v441
        %505 = vmatpush1.bf16.msra.mxu0 %v440
        %506 = vmatprep.subr.bf16.mxu0 %v443
        %507 = vmatpush1.bf16.msra.mxu0 %v442
        %508 = vmatprep.subr.bf16.mxu0 %v445
        %509 = vmatpush1.bf16.msra.mxu0 %v444
        %510 = vmatprep.subr.bf16.mxu0 %v447
        %511 = vmatpush1.bf16.msra.mxu0 %v446
        %512 = vmatprep.subr.bf16.mxu0 %v449
        %513 = vmatpush1.bf16.msra.mxu0 %v448
        %514 = vmatprep.subr.bf16.mxu0 %v451
        %515 = vmatpush1.bf16.msra.mxu0 %v450
        %516 = vmatprep.subr.bf16.mxu0 %v453
        %517 = vmatpush1.bf16.msra.mxu0 %v452
        %518 = vmatprep.subr.bf16.mxu0 %v455
        %519 = vmatpush1.bf16.msra.mxu0 %v454
        %520 = vmatprep.subr.bf16.mxu0 %v457
        %521 = vmatpush1.bf16.msra.mxu0 %v456
        %522 = vmatprep.subr.bf16.mxu0 %v459
        %523 = vmatpush1.bf16.msra.mxu0 %v458
        %524 = vmatprep.subr.bf16.mxu0 %v461
        %525 = vmatpush1.bf16.msra.mxu0 %v460
        %526 = vmatprep.mubr.bf16.mxu0 %v327
        %527 = vmatmul.mubr.bf16.gmra.mrb[0].mxu0 %v326
        %v528 = vpop.f32.mrb[0].mxu0
        %v529 = vadd.f32 %v307, %v528
        %v530 = vpop.f32.mrb[0].mxu0
        %v531 = vadd.f32 %v311, %v530
        %v532 = vpop.f32.mrb[0].mxu0
        %v533 = vadd.f32 %v307, %v532
        %v534 = vpop.f32.mrb[0].mxu0
        %v535 = vadd.f32 %v311, %v534
        %536 = vmatprep.mubr.bf16.mxu0 %v329
        %537 = vmatmul.mubr.bf16.gmra.mrb[0].mxu0 %v328
        %v538 = vpop.f32.mrb[0].mxu0
        %v539 = vadd.f32 %v307, %v538
        %v540 = vpop.f32.mrb[0].mxu0
        %v541 = vadd.f32 %v311, %v540
        %v542 = vpop.f32.mrb[0].mxu0
        %v543 = vadd.f32 %v307, %v542
        %v544 = vpop.f32.mrb[0].mxu0
        %v545 = vadd.f32 %v311, %v544
        %546 = vdwg.mxu0
        %v547 = vmax.f32 %v529, 0.0
        %v548 = vmax.f32 %v531, 0.0
        %v549 = vmax.f32 %v533, 0.0
        %v550 = vmax.f32 %v535, 0.0
        %v551 = vmax.f32 %v539, 0.0
        %v552 = vmax.f32 %v541, 0.0
        %v553 = vmax.f32 %v543, 0.0
        %v554 = vmax.f32 %v545, 0.0
        %v555 = vpack.c.bf16 %v549, %v547
        %v556 = vpack.c.bf16 %v550, %v548
        %v557 = vpack.c.bf16 %v553, %v551
        %v558 = vpack.c.bf16 %v554, %v552
        %v563 = vunpack.c.l.b16 %v555
        %v564 = vunpack.c.l.b16 %v556
        %v565 = vunpack.c.h.b16 %v555
        %v566 = vunpack.c.h.b16 %v556
        %v567 = vunpack.c.l.b16 %v557
        %v568 = vunpack.c.l.b16 %v558
        %v569 = vunpack.c.h.b16 %v557
        %v570 = vunpack.c.h.b16 %v558
        %v571 = vpack.c.b16 %v564, %v563
        %v572 = vpack.c.b16 %v566, %v565
        %v573 = vpack.c.b16 %v568, %v567
        %v574 = vpack.c.b16 %v570, %v569
        %579 = vst [vmem:[%s254] sm:$0xff] %v571
        %580 = vst [vmem:[%s254 + $0x8] sm:$0xff] %v572
        %581 = vst [vmem:[%s254 + $0x10] sm:$0xff] %v573
        %582 = vst [vmem:[%s254 + $0x18] sm:$0xff] %v574
        %s583 = sand.u32 %s120, 1
        %s584 = sand.u32 %s120, 1
        %s585 = smul.addr %s584, 32
        %s586 = scalar_lea.vmem [#allocation6], %s585
        // Predicated region
        $region41: #{decoder_forward.6} parent=31 // pred_check
          %p587 = pneg %p130
        $region42: #{decoder_forward.6} parent=31 // pred_check_branch
          %589 = sbr.rel (%p587) target = $region44
        $region43: #{decoder_forward.6} parent=31 // pred_region
          %s590 = smul.u32 4, %s24
          %s591 = smul.u32 2, %s25
          %s592 = smul.addr %s590, 4
          %s593 = sadd.s32 %s591, %s592
          %s594 = smul.addr %s593, 4
          %s595 = scalar_lea.vmem %s3, %s594
          // Predicated region
          $region45: #{decoder_forward.6} parent=43 // pred_check
            _
          $region46: #{decoder_forward.6} parent=43 // pred_check_branch
            %597 = sbr.rel (0) target = $region48
          $region47: #{decoder_forward.6} parent=43 // pred_region
            // Predicated region
            $region49: #{decoder_forward.6} parent=47 // pred_check
              _
            $region50: #{decoder_forward.6} parent=47 // pred_check_branch
              %599 = sbr.rel (0) target = $region52
            $region51: #{decoder_forward.6} parent=47 // pred_region
              // Predicated region
              $region64: #{decoder_forward.6} parent=51 // pred_check
                _
              $region65: #{decoder_forward.6} parent=51 // pred_check_branch
                %620 = sbr.rel (0) target = $region67
              $region66: #{decoder_forward.6} parent=51 // pred_region
                loop: start=0, step=1, limit=1
                $region68: #{decoder_forward.6} parent=66 // loop_pre_header
                  _
                $region69: #{decoder_forward.6} parent=66 // loop_header
                  %s622 = sphi 0, %s626
                  %p623 = scmp.ge.s32.totalorder %s622, 1
                  %s627 = sphi %s586, %s586
                  %s628 = sphi %s595, %s595
                $region70: #{decoder_forward.6} parent=66 // loop_header_branch
                  %625 = sbr.rel (%p623) target = $region74
                $region71: #{decoder_forward.6} parent=66 // loop_body
                  %v629 = vld [vmem:[%s627] sm:$0xff]
                  %630 = vst [vmem:[%s628] sm:$0xff] %v629
                  %v631 = vld [vmem:[%s627 + $0x8] sm:$0xff]
                  %632 = vst [vmem:[%s628 + $0x10] sm:$0xff] %v631
                  %v633 = vld [vmem:[%s627 + $0x10] sm:$0xff]
                  %634 = vst [vmem:[%s628 + $0x20] sm:$0xff] %v633
                  %v635 = vld [vmem:[%s627 + $0x18] sm:$0xff]
                  %636 = vst [vmem:[%s628 + $0x30] sm:$0xff] %v635
                $region72: #{decoder_forward.6} parent=66 // loop_footer
                  %s626 = sadd.s32 1, %s622
                $region73: #{decoder_forward.6} parent=66 // loop_footer_branch
                  %621 = sbr.rel target = $region69
                $region74: #{decoder_forward.6} parent=66 // loop_exit
                  _
              $region67: #{decoder_forward.6} parent=51 // pred_fallthru
                _
              // Predicated region
              $region75: #{decoder_forward.6} parent=51 // pred_check
                _
              $region76: #{decoder_forward.6} parent=51 // pred_check_branch
                %638 = sbr.rel target = $region78
              $region77: #{decoder_forward.6} parent=51 // pred_region
                _
              $region78: #{decoder_forward.6} parent=51 // pred_fallthru
                _
            $region52: #{decoder_forward.6} parent=47 // pred_fallthru
              _
            // Predicated region
            $region53: #{decoder_forward.6} parent=47 // pred_check
              _
            $region54: #{decoder_forward.6} parent=47 // pred_check_branch
              %601 = sbr.rel target = $region56
            $region55: #{decoder_forward.6} parent=47 // pred_region
              loop: start=0, step=1, limit=1
              $region57: #{decoder_forward.6} parent=55 // loop_pre_header
                _
              $region58: #{decoder_forward.6} parent=55 // loop_header
                %s604 = sphi 0, %s608
                %p605 = scmp.ge.s32.totalorder %s604, 1
                %s609 = sphi %s586, %s586
                %s610 = sphi %s595, %s595
              $region59: #{decoder_forward.6} parent=55 // loop_header_branch
                %607 = sbr.rel (%p605) target = $region63
              $region60: #{decoder_forward.6} parent=55 // loop_body
                %v611 = vld [vmem:[%s609] sm:$0xff]
                %612 = vst [vmem:[%s610] sm:$0xff] %v611
                %v613 = vld [vmem:[%s609 + $0x8] sm:$0xff]
                %614 = vst [vmem:[%s610 + $0x10] sm:$0xff] %v613
                %v615 = vld [vmem:[%s609 + $0x10] sm:$0xff]
                %616 = vst [vmem:[%s610 + $0x20] sm:$0xff] %v615
                %v617 = vld [vmem:[%s609 + $0x18] sm:$0xff]
                %618 = vst [vmem:[%s610 + $0x30] sm:$0xff] %v617
              $region61: #{decoder_forward.6} parent=55 // loop_footer
                %s608 = sadd.s32 1, %s604
              $region62: #{decoder_forward.6} parent=55 // loop_footer_branch
                %603 = sbr.rel target = $region58
              $region63: #{decoder_forward.6} parent=55 // loop_exit
                _
            $region56: #{decoder_forward.6} parent=47 // pred_fallthru
              _
          $region48: #{decoder_forward.6} parent=43 // pred_fallthru
            _
          %639 = vnop
        $region44: #{decoder_forward.6} parent=31 // pred_fallthru
          _
      $region32: #{decoder_forward.6} parent=5 // pred_fallthru
        _
      %p640 = scmp.le.s32.totalorder 2, %s15
      // Predicated region
      $region79: #{decoder_forward.6} parent=5 // pred_check
        %p641 = pneg %p640
      $region80: #{decoder_forward.6} parent=5 // pred_check_branch
        %643 = sbr.rel (%p641) target = $region82
      $region81: #{decoder_forward.6} parent=5 // pred_region
        %s644 = ssub.s32 %s15, 2
        // Predicated region
        $region83: #{decoder_forward.6} parent=81 // pred_check
          %p645 = pneg %p136
        $region84: #{decoder_forward.6} parent=81 // pred_check_branch
          %647 = sbr.rel (%p645) target = $region86
        $region85: #{decoder_forward.6} parent=81 // pred_region
          %s648 = sand.u32 %s121, 1
          %s649 = sand.u32 %s121, 1
          %s650 = smul.addr %s649, 32
          %s651 = scalar_lea.vmem [#allocation6], %s650
        $region86: #{decoder_forward.6} parent=81 // pred_fallthru
          _
      $region82: #{decoder_forward.6} parent=5 // pred_fallthru
        _
    $region6: #{decoder_forward.6} parent=1 // loop_footer
      %s19 = sadd.s32 1, %s15
    $region7: #{decoder_forward.6} parent=1 // loop_footer_branch
      %14 = sbr.rel target = $region3
    $region8: #{decoder_forward.6} parent=1 // loop_exit
      _
    %652 = vsyncpa [#allocation3], 1
    %s653 = scalar_lea.sflag [#allocation3], 1
    %654 = vsyncpa %s653, 1
    %655 = vsyncpa [#allocation5], 1
    %s656 = scalar_lea.sflag [#allocation5], 1
    %657 = vsyncpa %s656, 1

// kernel: decoder_forward.7
$region0: #{decoder_forward.7}
  #allocation0 [shape = 'u32[]', space=smem, size = 0x4, offset = 0x4, fixed_abs, tag = 'smem constant byte address 0x4 - core index']
  #allocation1 [shape = 'u32[144,128]{1,0:T(1,128)}', space=vmem, size = 0x12000, scoped, tag = 'internal scratch']
  %s0 = inlined_call_operand.vmem [shape: bf16[80,128], index: 0, kind: input, shape index: {}]
  %s1 = inlined_call_operand.vmem [shape: bf16[128,512], index: 1, kind: input, shape index: {}]
  %s2 = inlined_call_operand.vmem [shape: f32[1,512], index: 2, kind: input, shape index: {}]
  %s3 = inlined_call_operand.vmem [shape: bf16[80,512], index: 3, kind: output, shape index: {}]
  %s4 = sld [smem:[#allocation0]]
  $region117: #{decoder_forward.7} parent=0
    _
  %s6 = ssub.s32 1, %s4
  %s7 = scalar_select 0, %s6, %s4
  $region1: #{decoder_forward.7} parent=0
    #allocation2 [shape = 'u8[131072]{0}', space=vmem, size = 0x20000, scoped, tag = 'input window, operand 1']
    #allocation3 [shape = 'u8[81920]{0}', space=vmem, size = 0x14000, scoped, tag = 'output window, operand 0']
    loop: start=0, step=1, limit=4
    $region2: #{decoder_forward.7} parent=1 // loop_pre_header
      _
    $region3: #{decoder_forward.7} parent=1 // loop_header
      %s9 = sphi 0, %s13
      %p10 = scmp.ge.s32.totalorder %s9, 4
      %s16 = sphi 0, %s28
      %s17 = sphi 0, %s24
      %s18 = sphi 0, %s16
      %s19 = sphi 0, %s17
      %s20 = sphi 0, %s18
      %s21 = sphi 0, %s19
      %s31 = sphi 0, %s33
      %s34 = sphi 0, %s31
      %s35 = sphi 0, %s34
      %s51 = sphi 0, %s35
      %s57 = sphi 0, %s59
      %s60 = sphi 0, %s57
      %s61 = sphi 0, %s60
      %s77 = sphi 0, %s61
      %s83 = sphi 0, %s85
      %s86 = sphi 0, %s83
      %s87 = sphi 0, %s86
      %s103 = sphi 0, %s87
      %s111 = sphi 0, %s113
      %s114 = sphi 0, %s111
      %s115 = sphi 0, %s114
      %s131 = sphi 0, %s115
    $region4: #{decoder_forward.7} parent=1 // loop_header_branch
      %12 = sbr.rel (%p10) target = $region8
    $region5: #{decoder_forward.7} parent=1 // loop_body
      %s14 = ssub.s32 %s9, 1
      %s15 = ssub.s32 %s9, 2
      %s22 = sadd.s32 1, %s17
      %p23 = scmp.ge.s32.totalorder %s22, 2
      %s24 = scalar_select %p23, 0, %s22
      %s25 = sadd.s32 1, %s16
      %s26 = scalar_select %p23, %s25, %s16
      %p27 = scmp.ge.s32.totalorder %s26, 1
      %s28 = scalar_select %p27, 0, %s26
      %s29 = ssub.s32 %s16, %s28
      %p30 = scmp.eq.s32.totalorder %s29, 0
      %s32 = sadd.s32 %s31, 1
      %s33 = scalar_select %p30, %s31, %s32
      %p36 = pneg %p30
      %p37 = scmp.eq.s32.totalorder %s9, 1
      %p38 = por %p36, %p37
      %p39 = scmp.ne.s32.totalorder %s31, %s34
      %p40 = scmp.eq.s32.totalorder %s9, 0
      %p41 = por %p39, %p40
      %p42 = scmp.ne.s32.totalorder %s31, %s34
      %p43 = scmp.eq.s32.totalorder %s14, 1
      %p44 = por %p42, %p43
      %p45 = scmp.ne.s32.totalorder %s34, %s35
      %p46 = scmp.eq.s32.totalorder %s14, 0
      %p47 = por %p45, %p46
      %p48 = scmp.ne.s32.totalorder %s34, %s35
      %p49 = scmp.eq.s32.totalorder %s15, 1
      %p50 = por %p48, %p49
      %p52 = scmp.ne.s32.totalorder %s35, %s51
      %p53 = scmp.eq.s32.totalorder %s15, 0
      %p54 = por %p52, %p53
      %s55 = ssub.s32 %s17, %s24
      %p56 = scmp.eq.s32.totalorder %s55, 0
      %s58 = sadd.s32 %s57, 1
      %s59 = scalar_select %p56, %s57, %s58
      %p62 = pneg %p56
      %p63 = scmp.eq.s32.totalorder %s9, 1
      %p64 = por %p62, %p63
      %p65 = scmp.ne.s32.totalorder %s57, %s60
      %p66 = scmp.eq.s32.totalorder %s9, 0
      %p67 = por %p65, %p66
      %p68 = scmp.ne.s32.totalorder %s57, %s60
      %p69 = scmp.eq.s32.totalorder %s14, 1
      %p70 = por %p68, %p69
      %p71 = scmp.ne.s32.totalorder %s60, %s61
      %p72 = scmp.eq.s32.totalorder %s14, 0
      %p73 = por %p71, %p72
      %p74 = scmp.ne.s32.totalorder %s60, %s61
      %p75 = scmp.eq.s32.totalorder %s15, 1
      %p76 = por %p74, %p75
      %p78 = scmp.ne.s32.totalorder %s61, %s77
      %p79 = scmp.eq.s32.totalorder %s15, 0
      %p80 = por %p78, %p79
      %s81 = ssub.s32 %s17, %s24
      %p82 = scmp.eq.s32.totalorder %s81, 0
      %s84 = sadd.s32 %s83, 1
      %s85 = scalar_select %p82, %s83, %s84
      %p88 = pneg %p82
      %p89 = scmp.eq.s32.totalorder %s9, 1
      %p90 = por %p88, %p89
      %p91 = scmp.ne.s32.totalorder %s83, %s86
      %p92 = scmp.eq.s32.totalorder %s9, 0
      %p93 = por %p91, %p92
      %p94 = scmp.ne.s32.totalorder %s83, %s86
      %p95 = scmp.eq.s32.totalorder %s14, 1
      %p96 = por %p94, %p95
      %p97 = scmp.ne.s32.totalorder %s86, %s87
      %p98 = scmp.eq.s32.totalorder %s14, 0
      %p99 = por %p97, %p98
      %p100 = scmp.ne.s32.totalorder %s86, %s87
      %p101 = scmp.eq.s32.totalorder %s15, 1
      %p102 = por %p100, %p101
      %p104 = scmp.ne.s32.totalorder %s87, %s103
      %p105 = scmp.eq.s32.totalorder %s15, 0
      %p106 = por %p104, %p105
      %s107 = ssub.s32 %s16, %s28
      %s108 = ssub.s32 %s17, %s24
      %s109 = sor.u32 %s107, %s108
      %p110 = scmp.eq.s32.totalorder %s109, 0
      %s112 = sadd.s32 %s111, 1
      %s113 = scalar_select %p110, %s111, %s112
      %p116 = pneg %p110
      %p117 = scmp.eq.s32.totalorder %s9, 1
      %p118 = por %p116, %p117
      %p119 = scmp.ne.s32.totalorder %s111, %s114
      %p120 = scmp.eq.s32.totalorder %s9, 0
      %p121 = por %p119, %p120
      %p122 = scmp.ne.s32.totalorder %s111, %s114
      %p123 = scmp.eq.s32.totalorder %s14, 1
      %p124 = por %p122, %p123
      %p125 = scmp.ne.s32.totalorder %s114, %s115
      %p126 = scmp.eq.s32.totalorder %s14, 0
      %p127 = por %p125, %p126
      %p128 = scmp.ne.s32.totalorder %s114, %s115
      %p129 = scmp.eq.s32.totalorder %s15, 1
      %p130 = por %p128, %p129
      %p132 = scmp.ne.s32.totalorder %s115, %s131
      %p133 = scmp.eq.s32.totalorder %s15, 0
      %p134 = por %p132, %p133
      %p135 = scmp.le.s32.totalorder 1, %s9
      %p136 = scmp.lt.s32.totalorder %s9, 3
      %p137 = pnand %p135, %p136
      %p138 = pneg %p137
      // Predicated region
      $region9: #{decoder_forward.7} parent=5 // pred_check
        _
      $region10: #{decoder_forward.7} parent=5 // pred_check_branch
        %140 = sbr.rel (%p137) target = $region12
      $region11: #{decoder_forward.7} parent=5 // pred_region
        %s141 = ssub.s32 %s9, 1
        // Predicated region
        $region13: #{decoder_forward.7} parent=11 // pred_check
          %p142 = pneg %p47
        $region14: #{decoder_forward.7} parent=11 // pred_check_branch
          %144 = sbr.rel (%p142) target = $region16
        $region15: #{decoder_forward.7} parent=11 // pred_region
          %s145 = smul.u32 10, %s18
          %p146 = scmp.lt.s32.totalorder %s145, 9
          %s147 = scalar_select %p146, %s145, 9
          %s148 = smul.addr %s147, 4
          %s149 = scalar_lea.vmem %s0, %s148
          %s150 = smul.u32 10, %s18
        $region16: #{decoder_forward.7} parent=11 // pred_fallthru
          _
      $region12: #{decoder_forward.7} parent=5 // pred_fallthru
        _
      %p151 = scmp.lt.s32.totalorder %s9, 2
      // Predicated region
      $region17: #{decoder_forward.7} parent=5 // pred_check
        %p152 = pneg %p151
      $region18: #{decoder_forward.7} parent=5 // pred_check_branch
        %154 = sbr.rel (%p152) target = $region20
      $region19: #{decoder_forward.7} parent=5 // pred_region
        // Predicated region
        $region21: #{decoder_forward.7} parent=19 // pred_check
          %p155 = pneg %p67
        $region22: #{decoder_forward.7} parent=19 // pred_check_branch
          %157 = sbr.rel (%p155) target = $region24
        $region23: #{decoder_forward.7} parent=19 // pred_region
          %s158 = sand.u32 %s57, 1
          %s159 = sand.u32 %s57, 1
          %s160 = smul.addr %s159, 128
          %s161 = scalar_lea.vmem [#allocation2], %s160
          %s162 = smul.u32 2, %s17
          %s163 = smul.addr %s162, 4
          %s164 = scalar_lea.vmem %s1, %s163
          // Predicated region
          $region25: #{decoder_forward.7} parent=23 // pred_check
            _
          $region26: #{decoder_forward.7} parent=23 // pred_check_branch
            %166 = sbr.rel (0) target = $region28
          $region27: #{decoder_forward.7} parent=23 // pred_region
            // Predicated region
            $region29: #{decoder_forward.7} parent=27 // pred_check
              _
            $region30: #{decoder_forward.7} parent=27 // pred_check_branch
              %168 = sbr.rel (0) target = $region32
            $region31: #{decoder_forward.7} parent=27 // pred_region
              // Predicated region
              $region44: #{decoder_forward.7} parent=31 // pred_check
                _
              $region45: #{decoder_forward.7} parent=31 // pred_check_branch
                %213 = sbr.rel (0) target = $region47
              $region46: #{decoder_forward.7} parent=31 // pred_region
                loop: start=0, step=1, limit=1
                $region48: #{decoder_forward.7} parent=46 // loop_pre_header
                  _
                $region49: #{decoder_forward.7} parent=46 // loop_header
                  %s215 = sphi 0, %s219
                  %p216 = scmp.ge.s32.totalorder %s215, 1
                  %s220 = sphi %s164, %s164
                  %s221 = sphi %s161, %s161
                $region50: #{decoder_forward.7} parent=46 // loop_header_branch
                  %218 = sbr.rel (%p216) target = $region54
                $region51: #{decoder_forward.7} parent=46 // loop_body
                  %v222 = vld [vmem:[%s220] sm:$0xff]
                  %223 = vst [vmem:[%s221] sm:$0xff] %v222
                  %v224 = vld [vmem:[%s220 + $0x10] sm:$0xff]
                  %225 = vst [vmem:[%s221 + $0x8] sm:$0xff] %v224
                  %v226 = vld [vmem:[%s220 + $0x20] sm:$0xff]
                  %227 = vst [vmem:[%s221 + $0x10] sm:$0xff] %v226
                  %v228 = vld [vmem:[%s220 + $0x30] sm:$0xff]
                  %229 = vst [vmem:[%s221 + $0x18] sm:$0xff] %v228
                  %v230 = vld [vmem:[%s220 + $0x40] sm:$0xff]
                  %231 = vst [vmem:[%s221 + $0x20] sm:$0xff] %v230
                  %v232 = vld [vmem:[%s220 + $0x50] sm:$0xff]
                  %233 = vst [vmem:[%s221 + $0x28] sm:$0xff] %v232
                  %v234 = vld [vmem:[%s220 + $0x60] sm:$0xff]
                  %235 = vst [vmem:[%s221 + $0x30] sm:$0xff] %v234
                  %v236 = vld [vmem:[%s220 + $0x70] sm:$0xff]
                  %237 = vst [vmem:[%s221 + $0x38] sm:$0xff] %v236
                  %v238 = vld [vmem:[%s220 + $0x80] sm:$0xff]
                  %239 = vst [vmem:[%s221 + $0x40] sm:$0xff] %v238
                  %v240 = vld [vmem:[%s220 + $0x90] sm:$0xff]
                  %241 = vst [vmem:[%s221 + $0x48] sm:$0xff] %v240
                  %v242 = vld [vmem:[%s220 + $0xa0] sm:$0xff]
                  %243 = vst [vmem:[%s221 + $0x50] sm:$0xff] %v242
                  %v244 = vld [vmem:[%s220 + $0xb0] sm:$0xff]
                  %245 = vst [vmem:[%s221 + $0x58] sm:$0xff] %v244
                  %v246 = vld [vmem:[%s220 + $0xc0] sm:$0xff]
                  %247 = vst [vmem:[%s221 + $0x60] sm:$0xff] %v246
                  %v248 = vld [vmem:[%s220 + $0xd0] sm:$0xff]
                  %249 = vst [vmem:[%s221 + $0x68] sm:$0xff] %v248
                  %v250 = vld [vmem:[%s220 + $0xe0] sm:$0xff]
                  %251 = vst [vmem:[%s221 + $0x70] sm:$0xff] %v250
                  %v252 = vld [vmem:[%s220 + $0xf0] sm:$0xff]
                  %253 = vst [vmem:[%s221 + $0x78] sm:$0xff] %v252
                $region52: #{decoder_forward.7} parent=46 // loop_footer
                  %s219 = sadd.s32 1, %s215
                $region53: #{decoder_forward.7} parent=46 // loop_footer_branch
                  %214 = sbr.rel target = $region49
                $region54: #{decoder_forward.7} parent=46 // loop_exit
                  _
              $region47: #{decoder_forward.7} parent=31 // pred_fallthru
                _
              // Predicated region
              $region55: #{decoder_forward.7} parent=31 // pred_check
                _
              $region56: #{decoder_forward.7} parent=31 // pred_check_branch
                %255 = sbr.rel target = $region58
              $region57: #{decoder_forward.7} parent=31 // pred_region
                _
              $region58: #{decoder_forward.7} parent=31 // pred_fallthru
                _
            $region32: #{decoder_forward.7} parent=27 // pred_fallthru
              _
            // Predicated region
            $region33: #{decoder_forward.7} parent=27 // pred_check
              _
            $region34: #{decoder_forward.7} parent=27 // pred_check_branch
              %170 = sbr.rel target = $region36
            $region35: #{decoder_forward.7} parent=27 // pred_region
              loop: start=0, step=1, limit=1
              $region37: #{decoder_forward.7} parent=35 // loop_pre_header
                _
              $region38: #{decoder_forward.7} parent=35 // loop_header
                %s173 = sphi 0, %s177
                %p174 = scmp.ge.s32.totalorder %s173, 1
                %s178 = sphi %s164, %s164
                %s179 = sphi %s161, %s161
              $region39: #{decoder_forward.7} parent=35 // loop_header_branch
                %176 = sbr.rel (%p174) target = $region43
              $region40: #{decoder_forward.7} parent=35 // loop_body
                %v180 = vld [vmem:[%s178] sm:$0xff]
                %181 = vst [vmem:[%s179] sm:$0xff] %v180
                %v182 = vld [vmem:[%s178 + $0x10] sm:$0xff]
                %183 = vst [vmem:[%s179 + $0x8] sm:$0xff] %v182
                %v184 = vld [vmem:[%s178 + $0x20] sm:$0xff]
                %185 = vst [vmem:[%s179 + $0x10] sm:$0xff] %v184
                %v186 = vld [vmem:[%s178 + $0x30] sm:$0xff]
                %187 = vst [vmem:[%s179 + $0x18] sm:$0xff] %v186
                %v188 = vld [vmem:[%s178 + $0x40] sm:$0xff]
                %189 = vst [vmem:[%s179 + $0x20] sm:$0xff] %v188
                %v190 = vld [vmem:[%s178 + $0x50] sm:$0xff]
                %191 = vst [vmem:[%s179 + $0x28] sm:$0xff] %v190
                %v192 = vld [vmem:[%s178 + $0x60] sm:$0xff]
                %193 = vst [vmem:[%s179 + $0x30] sm:$0xff] %v192
                %v194 = vld [vmem:[%s178 + $0x70] sm:$0xff]
                %195 = vst [vmem:[%s179 + $0x38] sm:$0xff] %v194
                %v196 = vld [vmem:[%s178 + $0x80] sm:$0xff]
                %197 = vst [vmem:[%s179 + $0x40] sm:$0xff] %v196
                %v198 = vld [vmem:[%s178 + $0x90] sm:$0xff]
                %199 = vst [vmem:[%s179 + $0x48] sm:$0xff] %v198
                %v200 = vld [vmem:[%s178 + $0xa0] sm:$0xff]
                %201 = vst [vmem:[%s179 + $0x50] sm:$0xff] %v200
                %v202 = vld [vmem:[%s178 + $0xb0] sm:$0xff]
                %203 = vst [vmem:[%s179 + $0x58] sm:$0xff] %v202
                %v204 = vld [vmem:[%s178 + $0xc0] sm:$0xff]
                %205 = vst [vmem:[%s179 + $0x60] sm:$0xff] %v204
                %v206 = vld [vmem:[%s178 + $0xd0] sm:$0xff]
                %207 = vst [vmem:[%s179 + $0x68] sm:$0xff] %v206
                %v208 = vld [vmem:[%s178 + $0xe0] sm:$0xff]
                %209 = vst [vmem:[%s179 + $0x70] sm:$0xff] %v208
                %v210 = vld [vmem:[%s178 + $0xf0] sm:$0xff]
                %211 = vst [vmem:[%s179 + $0x78] sm:$0xff] %v210
              $region41: #{decoder_forward.7} parent=35 // loop_footer
                %s177 = sadd.s32 1, %s173
              $region42: #{decoder_forward.7} parent=35 // loop_footer_branch
                %172 = sbr.rel target = $region38
              $region43: #{decoder_forward.7} parent=35 // loop_exit
                _
            $region36: #{decoder_forward.7} parent=27 // pred_fallthru
              _
          $region28: #{decoder_forward.7} parent=23 // pred_fallthru
            _
          %256 = vnop
        $region24: #{decoder_forward.7} parent=19 // pred_fallthru
          _
        // Predicated region
        $region59: #{decoder_forward.7} parent=19 // pred_check
          %p257 = pneg %p93
        $region60: #{decoder_forward.7} parent=19 // pred_check_branch
          %259 = sbr.rel (%p257) target = $region62
        $region61: #{decoder_forward.7} parent=19 // pred_region
          %s260 = smul.u32 2, %s17
          %p261 = scmp.lt.s32.totalorder %s260, 3
          %s262 = scalar_select %p261, %s260, 3
          %s263 = scalar_lea.vmem %s2, %s262
          %s264 = smul.u32 2, %s17
        $region62: #{decoder_forward.7} parent=19 // pred_fallthru
          _
      $region20: #{decoder_forward.7} parent=5 // pred_fallthru
        _
      %p265 = scmp.le.s32.totalorder 1, %s9
      %p266 = scmp.lt.s32.totalorder %s9, 3
      %p267 = pnand %p265, %p266
      %p268 = pneg %p267
      // Predicated region
      $region63: #{decoder_forward.7} parent=5 // pred_check
        _
      $region64: #{decoder_forward.7} parent=5 // pred_check_branch
        %270 = sbr.rel (%p267) target = $region66
      $region65: #{decoder_forward.7} parent=5 // pred_region
        %s271 = ssub.s32 %s9, 1
        %s272 = sand.u32 %s60, 1
        %s273 = sand.u32 %s60, 1
        %s274 = smul.addr %s273, 128
        %s275 = scalar_lea.vmem [#allocation2], %s274
        // Predicated region
        $region67: #{decoder_forward.7} parent=65 // pred_check
          %p276 = pneg %p73
        $region68: #{decoder_forward.7} parent=65 // pred_check_branch
          %278 = sbr.rel (%p276) target = $region70
        $region69: #{decoder_forward.7} parent=65 // pred_region
          _
        $region70: #{decoder_forward.7} parent=65 // pred_fallthru
          _
        %s279 = smul.u32 10, %s18
        %p280 = scmp.lt.s32.totalorder %s279, 9
        %s281 = scalar_select %p280, %s279, 9
        %s282 = smul.addr %s281, 4
        %s283 = scalar_lea.vmem %s0, %s282
        %p284 = pneg %p47
        %p285 = pneg %p44
        %s286 = sand.u32 %s60, 1
        %s287 = sand.u32 %s60, 1
        %s288 = smul.addr %s287, 128
        %s289 = scalar_lea.vmem [#allocation2], %s288
        %p290 = pneg %p73
        %p291 = pneg %p70
        %s292 = smul.u32 2, %s19
        %p293 = scmp.lt.s32.totalorder %s292, 3
        %s294 = scalar_select %p293, %s292, 3
        %s295 = scalar_lea.vmem %s2, %s294
        %p296 = pneg %p99
        %p297 = pneg %p96
        %p298 = pneg %p127
        %p299 = pneg %p124
        %s300 = sand.u32 %s114, 1
        %s301 = sand.u32 %s114, 1
        %s302 = smul.addr %s301, 80
        %s303 = scalar_lea.vmem [#allocation3], %s302
        %s304 = smul.u32 10, %s18
        %p305 = scmp.lt.s32.totalorder %s304, 9
        %s306 = scalar_select %p305, %s304, 9
        %s307 = smul.addr %s306, 4
        %s308 = scalar_lea.vmem %s0, %s307
        %s309 = smul.u32 10, %s18
        %s310 = smul.u32 2, %s19
        %s311 = smul.u32 2, %s19
        %p312 = scmp.lt.s32.totalorder %s311, 3
        %s313 = scalar_select %p312, %s311, 3
        %s314 = scalar_lea.vmem %s2, %s313
        %s315 = smul.u32 2, %s19
        %s316 = smul.u32 10, %s18
        %s317 = smul.u32 2, %s19
        %v319 = vld [vmem:[%s308] sm:$0xf]
        %v320 = vld [vmem:[%s308 + $0x4] sm:$0xf]
        %v321 = vld [vmem:[%s308 + $0x8] sm:$0xf]
        %v322 = vld [vmem:[%s308 + $0xc] sm:$0xf]
        %v323 = vld [vmem:[%s308 + $0x10] sm:$0xf]
        %v324 = vld [vmem:[%s308 + $0x14] sm:$0xf]
        %v325 = vld [vmem:[%s308 + $0x18] sm:$0xf]
        %v326 = vld [vmem:[%s308 + $0x1c] sm:$0xf]
        %v327 = vld [vmem:[%s308 + $0x20] sm:$0xf]
        %v328 = vld [vmem:[%s308 + $0x24] sm:$0xf]
        %v329 = vld [vmem:[%s275] sm:$0xff]
        %v330 = vld [vmem:[%s275 + $0x8] sm:$0xff]
        %v331 = vld [vmem:[%s275 + $0x10] sm:$0xff]
        %v332 = vld [vmem:[%s275 + $0x18] sm:$0xff]
        %v333 = vld [vmem:[%s275 + $0x20] sm:$0xff]
        %v334 = vld [vmem:[%s275 + $0x28] sm:$0xff]
        %v335 = vld [vmem:[%s275 + $0x30] sm:$0xff]
        %v336 = vld [vmem:[%s275 + $0x38] sm:$0xff]
        %v337 = vld [vmem:[%s275 + $0x40] sm:$0xff]
        %v338 = vld [vmem:[%s275 + $0x48] sm:$0xff]
        %v339 = vld [vmem:[%s275 + $0x50] sm:$0xff]
        %v340 = vld [vmem:[%s275 + $0x58] sm:$0xff]
        %v341 = vld [vmem:[%s275 + $0x60] sm:$0xff]
        %v342 = vld [vmem:[%s275 + $0x68] sm:$0xff]
        %v343 = vld [vmem:[%s275 + $0x70] sm:$0xff]
        %v344 = vld [vmem:[%s275 + $0x78] sm:$0xff]
        %v345 = vld [vmem:[%s314] sm:$0x3]
        %v347 = vlaneseq
        %v348 = vshrl.u32 %v347, 7
        %v349 = vsub.s32 0, %v348
        %v350 = vrot.slane %v345, %v349
        %v351 = vlaneseq
        %v352 = vshrl.u32 %v351, 7
        %v353 = vsub.s32 1, %v352
        %v354 = vrot.slane %v345, %v353
        %v367 = vunpack.c.l.b16 %v319
        %v368 = vunpack.c.l.b16 %v320
        %v369 = vunpack.c.l.b16 %v321
        %v370 = vunpack.c.l.b16 %v322
        %v371 = vunpack.c.l.b16 %v323
        %v372 = vunpack.c.l.b16 %v324
        %v373 = vunpack.c.l.b16 %v325
        %v374 = vunpack.c.l.b16 %v326
        %v375 = vunpack.c.l.b16 %v327
        %v376 = vunpack.c.l.b16 %v328
        %v377 = vpack.c.b16 %v368, %v367
        %v378 = vpack.c.b16 %v370, %v369
        %v379 = vpack.c.b16 %v372, %v371
        %v380 = vpack.c.b16 %v374, %v373
        %v381 = vpack.c.b16 %v376, %v375
        %v403 = vunpack.c.l.b16 %v329
        %v404 = vunpack.c.h.b16 %v329
        %v405 = vunpack.c.l.b16 %v330
        %v406 = vunpack.c.h.b16 %v330
        %v407 = vunpack.c.l.b16 %v331
        %v408 = vunpack.c.h.b16 %v331
        %v409 = vunpack.c.l.b16 %v332
        %v410 = vunpack.c.h.b16 %v332
        %v411 = vunpack.c.l.b16 %v333
        %v412 = vunpack.c.h.b16 %v333
        %v413 = vunpack.c.l.b16 %v334
        %v414 = vunpack.c.h.b16 %v334
        %v415 = vunpack.c.l.b16 %v335
        %v416 = vunpack.c.h.b16 %v335
        %v417 = vunpack.c.l.b16 %v336
        %v418 = vunpack.c.h.b16 %v336
        %v419 = vunpack.c.l.b16 %v337
        %v420 = vunpack.c.h.b16 %v337
        %v421 = vunpack.c.l.b16 %v338
        %v422 = vunpack.c.h.b16 %v338
        %v423 = vunpack.c.l.b16 %v339
        %v424 = vunpack.c.h.b16 %v339
        %v425 = vunpack.c.l.b16 %v340
        %v426 = vunpack.c.h.b16 %v340
        %v427 = vunpack.c.l.b16 %v341
        %v428 = vunpack.c.h.b16 %v341
        %v429 = vunpack.c.l.b16 %v342
        %v430 = vunpack.c.h.b16 %v342
        %v431 = vunpack.c.l.b16 %v343
        %v432 = vunpack.c.h.b16 %v343
        %v433 = vunpack.c.l.b16 %v344
        %v434 = vunpack.c.h.b16 %v344
        %v435 = vpack.c.b16 %v405, %v403
        %v436 = vpack.c.b16 %v406, %v404
        %v437 = vpack.c.b16 %v409, %v407
        %v438 = vpack.c.b16 %v410, %v408
        %v439 = vpack.c.b16 %v413, %v411
        %v440 = vpack.c.b16 %v414, %v412
        %v441 = vpack.c.b16 %v417, %v415
        %v442 = vpack.c.b16 %v418, %v416
        %v443 = vpack.c.b16 %v421, %v419
        %v444 = vpack.c.b16 %v422, %v420
        %v445 = vpack.c.b16 %v425, %v423
        %v446 = vpack.c.b16 %v426, %v424
        %v447 = vpack.c.b16 %v429, %v427
        %v448 = vpack.c.b16 %v430, %v428
        %v449 = vpack.c.b16 %v433, %v431
        %v450 = vpack.c.b16 %v434, %v432
        %467 = vmatprep.subr.bf16.mxu0 %v436
        %468 = vmatpush1.bf16.msra.mxu0 %v435
        %469 = vmatprep.subr.bf16.mxu0 %v438
        %470 = vmatpush1.bf16.msra.mxu0 %v437
        %471 = vmatprep.subr.bf16.mxu0 %v440
        %472 = vmatpush1.bf16.msra.mxu0 %v439
        %473 = vmatprep.subr.bf16.mxu0 %v442
        %474 = vmatpush1.bf16.msra.mxu0 %v441
        %475 = vmatprep.subr.bf16.mxu0 %v444
        %476 = vmatpush1.bf16.msra.mxu0 %v443
        %477 = vmatprep.subr.bf16.mxu0 %v446
        %478 = vmatpush1.bf16.msra.mxu0 %v445
        %479 = vmatprep.subr.bf16.mxu0 %v448
        %480 = vmatpush1.bf16.msra.mxu0 %v447
        %481 = vmatprep.subr.bf16.mxu0 %v450
        %482 = vmatpush1.bf16.msra.mxu0 %v449
        %483 = vmatprep.subr.bf16.mxu0 0
        %484 = vmatpush1.bf16.msra.mxu0 0
        %485 = vmatprep.subr.bf16.mxu0 0
        %486 = vmatpush1.bf16.msra.mxu0 0
        %487 = vmatprep.subr.bf16.mxu0 0
        %488 = vmatpush1.bf16.msra.mxu0 0
        %489 = vmatprep.subr.bf16.mxu0 0
        %490 = vmatpush1.bf16.msra.mxu0 0
        %491 = vmatprep.subr.bf16.mxu0 0
        %492 = vmatpush1.bf16.msra.mxu0 0
        %493 = vmatprep.subr.bf16.mxu0 0
        %494 = vmatpush1.bf16.msra.mxu0 0
        %495 = vmatprep.subr.bf16.mxu0 0
        %496 = vmatpush1.bf16.msra.mxu0 0
        %497 = vmatprep.subr.bf16.mxu0 0
        %498 = vmatpush1.bf16.msra.mxu0 0
        %499 = vmatprep.mubr.bf16.mxu0 0
        %500 = vmatmul.mubr.bf16.gmra.mrb[0].mxu0 %v377
        %v501 = vpop.f32.mrb[0].mxu0
        %v502 = vadd.f32 %v350, %v501
        %v503 = vpop.f32.mrb[0].mxu0
        %v504 = vadd.f32 %v354, %v503
        %v505 = vpop.f32.mrb[0].mxu0
        %v506 = vadd.f32 %v350, %v505
        %v507 = vpop.f32.mrb[0].mxu0
        %v508 = vadd.f32 %v354, %v507
        %509 = vmatprep.mubr.bf16.mxu0 0
        %510 = vmatmul.mubr.bf16.gmra.mrb[0].mxu0 %v378
        %v511 = vpop.f32.mrb[0].mxu0
        %v512 = vadd.f32 %v350, %v511
        %v513 = vpop.f32.mrb[0].mxu0
        %v514 = vadd.f32 %v354, %v513
        %v515 = vpop.f32.mrb[0].mxu0
        %v516 = vadd.f32 %v350, %v515
        %v517 = vpop.f32.mrb[0].mxu0
        %v518 = vadd.f32 %v354, %v517
        %519 = vmatprep.mubr.bf16.mxu0 0
        %520 = vmatmul.mubr.bf16.gmra.mrb[0].mxu0 %v379
        %v521 = vpop.f32.mrb[0].mxu0
        %v522 = vadd.f32 %v350, %v521
        %v523 = vpop.f32.mrb[0].mxu0
        %v524 = vadd.f32 %v354, %v523
        %v525 = vpop.f32.mrb[0].mxu0
        %v526 = vadd.f32 %v350, %v525
        %v527 = vpop.f32.mrb[0].mxu0
        %v528 = vadd.f32 %v354, %v527
        %529 = vmatprep.mubr.bf16.mxu0 0
        %530 = vmatmul.mubr.bf16.gmra.mrb[0].mxu0 %v380
        %v531 = vpop.f32.mrb[0].mxu0
        %v532 = vadd.f32 %v350, %v531
        %v533 = vpop.f32.mrb[0].mxu0
        %v534 = vadd.f32 %v354, %v533
        %v535 = vpop.f32.mrb[0].mxu0
        %v536 = vadd.f32 %v350, %v535
        %v537 = vpop.f32.mrb[0].mxu0
        %v538 = vadd.f32 %v354, %v537
        %539 = vmatprep.mubr.bf16.mxu0 0
        %540 = vmatmul.mubr.bf16.gmra.mrb[0].mxu0 %v381
        %v541 = vpop.f32.mrb[0].mxu0
        %v542 = vadd.f32 %v350, %v541
        %v543 = vpop.f32.mrb[0].mxu0
        %v544 = vadd.f32 %v354, %v543
        %v545 = vpop.f32.mrb[0].mxu0
        %v546 = vadd.f32 %v350, %v545
        %v547 = vpop.f32.mrb[0].mxu0
        %v548 = vadd.f32 %v354, %v547
        %549 = vdwg.mxu0
        %v550 = vmax.f32 %v502, 0.0
        %v551 = vmax.f32 %v504, 0.0
        %v552 = vmax.f32 %v506, 0.0
        %v553 = vmax.f32 %v508, 0.0
        %v554 = vmax.f32 %v512, 0.0
        %v555 = vmax.f32 %v514, 0.0
        %v556 = vmax.f32 %v516, 0.0
        %v557 = vmax.f32 %v518, 0.0
        %v558 = vmax.f32 %v522, 0.0
        %v559 = vmax.f32 %v524, 0.0
        %v560 = vmax.f32 %v526, 0.0
        %v561 = vmax.f32 %v528, 0.0
        %v562 = vmax.f32 %v532, 0.0
        %v563 = vmax.f32 %v534, 0.0
        %v564 = vmax.f32 %v536, 0.0
        %v565 = vmax.f32 %v538, 0.0
        %v566 = vmax.f32 %v542, 0.0
        %v567 = vmax.f32 %v544, 0.0
        %v568 = vmax.f32 %v546, 0.0
        %v569 = vmax.f32 %v548, 0.0
        %v570 = vpack.c.bf16 %v552, %v550
        %v571 = vpack.c.bf16 %v553, %v551
        %v572 = vpack.c.bf16 %v556, %v554
        %v573 = vpack.c.bf16 %v557, %v555
        %v574 = vpack.c.bf16 %v560, %v558
        %v575 = vpack.c.bf16 %v561, %v559
        %v576 = vpack.c.bf16 %v564, %v562
        %v577 = vpack.c.bf16 %v565, %v563
        %v578 = vpack.c.bf16 %v568, %v566
        %v579 = vpack.c.bf16 %v569, %v567
        %v590 = vunpack.c.l.b16 %v570
        %v591 = vunpack.c.l.b16 %v571
        %v592 = vunpack.c.h.b16 %v570
        %v593 = vunpack.c.h.b16 %v571
        %v594 = vunpack.c.l.b16 %v572
        %v595 = vunpack.c.l.b16 %v573
        %v596 = vunpack.c.h.b16 %v572
        %v597 = vunpack.c.h.b16 %v573
        %v598 = vunpack.c.l.b16 %v574
        %v599 = vunpack.c.l.b16 %v575
        %v600 = vunpack.c.h.b16 %v574
        %v601 = vunpack.c.h.b16 %v575
        %v602 = vunpack.c.l.b16 %v576
        %v603 = vunpack.c.l.b16 %v577
        %v604 = vunpack.c.h.b16 %v576
        %v605 = vunpack.c.h.b16 %v577
        %v606 = vunpack.c.l.b16 %v578
        %v607 = vunpack.c.l.b16 %v579
        %v608 = vunpack.c.h.b16 %v578
        %v609 = vunpack.c.h.b16 %v579
        %v610 = vpack.c.b16 %v591, %v590
        %v611 = vpack.c.b16 %v593, %v592
        %v612 = vpack.c.b16 %v595, %v594
        %v613 = vpack.c.b16 %v597, %v596
        %v614 = vpack.c.b16 %v599, %v598
        %v615 = vpack.c.b16 %v601, %v600
        %v616 = vpack.c.b16 %v603, %v602
        %v617 = vpack.c.b16 %v605, %v604
        %v618 = vpack.c.b16 %v607, %v606
        %v619 = vpack.c.b16 %v609, %v608
        %630 = vst [vmem:[%s303] sm:$0xff] %v610
        %631 = vst [vmem:[%s303 + $0x8] sm:$0xff] %v611
        %632 = vst [vmem:[%s303 + $0x10] sm:$0xff] %v612
        %633 = vst [vmem:[%s303 + $0x18] sm:$0xff] %v613
        %634 = vst [vmem:[%s303 + $0x20] sm:$0xff] %v614
        %635 = vst [vmem:[%s303 + $0x28] sm:$0xff] %v615
        %636 = vst [vmem:[%s303 + $0x30] sm:$0xff] %v616
        %637 = vst [vmem:[%s303 + $0x38] sm:$0xff] %v617
        %638 = vst [vmem:[%s303 + $0x40] sm:$0xff] %v618
        %639 = vst [vmem:[%s303 + $0x48] sm:$0xff] %v619
        %s640 = sand.u32 %s114, 1
        %s641 = sand.u32 %s114, 1
        %s642 = smul.addr %s641, 80
        %s643 = scalar_lea.vmem [#allocation3], %s642
        // Predicated region
        $region71: #{decoder_forward.7} parent=65 // pred_check
          %p644 = pneg %p124
        $region72: #{decoder_forward.7} parent=65 // pred_check_branch
          %646 = sbr.rel (%p644) target = $region74
        $region73: #{decoder_forward.7} parent=65 // pred_region
          %s647 = smul.u32 10, %s18
          %s648 = smul.u32 2, %s19
          %s649 = smul.addr %s647, 4
          %s650 = sadd.s32 %s648, %s649
          %s651 = smul.addr %s650, 4
          %s652 = scalar_lea.vmem %s3, %s651
          // Predicated region
          $region75: #{decoder_forward.7} parent=73 // pred_check
            _
          $region76: #{decoder_forward.7} parent=73 // pred_check_branch
            %654 = sbr.rel (0) target = $region78
          $region77: #{decoder_forward.7} parent=73 // pred_region
            // Predicated region
            $region79: #{decoder_forward.7} parent=77 // pred_check
              _
            $region80: #{decoder_forward.7} parent=77 // pred_check_branch
              %656 = sbr.rel (0) target = $region82
            $region81: #{decoder_forward.7} parent=77 // pred_region
              // Predicated region
              $region94: #{decoder_forward.7} parent=81 // pred_check
                _
              $region95: #{decoder_forward.7} parent=81 // pred_check_branch
                %689 = sbr.rel (0) target = $region97
              $region96: #{decoder_forward.7} parent=81 // pred_region
                loop: start=0, step=1, limit=1
                $region98: #{decoder_forward.7} parent=96 // loop_pre_header
                  _
                $region99: #{decoder_forward.7} parent=96 // loop_header
                  %s691 = sphi 0, %s695
                  %p692 = scmp.ge.s32.totalorder %s691, 1
                  %s696 = sphi %s643, %s643
                  %s697 = sphi %s652, %s652
                $region100: #{decoder_forward.7} parent=96 // loop_header_branch
                  %694 = sbr.rel (%p692) target = $region104
                $region101: #{decoder_forward.7} parent=96 // loop_body
                  %v698 = vld [vmem:[%s696] sm:$0xff]
                  %699 = vst [vmem:[%s697] sm:$0xff] %v698
                  %v700 = vld [vmem:[%s696 + $0x8] sm:$0xff]
                  %701 = vst [vmem:[%s697 + $0x10] sm:$0xff] %v700
                  %v702 = vld [vmem:[%s696 + $0x10] sm:$0xff]
                  %703 = vst [vmem:[%s697 + $0x20] sm:$0xff] %v702
                  %v704 = vld [vmem:[%s696 + $0x18] sm:$0xff]
                  %705 = vst [vmem:[%s697 + $0x30] sm:$0xff] %v704
                  %v706 = vld [vmem:[%s696 + $0x20] sm:$0xff]
                  %707 = vst [vmem:[%s697 + $0x40] sm:$0xff] %v706
                  %v708 = vld [vmem:[%s696 + $0x28] sm:$0xff]
                  %709 = vst [vmem:[%s697 + $0x50] sm:$0xff] %v708
                  %v710 = vld [vmem:[%s696 + $0x30] sm:$0xff]
                  %711 = vst [vmem:[%s697 + $0x60] sm:$0xff] %v710
                  %v712 = vld [vmem:[%s696 + $0x38] sm:$0xff]
                  %713 = vst [vmem:[%s697 + $0x70] sm:$0xff] %v712
                  %v714 = vld [vmem:[%s696 + $0x40] sm:$0xff]
                  %715 = vst [vmem:[%s697 + $0x80] sm:$0xff] %v714
                  %v716 = vld [vmem:[%s696 + $0x48] sm:$0xff]
                  %717 = vst [vmem:[%s697 + $0x90] sm:$0xff] %v716
                $region102: #{decoder_forward.7} parent=96 // loop_footer
                  %s695 = sadd.s32 1, %s691
                $region103: #{decoder_forward.7} parent=96 // loop_footer_branch
                  %690 = sbr.rel target = $region99
                $region104: #{decoder_forward.7} parent=96 // loop_exit
                  _
              $region97: #{decoder_forward.7} parent=81 // pred_fallthru
                _
              // Predicated region
              $region105: #{decoder_forward.7} parent=81 // pred_check
                _
              $region106: #{decoder_forward.7} parent=81 // pred_check_branch
                %719 = sbr.rel target = $region108
              $region107: #{decoder_forward.7} parent=81 // pred_region
                _
              $region108: #{decoder_forward.7} parent=81 // pred_fallthru
                _
            $region82: #{decoder_forward.7} parent=77 // pred_fallthru
              _
            // Predicated region
            $region83: #{decoder_forward.7} parent=77 // pred_check
              _
            $region84: #{decoder_forward.7} parent=77 // pred_check_branch
              %658 = sbr.rel target = $region86
            $region85: #{decoder_forward.7} parent=77 // pred_region
              loop: start=0, step=1, limit=1
              $region87: #{decoder_forward.7} parent=85 // loop_pre_header
                _
              $region88: #{decoder_forward.7} parent=85 // loop_header
                %s661 = sphi 0, %s665
                %p662 = scmp.ge.s32.totalorder %s661, 1
                %s666 = sphi %s643, %s643
                %s667 = sphi %s652, %s652
              $region89: #{decoder_forward.7} parent=85 // loop_header_branch
                %664 = sbr.rel (%p662) target = $region93
              $region90: #{decoder_forward.7} parent=85 // loop_body
                %v668 = vld [vmem:[%s666] sm:$0xff]
                %669 = vst [vmem:[%s667] sm:$0xff] %v668
                %v670 = vld [vmem:[%s666 + $0x8] sm:$0xff]
                %671 = vst [vmem:[%s667 + $0x10] sm:$0xff] %v670
                %v672 = vld [vmem:[%s666 + $0x10] sm:$0xff]
                %673 = vst [vmem:[%s667 + $0x20] sm:$0xff] %v672
                %v674 = vld [vmem:[%s666 + $0x18] sm:$0xff]
                %675 = vst [vmem:[%s667 + $0x30] sm:$0xff] %v674
                %v676 = vld [vmem:[%s666 + $0x20] sm:$0xff]
                %677 = vst [vmem:[%s667 + $0x40] sm:$0xff] %v676
                %v678 = vld [vmem:[%s666 + $0x28] sm:$0xff]
                %679 = vst [vmem:[%s667 + $0x50] sm:$0xff] %v678
                %v680 = vld [vmem:[%s666 + $0x30] sm:$0xff]
                %681 = vst [vmem:[%s667 + $0x60] sm:$0xff] %v680
                %v682 = vld [vmem:[%s666 + $0x38] sm:$0xff]
                %683 = vst [vmem:[%s667 + $0x70] sm:$0xff] %v682
                %v684 = vld [vmem:[%s666 + $0x40] sm:$0xff]
                %685 = vst [vmem:[%s667 + $0x80] sm:$0xff] %v684
                %v686 = vld [vmem:[%s666 + $0x48] sm:$0xff]
                %687 = vst [vmem:[%s667 + $0x90] sm:$0xff] %v686
              $region91: #{decoder_forward.7} parent=85 // loop_footer
                %s665 = sadd.s32 1, %s661
              $region92: #{decoder_forward.7} parent=85 // loop_footer_branch
                %660 = sbr.rel target = $region88
              $region93: #{decoder_forward.7} parent=85 // loop_exit
                _
            $region86: #{decoder_forward.7} parent=77 // pred_fallthru
              _
          $region78: #{decoder_forward.7} parent=73 // pred_fallthru
            _
          %720 = vnop
        $region74: #{decoder_forward.7} parent=65 // pred_fallthru
          _
      $region66: #{decoder_forward.7} parent=5 // pred_fallthru
        _
      %p721 = scmp.le.s32.totalorder 2, %s9
      // Predicated region
      $region109: #{decoder_forward.7} parent=5 // pred_check
        %p722 = pneg %p721
      $region110: #{decoder_forward.7} parent=5 // pred_check_branch
        %724 = sbr.rel (%p722) target = $region112
      $region111: #{decoder_forward.7} parent=5 // pred_region
        %s725 = ssub.s32 %s9, 2
        // Predicated region
        $region113: #{decoder_forward.7} parent=111 // pred_check
          %p726 = pneg %p130
        $region114: #{decoder_forward.7} parent=111 // pred_check_branch
          %728 = sbr.rel (%p726) target = $region116
        $region115: #{decoder_forward.7} parent=111 // pred_region
          %s729 = sand.u32 %s115, 1
          %s730 = sand.u32 %s115, 1
          %s731 = smul.addr %s730, 80
          %s732 = scalar_lea.vmem [#allocation3], %s731
        $region116: #{decoder_forward.7} parent=111 // pred_fallthru
          _
      $region112: #{decoder_forward.7} parent=5 // pred_fallthru
        _
    $region6: #{decoder_forward.7} parent=1 // loop_footer
      %s13 = sadd.s32 1, %s9
    $region7: #{decoder_forward.7} parent=1 // loop_footer_branch
      %8 = sbr.rel target = $region3
    $region8: #{decoder_forward.7} parent=1 // loop_exit
      _

// kernel: decoder_forward.8
$region0: #{decoder_forward.8}
  #allocation0 [shape = 'u32[]', space=smem, size = 0x4, offset = 0x4, fixed_abs, tag = 'smem constant byte address 0x4 - core index']
  #allocation1 [shape = 'u32[144,128]{1,0:T(1,128)}', space=vmem, size = 0x12000, scoped, tag = 'internal scratch']
  %s0 = inlined_call_operand.vmem [shape: bf16[384,144], index: 0, kind: input, shape index: {}]
  %s1 = inlined_call_operand.vmem [shape: bf16[144,512], index: 1, kind: input, shape index: {}]
  %s2 = inlined_call_operand.vmem [shape: f32[1,512], index: 2, kind: input, shape index: {}]
  %s3 = inlined_call_operand.vmem [shape: bf16[384,512], index: 3, kind: output, shape index: {}]
  %s4 = sld [smem:[#allocation0]]
  $region117: #{decoder_forward.8} parent=0
    _
  %s6 = ssub.s32 1, %s4
  %s7 = scalar_select 0, %s6, %s4
  $region1: #{decoder_forward.8} parent=0
    #allocation2 [shape = 'u8[147456]{0}', space=vmem, size = 0x24000, scoped, tag = 'input window, operand 1']
    #allocation3 [shape = 'u8[131072]{0}', space=vmem, size = 0x20000, scoped, tag = 'output window, operand 0']
    loop: start=0, step=1, limit=8
    $region2: #{decoder_forward.8} parent=1 // loop_pre_header
      _
    $region3: #{decoder_forward.8} parent=1 // loop_header
      %s9 = sphi 0, %s13
      %p10 = scmp.ge.s32.totalorder %s9, 8
      %s16 = sphi 0, %s28
      %s17 = sphi 0, %s24
      %s18 = sphi 0, %s16
      %s19 = sphi 0, %s17
      %s20 = sphi 0, %s18
      %s21 = sphi 0, %s19
      %s31 = sphi 0, %s33
      %s34 = sphi 0, %s31
      %s35 = sphi 0, %s34
      %s51 = sphi 0, %s35
      %s57 = sphi 0, %s59
      %s60 = sphi 0, %s57
      %s61 = sphi 0, %s60
      %s77 = sphi 0, %s61
      %s83 = sphi 0, %s85
      %s86 = sphi 0, %s83
      %s87 = sphi 0, %s86
      %s103 = sphi 0, %s87
      %s111 = sphi 0, %s113
      %s114 = sphi 0, %s111
      %s115 = sphi 0, %s114
      %s131 = sphi 0, %s115
    $region4: #{decoder_forward.8} parent=1 // loop_header_branch
      %12 = sbr.rel (%p10) target = $region8
    $region5: #{decoder_forward.8} parent=1 // loop_body
      %s14 = ssub.s32 %s9, 1
      %s15 = ssub.s32 %s9, 2
      %s22 = sadd.s32 1, %s17
      %p23 = scmp.ge.s32.totalorder %s22, 2
      %s24 = scalar_select %p23, 0, %s22
      %s25 = sadd.s32 1, %s16
      %s26 = scalar_select %p23, %s25, %s16
      %p27 = scmp.ge.s32.totalorder %s26, 3
      %s28 = scalar_select %p27, 0, %s26
      %s29 = ssub.s32 %s16, %s28
      %p30 = scmp.eq.s32.totalorder %s29, 0
      %s32 = sadd.s32 %s31, 1
      %s33 = scalar_select %p30, %s31, %s32
      %p36 = pneg %p30
      %p37 = scmp.eq.s32.totalorder %s9, 5
      %p38 = por %p36, %p37
      %p39 = scmp.ne.s32.totalorder %s31, %s34
      %p40 = scmp.eq.s32.totalorder %s9, 0
      %p41 = por %p39, %p40
      %p42 = scmp.ne.s32.totalorder %s31, %s34
      %p43 = scmp.eq.s32.totalorder %s14, 5
      %p44 = por %p42, %p43
      %p45 = scmp.ne.s32.totalorder %s34, %s35
      %p46 = scmp.eq.s32.totalorder %s14, 0
      %p47 = por %p45, %p46
      %p48 = scmp.ne.s32.totalorder %s34, %s35
      %p49 = scmp.eq.s32.totalorder %s15, 5
      %p50 = por %p48, %p49
      %p52 = scmp.ne.s32.totalorder %s35, %s51
      %p53 = scmp.eq.s32.totalorder %s15, 0
      %p54 = por %p52, %p53
      %s55 = ssub.s32 %s17, %s24
      %p56 = scmp.eq.s32.totalorder %s55, 0
      %s58 = sadd.s32 %s57, 1
      %s59 = scalar_select %p56, %s57, %s58
      %p62 = pneg %p56
      %p63 = scmp.eq.s32.totalorder %s9, 5
      %p64 = por %p62, %p63
      %p65 = scmp.ne.s32.totalorder %s57, %s60
      %p66 = scmp.eq.s32.totalorder %s9, 0
      %p67 = por %p65, %p66
      %p68 = scmp.ne.s32.totalorder %s57, %s60
      %p69 = scmp.eq.s32.totalorder %s14, 5
      %p70 = por %p68, %p69
      %p71 = scmp.ne.s32.totalorder %s60, %s61
      %p72 = scmp.eq.s32.totalorder %s14, 0
      %p73 = por %p71, %p72
      %p74 = scmp.ne.s32.totalorder %s60, %s61
      %p75 = scmp.eq.s32.totalorder %s15, 5
      %p76 = por %p74, %p75
      %p78 = scmp.ne.s32.totalorder %s61, %s77
      %p79 = scmp.eq.s32.totalorder %s15, 0
      %p80 = por %p78, %p79
      %s81 = ssub.s32 %s17, %s24
      %p82 = scmp.eq.s32.totalorder %s81, 0
      %s84 = sadd.s32 %s83, 1
      %s85 = scalar_select %p82, %s83, %s84
      %p88 = pneg %p82
      %p89 = scmp.eq.s32.totalorder %s9, 5
      %p90 = por %p88, %p89
      %p91 = scmp.ne.s32.totalorder %s83, %s86
      %p92 = scmp.eq.s32.totalorder %s9, 0
      %p93 = por %p91, %p92
      %p94 = scmp.ne.s32.totalorder %s83, %s86
      %p95 = scmp.eq.s32.totalorder %s14, 5
      %p96 = por %p94, %p95
      %p97 = scmp.ne.s32.totalorder %s86, %s87
      %p98 = scmp.eq.s32.totalorder %s14, 0
      %p99 = por %p97, %p98
      %p100 = scmp.ne.s32.totalorder %s86, %s87
      %p101 = scmp.eq.s32.totalorder %s15, 5
      %p102 = por %p100, %p101
      %p104 = scmp.ne.s32.totalorder %s87, %s103
      %p105 = scmp.eq.s32.totalorder %s15, 0
      %p106 = por %p104, %p105
      %s107 = ssub.s32 %s16, %s28
      %s108 = ssub.s32 %s17, %s24
      %s109 = sor.u32 %s107, %s108
      %p110 = scmp.eq.s32.totalorder %s109, 0
      %s112 = sadd.s32 %s111, 1
      %s113 = scalar_select %p110, %s111, %s112
      %p116 = pneg %p110
      %p117 = scmp.eq.s32.totalorder %s9, 5
      %p118 = por %p116, %p117
      %p119 = scmp.ne.s32.totalorder %s111, %s114
      %p120 = scmp.eq.s32.totalorder %s9, 0
      %p121 = por %p119, %p120
      %p122 = scmp.ne.s32.totalorder %s111, %s114
      %p123 = scmp.eq.s32.totalorder %s14, 5
      %p124 = por %p122, %p123
      %p125 = scmp.ne.s32.totalorder %s114, %s115
      %p126 = scmp.eq.s32.totalorder %s14, 0
      %p127 = por %p125, %p126
      %p128 = scmp.ne.s32.totalorder %s114, %s115
      %p129 = scmp.eq.s32.totalorder %s15, 5
      %p130 = por %p128, %p129
      %p132 = scmp.ne.s32.totalorder %s115, %s131
      %p133 = scmp.eq.s32.totalorder %s15, 0
      %p134 = por %p132, %p133
      %p135 = scmp.le.s32.totalorder 1, %s9
      %p136 = scmp.lt.s32.totalorder %s9, 7
      %p137 = pnand %p135, %p136
      %p138 = pneg %p137
      // Predicated region
      $region9: #{decoder_forward.8} parent=5 // pred_check
        _
      $region10: #{decoder_forward.8} parent=5 // pred_check_branch
        %140 = sbr.rel (%p137) target = $region12
      $region11: #{decoder_forward.8} parent=5 // pred_region
        %s141 = ssub.s32 %s9, 1
      $region12: #{decoder_forward.8} parent=5 // pred_fallthru
        _
      %p142 = scmp.lt.s32.totalorder %s9, 6
      // Predicated region
      $region13: #{decoder_forward.8} parent=5 // pred_check
        %p143 = pneg %p142
      $region14: #{decoder_forward.8} parent=5 // pred_check_branch
        %145 = sbr.rel (%p143) target = $region16
      $region15: #{decoder_forward.8} parent=5 // pred_region
        // Predicated region
        $region17: #{decoder_forward.8} parent=15 // pred_check
          %p146 = pneg %p41
        $region18: #{decoder_forward.8} parent=15 // pred_check_branch
          %148 = sbr.rel (%p146) target = $region20
        $region19: #{decoder_forward.8} parent=15 // pred_region
          %s149 = smul.u32 16, %s16
          %p150 = scmp.lt.s32.totalorder %s149, 47
          %s151 = scalar_select %p150, %s149, 47
          %s152 = smul.addr %s151, 2
          %s153 = smul.addr %s152, 4
          %s154 = scalar_lea.vmem %s0, %s153
          %s155 = smul.u32 16, %s16
        $region20: #{decoder_forward.8} parent=15 // pred_fallthru
          _
        // Predicated region
        $region21: #{decoder_forward.8} parent=15 // pred_check
          %p156 = pneg %p67
        $region22: #{decoder_forward.8} parent=15 // pred_check_branch
          %158 = sbr.rel (%p156) target = $region24
        $region23: #{decoder_forward.8} parent=15 // pred_region
          %s159 = sand.u32 %s57, 1
          %s160 = sand.u32 %s57, 1
          %s161 = smul.addr %s160, 144
          %s162 = scalar_lea.vmem [#allocation2], %s161
          %s163 = smul.u32 2, %s17
          %s164 = smul.addr %s163, 4
          %s165 = scalar_lea.vmem %s1, %s164
          // Predicated region
          $region25: #{decoder_forward.8} parent=23 // pred_check
            _
          $region26: #{decoder_forward.8} parent=23 // pred_check_branch
            %167 = sbr.rel (0) target = $region28
          $region27: #{decoder_forward.8} parent=23 // pred_region
            // Predicated region
            $region29: #{decoder_forward.8} parent=27 // pred_check
              _
            $region30: #{decoder_forward.8} parent=27 // pred_check_branch
              %169 = sbr.rel (0) target = $region32
            $region31: #{decoder_forward.8} parent=27 // pred_region
              // Predicated region
              $region44: #{decoder_forward.8} parent=31 // pred_check
                _
              $region45: #{decoder_forward.8} parent=31 // pred_check_branch
                %218 = sbr.rel (0) target = $region47
              $region46: #{decoder_forward.8} parent=31 // pred_region
                loop: start=0, step=1, limit=1
                $region48: #{decoder_forward.8} parent=46 // loop_pre_header
                  _
                $region49: #{decoder_forward.8} parent=46 // loop_header
                  %s220 = sphi 0, %s224
                  %p221 = scmp.ge.s32.totalorder %s220, 1
                  %s225 = sphi %s165, %s165
                  %s226 = sphi %s162, %s162
                $region50: #{decoder_forward.8} parent=46 // loop_header_branch
                  %223 = sbr.rel (%p221) target = $region54
                $region51: #{decoder_forward.8} parent=46 // loop_body
                  %v227 = vld [vmem:[%s225] sm:$0xff]
                  %228 = vst [vmem:[%s226] sm:$0xff] %v227
                  %v229 = vld [vmem:[%s225 + $0x10] sm:$0xff]
                  %230 = vst [vmem:[%s226 + $0x8] sm:$0xff] %v229
                  %v231 = vld [vmem:[%s225 + $0x20] sm:$0xff]
                  %232 = vst [vmem:[%s226 + $0x10] sm:$0xff] %v231
                  %v233 = vld [vmem:[%s225 + $0x30] sm:$0xff]
                  %234 = vst [vmem:[%s226 + $0x18] sm:$0xff] %v233
                  %v235 = vld [vmem:[%s225 + $0x40] sm:$0xff]
                  %236 = vst [vmem:[%s226 + $0x20] sm:$0xff] %v235
                  %v237 = vld [vmem:[%s225 + $0x50] sm:$0xff]
                  %238 = vst [vmem:[%s226 + $0x28] sm:$0xff] %v237
                  %v239 = vld [vmem:[%s225 + $0x60] sm:$0xff]
                  %240 = vst [vmem:[%s226 + $0x30] sm:$0xff] %v239
                  %v241 = vld [vmem:[%s225 + $0x70] sm:$0xff]
                  %242 = vst [vmem:[%s226 + $0x38] sm:$0xff] %v241
                  %v243 = vld [vmem:[%s225 + $0x80] sm:$0xff]
                  %244 = vst [vmem:[%s226 + $0x40] sm:$0xff] %v243
                  %v245 = vld [vmem:[%s225 + $0x90] sm:$0xff]
                  %246 = vst [vmem:[%s226 + $0x48] sm:$0xff] %v245
                  %v247 = vld [vmem:[%s225 + $0xa0] sm:$0xff]
                  %248 = vst [vmem:[%s226 + $0x50] sm:$0xff] %v247
                  %v249 = vld [vmem:[%s225 + $0xb0] sm:$0xff]
                  %250 = vst [vmem:[%s226 + $0x58] sm:$0xff] %v249
                  %v251 = vld [vmem:[%s225 + $0xc0] sm:$0xff]
                  %252 = vst [vmem:[%s226 + $0x60] sm:$0xff] %v251
                  %v253 = vld [vmem:[%s225 + $0xd0] sm:$0xff]
                  %254 = vst [vmem:[%s226 + $0x68] sm:$0xff] %v253
                  %v255 = vld [vmem:[%s225 + $0xe0] sm:$0xff]
                  %256 = vst [vmem:[%s226 + $0x70] sm:$0xff] %v255
                  %v257 = vld [vmem:[%s225 + $0xf0] sm:$0xff]
                  %258 = vst [vmem:[%s226 + $0x78] sm:$0xff] %v257
                  %v259 = vld [vmem:[%s225 + $0x100] sm:$0xff]
                  %260 = vst [vmem:[%s226 + $0x80] sm:$0xff] %v259
                  %v261 = vld [vmem:[%s225 + $0x110] sm:$0xff]
                  %262 = vst [vmem:[%s226 + $0x88] sm:$0xff] %v261
                $region52: #{decoder_forward.8} parent=46 // loop_footer
                  %s224 = sadd.s32 1, %s220
                $region53: #{decoder_forward.8} parent=46 // loop_footer_branch
                  %219 = sbr.rel target = $region49
                $region54: #{decoder_forward.8} parent=46 // loop_exit
                  _
              $region47: #{decoder_forward.8} parent=31 // pred_fallthru
                _
              // Predicated region
              $region55: #{decoder_forward.8} parent=31 // pred_check
                _
              $region56: #{decoder_forward.8} parent=31 // pred_check_branch
                %264 = sbr.rel target = $region58
              $region57: #{decoder_forward.8} parent=31 // pred_region
                _
              $region58: #{decoder_forward.8} parent=31 // pred_fallthru
                _
            $region32: #{decoder_forward.8} parent=27 // pred_fallthru
              _
            // Predicated region
            $region33: #{decoder_forward.8} parent=27 // pred_check
              _
            $region34: #{decoder_forward.8} parent=27 // pred_check_branch
              %171 = sbr.rel target = $region36
            $region35: #{decoder_forward.8} parent=27 // pred_region
              loop: start=0, step=1, limit=1
              $region37: #{decoder_forward.8} parent=35 // loop_pre_header
                _
              $region38: #{decoder_forward.8} parent=35 // loop_header
                %s174 = sphi 0, %s178
                %p175 = scmp.ge.s32.totalorder %s174, 1
                %s179 = sphi %s165, %s165
                %s180 = sphi %s162, %s162
              $region39: #{decoder_forward.8} parent=35 // loop_header_branch
                %177 = sbr.rel (%p175) target = $region43
              $region40: #{decoder_forward.8} parent=35 // loop_body
                %v181 = vld [vmem:[%s179] sm:$0xff]
                %182 = vst [vmem:[%s180] sm:$0xff] %v181
                %v183 = vld [vmem:[%s179 + $0x10] sm:$0xff]
                %184 = vst [vmem:[%s180 + $0x8] sm:$0xff] %v183
                %v185 = vld [vmem:[%s179 + $0x20] sm:$0xff]
                %186 = vst [vmem:[%s180 + $0x10] sm:$0xff] %v185
                %v187 = vld [vmem:[%s179 + $0x30] sm:$0xff]
                %188 = vst [vmem:[%s180 + $0x18] sm:$0xff] %v187
                %v189 = vld [vmem:[%s179 + $0x40] sm:$0xff]
                %190 = vst [vmem:[%s180 + $0x20] sm:$0xff] %v189
                %v191 = vld [vmem:[%s179 + $0x50] sm:$0xff]
                %192 = vst [vmem:[%s180 + $0x28] sm:$0xff] %v191
                %v193 = vld [vmem:[%s179 + $0x60] sm:$0xff]
                %194 = vst [vmem:[%s180 + $0x30] sm:$0xff] %v193
                %v195 = vld [vmem:[%s179 + $0x70] sm:$0xff]
                %196 = vst [vmem:[%s180 + $0x38] sm:$0xff] %v195
                %v197 = vld [vmem:[%s179 + $0x80] sm:$0xff]
                %198 = vst [vmem:[%s180 + $0x40] sm:$0xff] %v197
                %v199 = vld [vmem:[%s179 + $0x90] sm:$0xff]
                %200 = vst [vmem:[%s180 + $0x48] sm:$0xff] %v199
                %v201 = vld [vmem:[%s179 + $0xa0] sm:$0xff]
                %202 = vst [vmem:[%s180 + $0x50] sm:$0xff] %v201
                %v203 = vld [vmem:[%s179 + $0xb0] sm:$0xff]
                %204 = vst [vmem:[%s180 + $0x58] sm:$0xff] %v203
                %v205 = vld [vmem:[%s179 + $0xc0] sm:$0xff]
                %206 = vst [vmem:[%s180 + $0x60] sm:$0xff] %v205
                %v207 = vld [vmem:[%s179 + $0xd0] sm:$0xff]
                %208 = vst [vmem:[%s180 + $0x68] sm:$0xff] %v207
                %v209 = vld [vmem:[%s179 + $0xe0] sm:$0xff]
                %210 = vst [vmem:[%s180 + $0x70] sm:$0xff] %v209
                %v211 = vld [vmem:[%s179 + $0xf0] sm:$0xff]
                %212 = vst [vmem:[%s180 + $0x78] sm:$0xff] %v211
                %v213 = vld [vmem:[%s179 + $0x100] sm:$0xff]
                %214 = vst [vmem:[%s180 + $0x80] sm:$0xff] %v213
                %v215 = vld [vmem:[%s179 + $0x110] sm:$0xff]
                %216 = vst [vmem:[%s180 + $0x88] sm:$0xff] %v215
              $region41: #{decoder_forward.8} parent=35 // loop_footer
                %s178 = sadd.s32 1, %s174
              $region42: #{decoder_forward.8} parent=35 // loop_footer_branch
                %173 = sbr.rel target = $region38
              $region43: #{decoder_forward.8} parent=35 // loop_exit
                _
            $region36: #{decoder_forward.8} parent=27 // pred_fallthru
              _
          $region28: #{decoder_forward.8} parent=23 // pred_fallthru
            _
          %265 = vnop
        $region24: #{decoder_forward.8} parent=15 // pred_fallthru
          _
        // Predicated region
        $region59: #{decoder_forward.8} parent=15 // pred_check
          %p266 = pneg %p93
        $region60: #{decoder_forward.8} parent=15 // pred_check_branch
          %268 = sbr.rel (%p266) target = $region62
        $region61: #{decoder_forward.8} parent=15 // pred_region
          %s269 = smul.u32 2, %s17
          %p270 = scmp.lt.s32.totalorder %s269, 3
          %s271 = scalar_select %p270, %s269, 3
          %s272 = scalar_lea.vmem %s2, %s271
          %s273 = smul.u32 2, %s17
        $region62: #{decoder_forward.8} parent=15 // pred_fallthru
          _
      $region16: #{decoder_forward.8} parent=5 // pred_fallthru
        _
      %p274 = scmp.le.s32.totalorder 1, %s9
      %p275 = scmp.lt.s32.totalorder %s9, 7
      %p276 = pnand %p274, %p275
      %p277 = pneg %p276
      // Predicated region
      $region63: #{decoder_forward.8} parent=5 // pred_check
        _
      $region64: #{decoder_forward.8} parent=5 // pred_check_branch
        %279 = sbr.rel (%p276) target = $region66
      $region65: #{decoder_forward.8} parent=5 // pred_region
        %s280 = ssub.s32 %s9, 1
        %s281 = sand.u32 %s60, 1
        %s282 = sand.u32 %s60, 1
        %s283 = smul.addr %s282, 144
        %s284 = scalar_lea.vmem [#allocation2], %s283
        // Predicated region
        $region67: #{decoder_forward.8} parent=65 // pred_check
          %p285 = pneg %p73
        $region68: #{decoder_forward.8} parent=65 // pred_check_branch
          %287 = sbr.rel (%p285) target = $region70
        $region69: #{decoder_forward.8} parent=65 // pred_region
          _
        $region70: #{decoder_forward.8} parent=65 // pred_fallthru
          _
        %s288 = smul.u32 16, %s18
        %p289 = scmp.lt.s32.totalorder %s288, 47
        %s290 = scalar_select %p289, %s288, 47
        %s291 = smul.addr %s290, 2
        %s292 = smul.addr %s291, 4
        %s293 = scalar_lea.vmem %s0, %s292
        %p294 = pneg %p47
        %p295 = pneg %p44
        %s296 = sand.u32 %s60, 1
        %s297 = sand.u32 %s60, 1
        %s298 = smul.addr %s297, 144
        %s299 = scalar_lea.vmem [#allocation2], %s298
        %p300 = pneg %p73
        %p301 = pneg %p70
        %s302 = smul.u32 2, %s19
        %p303 = scmp.lt.s32.totalorder %s302, 3
        %s304 = scalar_select %p303, %s302, 3
        %s305 = scalar_lea.vmem %s2, %s304
        %p306 = pneg %p99
        %p307 = pneg %p96
        %p308 = pneg %p127
        %p309 = pneg %p124
        %s310 = sand.u32 %s114, 1
        %s311 = sand.u32 %s114, 1
        %s312 = smul.addr %s311, 128
        %s313 = scalar_lea.vmem [#allocation3], %s312
        %s314 = smul.u32 16, %s18
        %p315 = scmp.lt.s32.totalorder %s314, 47
        %s316 = scalar_select %p315, %s314, 47
        %s317 = smul.addr %s316, 2
        %s318 = smul.addr %s317, 4
        %s319 = scalar_lea.vmem %s0, %s318
        %s320 = smul.u32 16, %s18
        %s321 = smul.u32 2, %s19
        %s322 = smul.u32 2, %s19
        %p323 = scmp.lt.s32.totalorder %s322, 3
        %s324 = scalar_select %p323, %s322, 3
        %s325 = scalar_lea.vmem %s2, %s324
        %s326 = smul.u32 2, %s19
        %s327 = smul.u32 16, %s18
        %s328 = smul.u32 2, %s19
        %v330 = vld [vmem:[%s319] sm:$0xff]
        %v331 = vld [vmem:[%s319 + $0x8] sm:$0xff]
        %v332 = vld [vmem:[%s319 + $0x10] sm:$0xff]
        %v333 = vld [vmem:[%s319 + $0x18] sm:$0xff]
        %v334 = vld [vmem:[%s319 + $0x20] sm:$0xff]
        %v335 = vld [vmem:[%s319 + $0x28] sm:$0xff]
        %v336 = vld [vmem:[%s319 + $0x30] sm:$0xff]
        %v337 = vld [vmem:[%s319 + $0x38] sm:$0xff]
        %v338 = vld [vmem:[%s319 + $0x40] sm:$0xff]
        %v339 = vld [vmem:[%s319 + $0x48] sm:$0xff]
        %v340 = vld [vmem:[%s319 + $0x50] sm:$0xff]
        %v341 = vld [vmem:[%s319 + $0x58] sm:$0xff]
        %v342 = vld [vmem:[%s319 + $0x60] sm:$0xff]
        %v343 = vld [vmem:[%s319 + $0x68] sm:$0xff]
        %v344 = vld [vmem:[%s319 + $0x70] sm:$0xff]
        %v345 = vld [vmem:[%s319 + $0x78] sm:$0xff]
        %v346 = vld [vmem:[%s284] sm:$0xff]
        %v347 = vld [vmem:[%s284 + $0x8] sm:$0xff]
        %v348 = vld [vmem:[%s284 + $0x10] sm:$0xff]
        %v349 = vld [vmem:[%s284 + $0x18] sm:$0xff]
        %v350 = vld [vmem:[%s284 + $0x20] sm:$0xff]
        %v351 = vld [vmem:[%s284 + $0x28] sm:$0xff]
        %v352 = vld [vmem:[%s284 + $0x30] sm:$0xff]
        %v353 = vld [vmem:[%s284 + $0x38] sm:$0xff]
        %v354 = vld [vmem:[%s284 + $0x40] sm:$0xff]
        %v355 = vld [vmem:[%s284 + $0x48] sm:$0xff]
        %v356 = vld [vmem:[%s284 + $0x50] sm:$0xff]
        %v357 = vld [vmem:[%s284 + $0x58] sm:$0xff]
        %v358 = vld [vmem:[%s284 + $0x60] sm:$0xff]
        %v359 = vld [vmem:[%s284 + $0x68] sm:$0xff]
        %v360 = vld [vmem:[%s284 + $0x70] sm:$0xff]
        %v361 = vld [vmem:[%s284 + $0x78] sm:$0xff]
        %v362 = vld [vmem:[%s284 + $0x80] sm:$0xff]
        %v363 = vld [vmem:[%s284 + $0x88] sm:$0xff]
        %v364 = vld [vmem:[%s325] sm:$0x3]
        %v366 = vlaneseq
        %v367 = vshrl.u32 %v366, 7
        %v368 = vsub.s32 0, %v367
        %v369 = vrot.slane %v364, %v368
        %v370 = vlaneseq
        %v371 = vshrl.u32 %v370, 7
        %v372 = vsub.s32 1, %v371
        %v373 = vrot.slane %v364, %v372
        %v392 = vunpack.c.l.b16 %v330
        %v393 = vunpack.c.h.b16 %v330
        %v394 = vunpack.c.l.b16 %v331
        %v395 = vunpack.c.h.b16 %v331
        %v396 = vunpack.c.l.b16 %v332
        %v397 = vunpack.c.h.b16 %v332
        %v398 = vunpack.c.l.b16 %v333
        %v399 = vunpack.c.h.b16 %v333
        %v400 = vunpack.c.l.b16 %v334
        %v401 = vunpack.c.h.b16 %v334
        %v402 = vunpack.c.l.b16 %v335
        %v403 = vunpack.c.h.b16 %v335
        %v404 = vunpack.c.l.b16 %v336
        %v405 = vunpack.c.h.b16 %v336
        %v406 = vunpack.c.l.b16 %v337
        %v407 = vunpack.c.h.b16 %v337
        %v408 = vunpack.c.l.b16 %v338
        %v409 = vunpack.c.h.b16 %v338
        %v410 = vunpack.c.l.b16 %v339
        %v411 = vunpack.c.h.b16 %v339
        %v412 = vunpack.c.l.b16 %v340
        %v413 = vunpack.c.h.b16 %v340
        %v414 = vunpack.c.l.b16 %v341
        %v415 = vunpack.c.h.b16 %v341
        %v416 = vunpack.c.l.b16 %v342
        %v417 = vunpack.c.h.b16 %v342
        %v418 = vunpack.c.l.b16 %v343
        %v419 = vunpack.c.h.b16 %v343
        %v420 = vunpack.c.l.b16 %v344
        %v421 = vunpack.c.h.b16 %v344
        %v422 = vunpack.c.l.b16 %v345
        %v423 = vunpack.c.h.b16 %v345
        %v424 = vpack.c.b16 %v394, %v392
        %v425 = vpack.c.b16 %v395, %v393
        %v426 = vpack.c.b16 %v398, %v396
        %v427 = vpack.c.b16 %v399, %v397
        %v428 = vpack.c.b16 %v402, %v400
        %v429 = vpack.c.b16 %v403, %v401
        %v430 = vpack.c.b16 %v406, %v404
        %v431 = vpack.c.b16 %v407, %v405
        %v432 = vpack.c.b16 %v410, %v408
        %v433 = vpack.c.b16 %v411, %v409
        %v434 = vpack.c.b16 %v414, %v412
        %v435 = vpack.c.b16 %v415, %v413
        %v436 = vpack.c.b16 %v418, %v416
        %v437 = vpack.c.b16 %v419, %v417
        %v438 = vpack.c.b16 %v422, %v420
        %v439 = vpack.c.b16 %v423, %v421
        %v466 = vunpack.c.l.b16 %v346
        %v467 = vunpack.c.h.b16 %v346
        %v468 = vunpack.c.l.b16 %v347
        %v469 = vunpack.c.h.b16 %v347
        %v470 = vunpack.c.l.b16 %v348
        %v471 = vunpack.c.h.b16 %v348
        %v472 = vunpack.c.l.b16 %v349
        %v473 = vunpack.c.h.b16 %v349
        %v474 = vunpack.c.l.b16 %v350
        %v475 = vunpack.c.h.b16 %v350
        %v476 = vunpack.c.l.b16 %v351
        %v477 = vunpack.c.h.b16 %v351
        %v478 = vunpack.c.l.b16 %v352
        %v479 = vunpack.c.h.b16 %v352
        %v480 = vunpack.c.l.b16 %v353
        %v481 = vunpack.c.h.b16 %v353
        %v482 = vunpack.c.l.b16 %v354
        %v483 = vunpack.c.h.b16 %v354
        %v484 = vunpack.c.l.b16 %v355
        %v485 = vunpack.c.h.b16 %v355
        %v486 = vunpack.c.l.b16 %v356
        %v487 = vunpack.c.h.b16 %v356
        %v488 = vunpack.c.l.b16 %v357
        %v489 = vunpack.c.h.b16 %v357
        %v490 = vunpack.c.l.b16 %v358
        %v491 = vunpack.c.h.b16 %v358
        %v492 = vunpack.c.l.b16 %v359
        %v493 = vunpack.c.h.b16 %v359
        %v494 = vunpack.c.l.b16 %v360
        %v495 = vunpack.c.h.b16 %v360
        %v496 = vunpack.c.l.b16 %v361
        %v497 = vunpack.c.h.b16 %v361
        %v498 = vunpack.c.l.b16 %v362
        %v499 = vunpack.c.h.b16 %v362
        %v500 = vunpack.c.l.b16 %v363
        %v501 = vunpack.c.h.b16 %v363
        %v502 = vpack.c.b16 %v468, %v466
        %v503 = vpack.c.b16 %v469, %v467
        %v504 = vpack.c.b16 %v472, %v470
        %v505 = vpack.c.b16 %v473, %v471
        %v506 = vpack.c.b16 %v476, %v474
        %v507 = vpack.c.b16 %v477, %v475
        %v508 = vpack.c.b16 %v480, %v478
        %v509 = vpack.c.b16 %v481, %v479
        %v510 = vpack.c.b16 %v484, %v482
        %v511 = vpack.c.b16 %v485, %v483
        %v512 = vpack.c.b16 %v488, %v486
        %v513 = vpack.c.b16 %v489, %v487
        %v514 = vpack.c.b16 %v492, %v490
        %v515 = vpack.c.b16 %v493, %v491
        %v516 = vpack.c.b16 %v496, %v494
        %v517 = vpack.c.b16 %v497, %v495
        %v518 = vpack.c.b16 %v500, %v498
        %v519 = vpack.c.b16 %v501, %v499
        %vm538 = vcmask 130048
        %v540 = vsel %vm538, %v425, 0
        %v543 = vsel %vm538, %v427, 0
        %v546 = vsel %vm538, %v429, 0
        %v549 = vsel %vm538, %v431, 0
        %v552 = vsel %vm538, %v433, 0
        %v555 = vsel %vm538, %v435, 0
        %v558 = vsel %vm538, %v437, 0
        %v561 = vsel %vm538, %v439, 0
        %563 = vmatprep.subr.bf16.mxu0 %v503
        %564 = vmatpush1.bf16.msra.mxu0 %v502
        %565 = vmatprep.subr.bf16.mxu0 %v505
        %566 = vmatpush1.bf16.msra.mxu0 %v504
        %567 = vmatprep.subr.bf16.mxu0 %v507
        %568 = vmatpush1.bf16.msra.mxu0 %v506
        %569 = vmatprep.subr.bf16.mxu0 %v509
        %570 = vmatpush1.bf16.msra.mxu0 %v508
        %571 = vmatprep.subr.bf16.mxu0 %v511
        %572 = vmatpush1.bf16.msra.mxu0 %v510
        %573 = vmatprep.subr.bf16.mxu0 %v513
        %574 = vmatpush1.bf16.msra.mxu0 %v512
        %575 = vmatprep.subr.bf16.mxu0 %v515
        %576 = vmatpush1.bf16.msra.mxu0 %v514
        %577 = vmatprep.subr.bf16.mxu0 %v517
        %578 = vmatpush1.bf16.msra.mxu0 %v516
        %579 = vmatprep.subr.bf16.mxu0 %v519
        %580 = vmatpush1.bf16.msra.mxu0 %v518
        %581 = vmatprep.subr.bf16.mxu0 0
        %582 = vmatpush1.bf16.msra.mxu0 0
        %583 = vmatprep.subr.bf16.mxu0 0
        %584 = vmatpush1.bf16.msra.mxu0 0
        %585 = vmatprep.subr.bf16.mxu0 0
        %586 = vmatpush1.bf16.msra.mxu0 0
        %587 = vmatprep.subr.bf16.mxu0 0
        %588 = vmatpush1.bf16.msra.mxu0 0
        %589 = vmatprep.subr.bf16.mxu0 0
        %590 = vmatpush1.bf16.msra.mxu0 0
        %591 = vmatprep.subr.bf16.mxu0 0
        %592 = vmatpush1.bf16.msra.mxu0 0
        %593 = vmatprep.subr.bf16.mxu0 0
        %594 = vmatpush1.bf16.msra.mxu0 0
        %595 = vmatprep.mubr.bf16.mxu0 %v540
        %596 = vmatmul.mubr.bf16.gmra.mrb[0].mxu0 %v424
        %v597 = vpop.f32.mrb[0].mxu0
        %v598 = vadd.f32 %v369, %v597
        %v599 = vpop.f32.mrb[0].mxu0
        %v600 = vadd.f32 %v373, %v599
        %v601 = vpop.f32.mrb[0].mxu0
        %v602 = vadd.f32 %v369, %v601
        %v603 = vpop.f32.mrb[0].mxu0
        %v604 = vadd.f32 %v373, %v603
        %605 = vmatprep.mubr.bf16.mxu0 %v543
        %606 = vmatmul.mubr.bf16.gmra.mrb[0].mxu0 %v426
        %v607 = vpop.f32.mrb[0].mxu0
        %v608 = vadd.f32 %v369, %v607
        %v609 = vpop.f32.mrb[0].mxu0
        %v610 = vadd.f32 %v373, %v609
        %v611 = vpop.f32.mrb[0].mxu0
        %v612 = vadd.f32 %v369, %v611
        %v613 = vpop.f32.mrb[0].mxu0
        %v614 = vadd.f32 %v373, %v613
        %615 = vmatprep.mubr.bf16.mxu0 %v546
        %616 = vmatmul.mubr.bf16.gmra.mrb[0].mxu0 %v428
        %v617 = vpop.f32.mrb[0].mxu0
        %v618 = vadd.f32 %v369, %v617
        %v619 = vpop.f32.mrb[0].mxu0
        %v620 = vadd.f32 %v373, %v619
        %v621 = vpop.f32.mrb[0].mxu0
        %v622 = vadd.f32 %v369, %v621
        %v623 = vpop.f32.mrb[0].mxu0
        %v624 = vadd.f32 %v373, %v623
        %625 = vmatprep.mubr.bf16.mxu0 %v549
        %626 = vmatmul.mubr.bf16.gmra.mrb[0].mxu0 %v430
        %v627 = vpop.f32.mrb[0].mxu0
        %v628 = vadd.f32 %v369, %v627
        %v629 = vpop.f32.mrb[0].mxu0
        %v630 = vadd.f32 %v373, %v629
        %v631 = vpop.f32.mrb[0].mxu0
        %v632 = vadd.f32 %v369, %v631
        %v633 = vpop.f32.mrb[0].mxu0
        %v634 = vadd.f32 %v373, %v633
        %635 = vmatprep.mubr.bf16.mxu0 %v552
        %636 = vmatmul.mubr.bf16.gmra.mrb[0].mxu0 %v432
        %v637 = vpop.f32.mrb[0].mxu0
        %v638 = vadd.f32 %v369, %v637
        %v639 = vpop.f32.mrb[0].mxu0
        %v640 = vadd.f32 %v373, %v639
        %v641 = vpop.f32.mrb[0].mxu0
        %v642 = vadd.f32 %v369, %v641
        %v643 = vpop.f32.mrb[0].mxu0
        %v644 = vadd.f32 %v373, %v643
        %645 = vmatprep.mubr.bf16.mxu0 %v555
        %646 = vmatmul.mubr.bf16.gmra.mrb[0].mxu0 %v434
        %v647 = vpop.f32.mrb[0].mxu0
        %v648 = vadd.f32 %v369, %v647
        %v649 = vpop.f32.mrb[0].mxu0
        %v650 = vadd.f32 %v373, %v649
        %v651 = vpop.f32.mrb[0].mxu0
        %v652 = vadd.f32 %v369, %v651
        %v653 = vpop.f32.mrb[0].mxu0
        %v654 = vadd.f32 %v373, %v653
        %655 = vmatprep.mubr.bf16.mxu0 %v558
        %656 = vmatmul.mubr.bf16.gmra.mrb[0].mxu0 %v436
        %v657 = vpop.f32.mrb[0].mxu0
        %v658 = vadd.f32 %v369, %v657
        %v659 = vpop.f32.mrb[0].mxu0
        %v660 = vadd.f32 %v373, %v659
        %v661 = vpop.f32.mrb[0].mxu0
        %v662 = vadd.f32 %v369, %v661
        %v663 = vpop.f32.mrb[0].mxu0
        %v664 = vadd.f32 %v373, %v663
        %665 = vmatprep.mubr.bf16.mxu0 %v561
        %666 = vmatmul.mubr.bf16.gmra.mrb[0].mxu0 %v438
        %v667 = vpop.f32.mrb[0].mxu0
        %v668 = vadd.f32 %v369, %v667
        %v669 = vpop.f32.mrb[0].mxu0
        %v670 = vadd.f32 %v373, %v669
        %v671 = vpop.f32.mrb[0].mxu0
        %v672 = vadd.f32 %v369, %v671
        %v673 = vpop.f32.mrb[0].mxu0
        %v674 = vadd.f32 %v373, %v673
        %675 = vdwg.mxu0
        %v676 = vmax.f32 %v598, 0.0
        %v677 = vmax.f32 %v600, 0.0
        %v678 = vmax.f32 %v602, 0.0
        %v679 = vmax.f32 %v604, 0.0
        %v680 = vmax.f32 %v608, 0.0
        %v681 = vmax.f32 %v610, 0.0
        %v682 = vmax.f32 %v612, 0.0
        %v683 = vmax.f32 %v614, 0.0
        %v684 = vmax.f32 %v618, 0.0
        %v685 = vmax.f32 %v620, 0.0
        %v686 = vmax.f32 %v622, 0.0
        %v687 = vmax.f32 %v624, 0.0
        %v688 = vmax.f32 %v628, 0.0
        %v689 = vmax.f32 %v630, 0.0
        %v690 = vmax.f32 %v632, 0.0
        %v691 = vmax.f32 %v634, 0.0
        %v692 = vmax.f32 %v638, 0.0
        %v693 = vmax.f32 %v640, 0.0
        %v694 = vmax.f32 %v642, 0.0
        %v695 = vmax.f32 %v644, 0.0
        %v696 = vmax.f32 %v648, 0.0
        %v697 = vmax.f32 %v650, 0.0
        %v698 = vmax.f32 %v652, 0.0
        %v699 = vmax.f32 %v654, 0.0
        %v700 = vmax.f32 %v658, 0.0
        %v701 = vmax.f32 %v660, 0.0
        %v702 = vmax.f32 %v662, 0.0
        %v703 = vmax.f32 %v664, 0.0
        %v704 = vmax.f32 %v668, 0.0
        %v705 = vmax.f32 %v670, 0.0
        %v706 = vmax.f32 %v672, 0.0
        %v707 = vmax.f32 %v674, 0.0
        %v708 = vpack.c.bf16 %v678, %v676
        %v709 = vpack.c.bf16 %v679, %v677
        %v710 = vpack.c.bf16 %v682, %v680
        %v711 = vpack.c.bf16 %v683, %v681
        %v712 = vpack.c.bf16 %v686, %v684
        %v713 = vpack.c.bf16 %v687, %v685
        %v714 = vpack.c.bf16 %v690, %v688
        %v715 = vpack.c.bf16 %v691, %v689
        %v716 = vpack.c.bf16 %v694, %v692
        %v717 = vpack.c.bf16 %v695, %v693
        %v718 = vpack.c.bf16 %v698, %v696
        %v719 = vpack.c.bf16 %v699, %v697
        %v720 = vpack.c.bf16 %v702, %v700
        %v721 = vpack.c.bf16 %v703, %v701
        %v722 = vpack.c.bf16 %v706, %v704
        %v723 = vpack.c.bf16 %v707, %v705
        %v740 = vunpack.c.l.b16 %v708
        %v741 = vunpack.c.l.b16 %v709
        %v742 = vunpack.c.h.b16 %v708
        %v743 = vunpack.c.h.b16 %v709
        %v744 = vunpack.c.l.b16 %v710
        %v745 = vunpack.c.l.b16 %v711
        %v746 = vunpack.c.h.b16 %v710
        %v747 = vunpack.c.h.b16 %v711
        %v748 = vunpack.c.l.b16 %v712
        %v749 = vunpack.c.l.b16 %v713
        %v750 = vunpack.c.h.b16 %v712
        %v751 = vunpack.c.h.b16 %v713
        %v752 = vunpack.c.l.b16 %v714
        %v753 = vunpack.c.l.b16 %v715
        %v754 = vunpack.c.h.b16 %v714
        %v755 = vunpack.c.h.b16 %v715
        %v756 = vunpack.c.l.b16 %v716
        %v757 = vunpack.c.l.b16 %v717
        %v758 = vunpack.c.h.b16 %v716
        %v759 = vunpack.c.h.b16 %v717
        %v760 = vunpack.c.l.b16 %v718
        %v761 = vunpack.c.l.b16 %v719
        %v762 = vunpack.c.h.b16 %v718
        %v763 = vunpack.c.h.b16 %v719
        %v764 = vunpack.c.l.b16 %v720
        %v765 = vunpack.c.l.b16 %v721
        %v766 = vunpack.c.h.b16 %v720
        %v767 = vunpack.c.h.b16 %v721
        %v768 = vunpack.c.l.b16 %v722
        %v769 = vunpack.c.l.b16 %v723
        %v770 = vunpack.c.h.b16 %v722
        %v771 = vunpack.c.h.b16 %v723
        %v772 = vpack.c.b16 %v741, %v740
        %v773 = vpack.c.b16 %v743, %v742
        %v774 = vpack.c.b16 %v745, %v744
        %v775 = vpack.c.b16 %v747, %v746
        %v776 = vpack.c.b16 %v749, %v748
        %v777 = vpack.c.b16 %v751, %v750
        %v778 = vpack.c.b16 %v753, %v752
        %v779 = vpack.c.b16 %v755, %v754
        %v780 = vpack.c.b16 %v757, %v756
        %v781 = vpack.c.b16 %v759, %v758
        %v782 = vpack.c.b16 %v761, %v760
        %v783 = vpack.c.b16 %v763, %v762
        %v784 = vpack.c.b16 %v765, %v764
        %v785 = vpack.c.b16 %v767, %v766
        %v786 = vpack.c.b16 %v769, %v768
        %v787 = vpack.c.b16 %v771, %v770
        %804 = vst [vmem:[%s313] sm:$0xff] %v772
        %805 = vst [vmem:[%s313 + $0x8] sm:$0xff] %v773
        %806 = vst [vmem:[%s313 + $0x10] sm:$0xff] %v774
        %807 = vst [vmem:[%s313 + $0x18] sm:$0xff] %v775
        %808 = vst [vmem:[%s313 + $0x20] sm:$0xff] %v776
        %809 = vst [vmem:[%s313 + $0x28] sm:$0xff] %v777
        %810 = vst [vmem:[%s313 + $0x30] sm:$0xff] %v778
        %811 = vst [vmem:[%s313 + $0x38] sm:$0xff] %v779
        %812 = vst [vmem:[%s313 + $0x40] sm:$0xff] %v780
        %813 = vst [vmem:[%s313 + $0x48] sm:$0xff] %v781
        %814 = vst [vmem:[%s313 + $0x50] sm:$0xff] %v782
        %815 = vst [vmem:[%s313 + $0x58] sm:$0xff] %v783
        %816 = vst [vmem:[%s313 + $0x60] sm:$0xff] %v784
        %817 = vst [vmem:[%s313 + $0x68] sm:$0xff] %v785
        %818 = vst [vmem:[%s313 + $0x70] sm:$0xff] %v786
        %819 = vst [vmem:[%s313 + $0x78] sm:$0xff] %v787
        %s820 = sand.u32 %s114, 1
        %s821 = sand.u32 %s114, 1
        %s822 = smul.addr %s821, 128
        %s823 = scalar_lea.vmem [#allocation3], %s822
        // Predicated region
        $region71: #{decoder_forward.8} parent=65 // pred_check
          %p824 = pneg %p124
        $region72: #{decoder_forward.8} parent=65 // pred_check_branch
          %826 = sbr.rel (%p824) target = $region74
        $region73: #{decoder_forward.8} parent=65 // pred_region
          %s827 = smul.u32 16, %s18
          %s828 = smul.u32 2, %s19
          %s829 = smul.addr %s827, 4
          %s830 = sadd.s32 %s828, %s829
          %s831 = smul.addr %s830, 4
          %s832 = scalar_lea.vmem %s3, %s831
          // Predicated region
          $region75: #{decoder_forward.8} parent=73 // pred_check
            _
          $region76: #{decoder_forward.8} parent=73 // pred_check_branch
            %834 = sbr.rel (0) target = $region78
          $region77: #{decoder_forward.8} parent=73 // pred_region
            // Predicated region
            $region79: #{decoder_forward.8} parent=77 // pred_check
              _
            $region80: #{decoder_forward.8} parent=77 // pred_check_branch
              %836 = sbr.rel (0) target = $region82
            $region81: #{decoder_forward.8} parent=77 // pred_region
              // Predicated region
              $region94: #{decoder_forward.8} parent=81 // pred_check
                _
              $region95: #{decoder_forward.8} parent=81 // pred_check_branch
                %881 = sbr.rel (0) target = $region97
              $region96: #{decoder_forward.8} parent=81 // pred_region
                loop: start=0, step=1, limit=1
                $region98: #{decoder_forward.8} parent=96 // loop_pre_header
                  _
                $region99: #{decoder_forward.8} parent=96 // loop_header
                  %s883 = sphi 0, %s887
                  %p884 = scmp.ge.s32.totalorder %s883, 1
                  %s888 = sphi %s823, %s823
                  %s889 = sphi %s832, %s832
                $region100: #{decoder_forward.8} parent=96 // loop_header_branch
                  %886 = sbr.rel (%p884) target = $region104
                $region101: #{decoder_forward.8} parent=96 // loop_body
                  %v890 = vld [vmem:[%s888] sm:$0xff]
                  %891 = vst [vmem:[%s889] sm:$0xff] %v890
                  %v892 = vld [vmem:[%s888 + $0x8] sm:$0xff]
                  %893 = vst [vmem:[%s889 + $0x10] sm:$0xff] %v892
                  %v894 = vld [vmem:[%s888 + $0x10] sm:$0xff]
                  %895 = vst [vmem:[%s889 + $0x20] sm:$0xff] %v894
                  %v896 = vld [vmem:[%s888 + $0x18] sm:$0xff]
                  %897 = vst [vmem:[%s889 + $0x30] sm:$0xff] %v896
                  %v898 = vld [vmem:[%s888 + $0x20] sm:$0xff]
                  %899 = vst [vmem:[%s889 + $0x40] sm:$0xff] %v898
                  %v900 = vld [vmem:[%s888 + $0x28] sm:$0xff]
                  %901 = vst [vmem:[%s889 + $0x50] sm:$0xff] %v900
                  %v902 = vld [vmem:[%s888 + $0x30] sm:$0xff]
                  %903 = vst [vmem:[%s889 + $0x60] sm:$0xff] %v902
                  %v904 = vld [vmem:[%s888 + $0x38] sm:$0xff]
                  %905 = vst [vmem:[%s889 + $0x70] sm:$0xff] %v904
                  %v906 = vld [vmem:[%s888 + $0x40] sm:$0xff]
                  %907 = vst [vmem:[%s889 + $0x80] sm:$0xff] %v906
                  %v908 = vld [vmem:[%s888 + $0x48] sm:$0xff]
                  %909 = vst [vmem:[%s889 + $0x90] sm:$0xff] %v908
                  %v910 = vld [vmem:[%s888 + $0x50] sm:$0xff]
                  %911 = vst [vmem:[%s889 + $0xa0] sm:$0xff] %v910
                  %v912 = vld [vmem:[%s888 + $0x58] sm:$0xff]
                  %913 = vst [vmem:[%s889 + $0xb0] sm:$0xff] %v912
                  %v914 = vld [vmem:[%s888 + $0x60] sm:$0xff]
                  %915 = vst [vmem:[%s889 + $0xc0] sm:$0xff] %v914
                  %v916 = vld [vmem:[%s888 + $0x68] sm:$0xff]
                  %917 = vst [vmem:[%s889 + $0xd0] sm:$0xff] %v916
                  %v918 = vld [vmem:[%s888 + $0x70] sm:$0xff]
                  %919 = vst [vmem:[%s889 + $0xe0] sm:$0xff] %v918
                  %v920 = vld [vmem:[%s888 + $0x78] sm:$0xff]
                  %921 = vst [vmem:[%s889 + $0xf0] sm:$0xff] %v920
                $region102: #{decoder_forward.8} parent=96 // loop_footer
                  %s887 = sadd.s32 1, %s883
                $region103: #{decoder_forward.8} parent=96 // loop_footer_branch
                  %882 = sbr.rel target = $region99
                $region104: #{decoder_forward.8} parent=96 // loop_exit
                  _
              $region97: #{decoder_forward.8} parent=81 // pred_fallthru
                _
              // Predicated region
              $region105: #{decoder_forward.8} parent=81 // pred_check
                _
              $region106: #{decoder_forward.8} parent=81 // pred_check_branch
                %923 = sbr.rel target = $region108
              $region107: #{decoder_forward.8} parent=81 // pred_region
                _
              $region108: #{decoder_forward.8} parent=81 // pred_fallthru
                _
            $region82: #{decoder_forward.8} parent=77 // pred_fallthru
              _
            // Predicated region
            $region83: #{decoder_forward.8} parent=77 // pred_check
              _
            $region84: #{decoder_forward.8} parent=77 // pred_check_branch
              %838 = sbr.rel target = $region86
            $region85: #{decoder_forward.8} parent=77 // pred_region
              loop: start=0, step=1, limit=1
              $region87: #{decoder_forward.8} parent=85 // loop_pre_header
                _
              $region88: #{decoder_forward.8} parent=85 // loop_header
                %s841 = sphi 0, %s845
                %p842 = scmp.ge.s32.totalorder %s841, 1
                %s846 = sphi %s823, %s823
                %s847 = sphi %s832, %s832
              $region89: #{decoder_forward.8} parent=85 // loop_header_branch
                %844 = sbr.rel (%p842) target = $region93
              $region90: #{decoder_forward.8} parent=85 // loop_body
                %v848 = vld [vmem:[%s846] sm:$0xff]
                %849 = vst [vmem:[%s847] sm:$0xff] %v848
                %v850 = vld [vmem:[%s846 + $0x8] sm:$0xff]
                %851 = vst [vmem:[%s847 + $0x10] sm:$0xff] %v850
                %v852 = vld [vmem:[%s846 + $0x10] sm:$0xff]
                %853 = vst [vmem:[%s847 + $0x20] sm:$0xff] %v852
                %v854 = vld [vmem:[%s846 + $0x18] sm:$0xff]
                %855 = vst [vmem:[%s847 + $0x30] sm:$0xff] %v854
                %v856 = vld [vmem:[%s846 + $0x20] sm:$0xff]
                %857 = vst [vmem:[%s847 + $0x40] sm:$0xff] %v856
                %v858 = vld [vmem:[%s846 + $0x28] sm:$0xff]
                %859 = vst [vmem:[%s847 + $0x50] sm:$0xff] %v858
                %v860 = vld [vmem:[%s846 + $0x30] sm:$0xff]
                %861 = vst [vmem:[%s847 + $0x60] sm:$0xff] %v860
                %v862 = vld [vmem:[%s846 + $0x38] sm:$0xff]
                %863 = vst [vmem:[%s847 + $0x70] sm:$0xff] %v862
                %v864 = vld [vmem:[%s846 + $0x40] sm:$0xff]
                %865 = vst [vmem:[%s847 + $0x80] sm:$0xff] %v864
                %v866 = vld [vmem:[%s846 + $0x48] sm:$0xff]
                %867 = vst [vmem:[%s847 + $0x90] sm:$0xff] %v866
                %v868 = vld [vmem:[%s846 + $0x50] sm:$0xff]
                %869 = vst [vmem:[%s847 + $0xa0] sm:$0xff] %v868
                %v870 = vld [vmem:[%s846 + $0x58] sm:$0xff]
                %871 = vst [vmem:[%s847 + $0xb0] sm:$0xff] %v870
                %v872 = vld [vmem:[%s846 + $0x60] sm:$0xff]
                %873 = vst [vmem:[%s847 + $0xc0] sm:$0xff] %v872
                %v874 = vld [vmem:[%s846 + $0x68] sm:$0xff]
                %875 = vst [vmem:[%s847 + $0xd0] sm:$0xff] %v874
                %v876 = vld [vmem:[%s846 + $0x70] sm:$0xff]
                %877 = vst [vmem:[%s847 + $0xe0] sm:$0xff] %v876
                %v878 = vld [vmem:[%s846 + $0x78] sm:$0xff]
                %879 = vst [vmem:[%s847 + $0xf0] sm:$0xff] %v878
              $region91: #{decoder_forward.8} parent=85 // loop_footer
                %s845 = sadd.s32 1, %s841
              $region92: #{decoder_forward.8} parent=85 // loop_footer_branch
                %840 = sbr.rel target = $region88
              $region93: #{decoder_forward.8} parent=85 // loop_exit
                _
            $region86: #{decoder_forward.8} parent=77 // pred_fallthru
              _
          $region78: #{decoder_forward.8} parent=73 // pred_fallthru
            _
          %924 = vnop
        $region74: #{decoder_forward.8} parent=65 // pred_fallthru
          _
      $region66: #{decoder_forward.8} parent=5 // pred_fallthru
        _
      %p925 = scmp.le.s32.totalorder 2, %s9
      // Predicated region
      $region109: #{decoder_forward.8} parent=5 // pred_check
        %p926 = pneg %p925
      $region110: #{decoder_forward.8} parent=5 // pred_check_branch
        %928 = sbr.rel (%p926) target = $region112
      $region111: #{decoder_forward.8} parent=5 // pred_region
        %s929 = ssub.s32 %s9, 2
        // Predicated region
        $region113: #{decoder_forward.8} parent=111 // pred_check
          %p930 = pneg %p130
        $region114: #{decoder_forward.8} parent=111 // pred_check_branch
          %932 = sbr.rel (%p930) target = $region116
        $region115: #{decoder_forward.8} parent=111 // pred_region
          %s933 = sand.u32 %s115, 1
          %s934 = sand.u32 %s115, 1
          %s935 = smul.addr %s934, 128
          %s936 = scalar_lea.vmem [#allocation3], %s935
        $region116: #{decoder_forward.8} parent=111 // pred_fallthru
          _
      $region112: #{decoder_forward.8} parent=5 // pred_fallthru
        _
    $region6: #{decoder_forward.8} parent=1 // loop_footer
      %s13 = sadd.s32 1, %s9
    $region7: #{decoder_forward.8} parent=1 // loop_footer_branch
      %8 = sbr.rel target = $region3
    $region8: #{decoder_forward.8} parent=1 // loop_exit
      _

// kernel: decoder_forward.9
$region0: #{decoder_forward.9}
  #allocation0 [shape = 'u32[]', space=smem, size = 0x4, offset = 0x4, fixed_abs, tag = 'smem constant byte address 0x4 - core index']
  #allocation1 [shape = 'u32[144,128]{1,0:T(1,128)}', space=vmem, size = 0x12000, scoped, tag = 'internal scratch']
  %s0 = inlined_call_operand.vmem [shape: bf16[1536,72], index: 0, kind: input, shape index: {}]
  %s1 = inlined_call_operand.vmem [shape: bf16[72,512], index: 1, kind: input, shape index: {}]
  %s2 = inlined_call_operand.vmem [shape: f32[1,512], index: 2, kind: input, shape index: {}]
  %s3 = inlined_call_operand.vmem [shape: f32[1536,512], index: 3, kind: output, shape index: {}]
  %s4 = sld [smem:[#allocation0]]
  $region102: #{decoder_forward.9} parent=0
    _
  %s6 = ssub.s32 1, %s4
  %s7 = scalar_select 0, %s6, %s4
  $region1: #{decoder_forward.9} parent=0
    #allocation2 [shape = 'u8[73728]{0}', space=vmem, size = 0x12000, scoped, tag = 'input window, operand 1']
    #allocation3 [shape = 'u8[262144]{0}', space=vmem, size = 0x40000, scoped, tag = 'output window, operand 0']
    loop: start=0, step=1, limit=26
    $region2: #{decoder_forward.9} parent=1 // loop_pre_header
      _
    $region3: #{decoder_forward.9} parent=1 // loop_header
      %s9 = sphi 0, %s13
      %p10 = scmp.ge.s32.totalorder %s9, 26
      %s16 = sphi 0, %s28
      %s17 = sphi 0, %s24
      %s18 = sphi 0, %s16
      %s19 = sphi 0, %s17
      %s20 = sphi 0, %s18
      %s21 = sphi 0, %s19
      %s31 = sphi 0, %s33
      %s34 = sphi 0, %s31
      %s35 = sphi 0, %s34
      %s51 = sphi 0, %s35
      %s57 = sphi 0, %s59
      %s60 = sphi 0, %s57
      %s61 = sphi 0, %s60
      %s77 = sphi 0, %s61
      %s83 = sphi 0, %s85
      %s86 = sphi 0, %s83
      %s87 = sphi 0, %s86
      %s103 = sphi 0, %s87
      %s111 = sphi 0, %s113
      %s114 = sphi 0, %s111
      %s115 = sphi 0, %s114
      %s131 = sphi 0, %s115
    $region4: #{decoder_forward.9} parent=1 // loop_header_branch
      %12 = sbr.rel (%p10) target = $region8
    $region5: #{decoder_forward.9} parent=1 // loop_body
      %s14 = ssub.s32 %s9, 1
      %s15 = ssub.s32 %s9, 2
      %s22 = sadd.s32 1, %s17
      %p23 = scmp.ge.s32.totalorder %s22, 2
      %s24 = scalar_select %p23, 0, %s22
      %s25 = sadd.s32 1, %s16
      %s26 = scalar_select %p23, %s25, %s16
      %p27 = scmp.ge.s32.totalorder %s26, 12
      %s28 = scalar_select %p27, 0, %s26
      %s29 = ssub.s32 %s16, %s28
      %p30 = scmp.eq.s32.totalorder %s29, 0
      %s32 = sadd.s32 %s31, 1
      %s33 = scalar_select %p30, %s31, %s32
      %p36 = pneg %p30
      %p37 = scmp.eq.s32.totalorder %s9, 23
      %p38 = por %p36, %p37
      %p39 = scmp.ne.s32.totalorder %s31, %s34
      %p40 = scmp.eq.s32.totalorder %s9, 0
      %p41 = por %p39, %p40
      %p42 = scmp.ne.s32.totalorder %s31, %s34
      %p43 = scmp.eq.s32.totalorder %s14, 23
      %p44 = por %p42, %p43
      %p45 = scmp.ne.s32.totalorder %s34, %s35
      %p46 = scmp.eq.s32.totalorder %s14, 0
      %p47 = por %p45, %p46
      %p48 = scmp.ne.s32.totalorder %s34, %s35
      %p49 = scmp.eq.s32.totalorder %s15, 23
      %p50 = por %p48, %p49
      %p52 = scmp.ne.s32.totalorder %s35, %s51
      %p53 = scmp.eq.s32.totalorder %s15, 0
      %p54 = por %p52, %p53
      %s55 = ssub.s32 %s17, %s24
      %p56 = scmp.eq.s32.totalorder %s55, 0
      %s58 = sadd.s32 %s57, 1
      %s59 = scalar_select %p56, %s57, %s58
      %p62 = pneg %p56
      %p63 = scmp.eq.s32.totalorder %s9, 23
      %p64 = por %p62, %p63
      %p65 = scmp.ne.s32.totalorder %s57, %s60
      %p66 = scmp.eq.s32.totalorder %s9, 0
      %p67 = por %p65, %p66
      %p68 = scmp.ne.s32.totalorder %s57, %s60
      %p69 = scmp.eq.s32.totalorder %s14, 23
      %p70 = por %p68, %p69
      %p71 = scmp.ne.s32.totalorder %s60, %s61
      %p72 = scmp.eq.s32.totalorder %s14, 0
      %p73 = por %p71, %p72
      %p74 = scmp.ne.s32.totalorder %s60, %s61
      %p75 = scmp.eq.s32.totalorder %s15, 23
      %p76 = por %p74, %p75
      %p78 = scmp.ne.s32.totalorder %s61, %s77
      %p79 = scmp.eq.s32.totalorder %s15, 0
      %p80 = por %p78, %p79
      %s81 = ssub.s32 %s17, %s24
      %p82 = scmp.eq.s32.totalorder %s81, 0
      %s84 = sadd.s32 %s83, 1
      %s85 = scalar_select %p82, %s83, %s84
      %p88 = pneg %p82
      %p89 = scmp.eq.s32.totalorder %s9, 23
      %p90 = por %p88, %p89
      %p91 = scmp.ne.s32.totalorder %s83, %s86
      %p92 = scmp.eq.s32.totalorder %s9, 0
      %p93 = por %p91, %p92
      %p94 = scmp.ne.s32.totalorder %s83, %s86
      %p95 = scmp.eq.s32.totalorder %s14, 23
      %p96 = por %p94, %p95
      %p97 = scmp.ne.s32.totalorder %s86, %s87
      %p98 = scmp.eq.s32.totalorder %s14, 0
      %p99 = por %p97, %p98
      %p100 = scmp.ne.s32.totalorder %s86, %s87
      %p101 = scmp.eq.s32.totalorder %s15, 23
      %p102 = por %p100, %p101
      %p104 = scmp.ne.s32.totalorder %s87, %s103
      %p105 = scmp.eq.s32.totalorder %s15, 0
      %p106 = por %p104, %p105
      %s107 = ssub.s32 %s16, %s28
      %s108 = ssub.s32 %s17, %s24
      %s109 = sor.u32 %s107, %s108
      %p110 = scmp.eq.s32.totalorder %s109, 0
      %s112 = sadd.s32 %s111, 1
      %s113 = scalar_select %p110, %s111, %s112
      %p116 = pneg %p110
      %p117 = scmp.eq.s32.totalorder %s9, 23
      %p118 = por %p116, %p117
      %p119 = scmp.ne.s32.totalorder %s111, %s114
      %p120 = scmp.eq.s32.totalorder %s9, 0
      %p121 = por %p119, %p120
      %p122 = scmp.ne.s32.totalorder %s111, %s114
      %p123 = scmp.eq.s32.totalorder %s14, 23
      %p124 = por %p122, %p123
      %p125 = scmp.ne.s32.totalorder %s114, %s115
      %p126 = scmp.eq.s32.totalorder %s14, 0
      %p127 = por %p125, %p126
      %p128 = scmp.ne.s32.totalorder %s114, %s115
      %p129 = scmp.eq.s32.totalorder %s15, 23
      %p130 = por %p128, %p129
      %p132 = scmp.ne.s32.totalorder %s115, %s131
      %p133 = scmp.eq.s32.totalorder %s15, 0
      %p134 = por %p132, %p133
      %p135 = scmp.le.s32.totalorder 1, %s9
      %p136 = scmp.lt.s32.totalorder %s9, 25
      %p137 = pnand %p135, %p136
      %p138 = pneg %p137
      // Predicated region
      $region9: #{decoder_forward.9} parent=5 // pred_check
        _
      $region10: #{decoder_forward.9} parent=5 // pred_check_branch
        %140 = sbr.rel (%p137) target = $region12
      $region11: #{decoder_forward.9} parent=5 // pred_region
        %s141 = ssub.s32 %s9, 1
      $region12: #{decoder_forward.9} parent=5 // pred_fallthru
        _
      %p142 = scmp.lt.s32.totalorder %s9, 24
      // Predicated region
      $region13: #{decoder_forward.9} parent=5 // pred_check
        %p143 = pneg %p142
      $region14: #{decoder_forward.9} parent=5 // pred_check_branch
        %145 = sbr.rel (%p143) target = $region16
      $region15: #{decoder_forward.9} parent=5 // pred_region
        // Predicated region
        $region17: #{decoder_forward.9} parent=15 // pred_check
          %p146 = pneg %p41
        $region18: #{decoder_forward.9} parent=15 // pred_check_branch
          %148 = sbr.rel (%p146) target = $region20
        $region19: #{decoder_forward.9} parent=15 // pred_region
          %s149 = smul.u32 16, %s16
          %p150 = scmp.lt.s32.totalorder %s149, 191
          %s151 = scalar_select %p150, %s149, 191
          %s152 = smul.addr %s151, 4
          %s153 = scalar_lea.vmem %s0, %s152
          %s154 = smul.u32 16, %s16
        $region20: #{decoder_forward.9} parent=15 // pred_fallthru
          _
        // Predicated region
        $region21: #{decoder_forward.9} parent=15 // pred_check
          %p155 = pneg %p67
        $region22: #{decoder_forward.9} parent=15 // pred_check_branch
          %157 = sbr.rel (%p155) target = $region24
        $region23: #{decoder_forward.9} parent=15 // pred_region
          %s158 = sand.u32 %s57, 1
          %s159 = sand.u32 %s57, 1
          %s160 = smul.addr %s159, 72
          %s161 = scalar_lea.vmem [#allocation2], %s160
          %s162 = smul.u32 2, %s17
          %s163 = smul.addr %s162, 4
          %s164 = scalar_lea.vmem %s1, %s163
          // Predicated region
          $region25: #{decoder_forward.9} parent=23 // pred_check
            _
          $region26: #{decoder_forward.9} parent=23 // pred_check_branch
            %166 = sbr.rel (0) target = $region28
          $region27: #{decoder_forward.9} parent=23 // pred_region
            // Predicated region
            $region29: #{decoder_forward.9} parent=27 // pred_check
              _
            $region30: #{decoder_forward.9} parent=27 // pred_check_branch
              %168 = sbr.rel (0) target = $region32
            $region31: #{decoder_forward.9} parent=27 // pred_region
              // Predicated region
              $region44: #{decoder_forward.9} parent=31 // pred_check
                _
              $region45: #{decoder_forward.9} parent=31 // pred_check_branch
                %199 = sbr.rel (0) target = $region47
              $region46: #{decoder_forward.9} parent=31 // pred_region
                loop: start=0, step=1, limit=1
                $region48: #{decoder_forward.9} parent=46 // loop_pre_header
                  _
                $region49: #{decoder_forward.9} parent=46 // loop_header
                  %s201 = sphi 0, %s205
                  %p202 = scmp.ge.s32.totalorder %s201, 1
                  %s206 = sphi %s164, %s164
                  %s207 = sphi %s161, %s161
                $region50: #{decoder_forward.9} parent=46 // loop_header_branch
                  %204 = sbr.rel (%p202) target = $region54
                $region51: #{decoder_forward.9} parent=46 // loop_body
                  %v208 = vld [vmem:[%s206] sm:$0xff]
                  %209 = vst [vmem:[%s207] sm:$0xff] %v208
                  %v210 = vld [vmem:[%s206 + $0x10] sm:$0xff]
                  %211 = vst [vmem:[%s207 + $0x8] sm:$0xff] %v210
                  %v212 = vld [vmem:[%s206 + $0x20] sm:$0xff]
                  %213 = vst [vmem:[%s207 + $0x10] sm:$0xff] %v212
                  %v214 = vld [vmem:[%s206 + $0x30] sm:$0xff]
                  %215 = vst [vmem:[%s207 + $0x18] sm:$0xff] %v214
                  %v216 = vld [vmem:[%s206 + $0x40] sm:$0xff]
                  %217 = vst [vmem:[%s207 + $0x20] sm:$0xff] %v216
                  %v218 = vld [vmem:[%s206 + $0x50] sm:$0xff]
                  %219 = vst [vmem:[%s207 + $0x28] sm:$0xff] %v218
                  %v220 = vld [vmem:[%s206 + $0x60] sm:$0xff]
                  %221 = vst [vmem:[%s207 + $0x30] sm:$0xff] %v220
                  %v222 = vld [vmem:[%s206 + $0x70] sm:$0xff]
                  %223 = vst [vmem:[%s207 + $0x38] sm:$0xff] %v222
                  %v224 = vld [vmem:[%s206 + $0x80] sm:$0xff]
                  %225 = vst [vmem:[%s207 + $0x40] sm:$0xff] %v224
                $region52: #{decoder_forward.9} parent=46 // loop_footer
                  %s205 = sadd.s32 1, %s201
                $region53: #{decoder_forward.9} parent=46 // loop_footer_branch
                  %200 = sbr.rel target = $region49
                $region54: #{decoder_forward.9} parent=46 // loop_exit
                  _
              $region47: #{decoder_forward.9} parent=31 // pred_fallthru
                _
              // Predicated region
              $region55: #{decoder_forward.9} parent=31 // pred_check
                _
              $region56: #{decoder_forward.9} parent=31 // pred_check_branch
                %227 = sbr.rel target = $region58
              $region57: #{decoder_forward.9} parent=31 // pred_region
                _
              $region58: #{decoder_forward.9} parent=31 // pred_fallthru
                _
            $region32: #{decoder_forward.9} parent=27 // pred_fallthru
              _
            // Predicated region
            $region33: #{decoder_forward.9} parent=27 // pred_check
              _
            $region34: #{decoder_forward.9} parent=27 // pred_check_branch
              %170 = sbr.rel target = $region36
            $region35: #{decoder_forward.9} parent=27 // pred_region
              loop: start=0, step=1, limit=1
              $region37: #{decoder_forward.9} parent=35 // loop_pre_header
                _
              $region38: #{decoder_forward.9} parent=35 // loop_header
                %s173 = sphi 0, %s177
                %p174 = scmp.ge.s32.totalorder %s173, 1
                %s178 = sphi %s164, %s164
                %s179 = sphi %s161, %s161
              $region39: #{decoder_forward.9} parent=35 // loop_header_branch
                %176 = sbr.rel (%p174) target = $region43
              $region40: #{decoder_forward.9} parent=35 // loop_body
                %v180 = vld [vmem:[%s178] sm:$0xff]
                %181 = vst [vmem:[%s179] sm:$0xff] %v180
                %v182 = vld [vmem:[%s178 + $0x10] sm:$0xff]
                %183 = vst [vmem:[%s179 + $0x8] sm:$0xff] %v182
                %v184 = vld [vmem:[%s178 + $0x20] sm:$0xff]
                %185 = vst [vmem:[%s179 + $0x10] sm:$0xff] %v184
                %v186 = vld [vmem:[%s178 + $0x30] sm:$0xff]
                %187 = vst [vmem:[%s179 + $0x18] sm:$0xff] %v186
                %v188 = vld [vmem:[%s178 + $0x40] sm:$0xff]
                %189 = vst [vmem:[%s179 + $0x20] sm:$0xff] %v188
                %v190 = vld [vmem:[%s178 + $0x50] sm:$0xff]
                %191 = vst [vmem:[%s179 + $0x28] sm:$0xff] %v190
                %v192 = vld [vmem:[%s178 + $0x60] sm:$0xff]
                %193 = vst [vmem:[%s179 + $0x30] sm:$0xff] %v192
                %v194 = vld [vmem:[%s178 + $0x70] sm:$0xff]
                %195 = vst [vmem:[%s179 + $0x38] sm:$0xff] %v194
                %v196 = vld [vmem:[%s178 + $0x80] sm:$0xff]
                %197 = vst [vmem:[%s179 + $0x40] sm:$0xff] %v196
              $region41: #{decoder_forward.9} parent=35 // loop_footer
                %s177 = sadd.s32 1, %s173
              $region42: #{decoder_forward.9} parent=35 // loop_footer_branch
                %172 = sbr.rel target = $region38
              $region43: #{decoder_forward.9} parent=35 // loop_exit
                _
            $region36: #{decoder_forward.9} parent=27 // pred_fallthru
              _
          $region28: #{decoder_forward.9} parent=23 // pred_fallthru
            _
          %228 = vnop
        $region24: #{decoder_forward.9} parent=15 // pred_fallthru
          _
        // Predicated region
        $region59: #{decoder_forward.9} parent=15 // pred_check
          %p229 = pneg %p93
        $region60: #{decoder_forward.9} parent=15 // pred_check_branch
          %231 = sbr.rel (%p229) target = $region62
        $region61: #{decoder_forward.9} parent=15 // pred_region
          %s232 = smul.u32 2, %s17
          %p233 = scmp.lt.s32.totalorder %s232, 3
          %s234 = scalar_select %p233, %s232, 3
          %s235 = scalar_lea.vmem %s2, %s234
          %s236 = smul.u32 2, %s17
        $region62: #{decoder_forward.9} parent=15 // pred_fallthru
          _
      $region16: #{decoder_forward.9} parent=5 // pred_fallthru
        _
      %p237 = scmp.le.s32.totalorder 1, %s9
      %p238 = scmp.lt.s32.totalorder %s9, 25
      %p239 = pnand %p237, %p238
      %p240 = pneg %p239
      // Predicated region
      $region63: #{decoder_forward.9} parent=5 // pred_check
        _
      $region64: #{decoder_forward.9} parent=5 // pred_check_branch
        %242 = sbr.rel (%p239) target = $region66
      $region65: #{decoder_forward.9} parent=5 // pred_region
        %s243 = ssub.s32 %s9, 1
        %s244 = sand.u32 %s60, 1
        %s245 = sand.u32 %s60, 1
        %s246 = smul.addr %s245, 72
        %s247 = scalar_lea.vmem [#allocation2], %s246
        // Predicated region
        $region67: #{decoder_forward.9} parent=65 // pred_check
          %p248 = pneg %p73
        $region68: #{decoder_forward.9} parent=65 // pred_check_branch
          %250 = sbr.rel (%p248) target = $region70
        $region69: #{decoder_forward.9} parent=65 // pred_region
          _
        $region70: #{decoder_forward.9} parent=65 // pred_fallthru
          _
        %s251 = smul.u32 16, %s18
        %p252 = scmp.lt.s32.totalorder %s251, 191
        %s253 = scalar_select %p252, %s251, 191
        %s254 = smul.addr %s253, 4
        %s255 = scalar_lea.vmem %s0, %s254
        %p256 = pneg %p47
        %p257 = pneg %p44
        %s258 = sand.u32 %s60, 1
        %s259 = sand.u32 %s60, 1
        %s260 = smul.addr %s259, 72
        %s261 = scalar_lea.vmem [#allocation2], %s260
        %p262 = pneg %p73
        %p263 = pneg %p70
        %s264 = smul.u32 2, %s19
        %p265 = scmp.lt.s32.totalorder %s264, 3
        %s266 = scalar_select %p265, %s264, 3
        %s267 = scalar_lea.vmem %s2, %s266
        %p268 = pneg %p99
        %p269 = pneg %p96
        %p270 = pneg %p127
        %p271 = pneg %p124
        %s272 = sand.u32 %s114, 1
        %s273 = sand.u32 %s114, 1
        %s274 = smul.addr %s273, 256
        %s275 = scalar_lea.vmem [#allocation3], %s274
        %s276 = smul.u32 16, %s18
        %p277 = scmp.lt.s32.totalorder %s276, 191
        %s278 = scalar_select %p277, %s276, 191
        %s279 = smul.addr %s278, 4
        %s280 = scalar_lea.vmem %s0, %s279
        %s281 = smul.u32 16, %s18
        %s282 = smul.u32 2, %s19
        %s283 = smul.u32 2, %s19
        %p284 = scmp.lt.s32.totalorder %s283, 3
        %s285 = scalar_select %p284, %s283, 3
        %s286 = scalar_lea.vmem %s2, %s285
        %s287 = smul.u32 2, %s19
        %s288 = smul.u32 16, %s18
        %s289 = smul.u32 2, %s19
        %v291 = vld [vmem:[%s280] sm:$0xf]
        %v292 = vld [vmem:[%s280 + $0x4] sm:$0xf]
        %v293 = vld [vmem:[%s280 + $0x8] sm:$0xf]
        %v294 = vld [vmem:[%s280 + $0xc] sm:$0xf]
        %v295 = vld [vmem:[%s280 + $0x10] sm:$0xf]
        %v296 = vld [vmem:[%s280 + $0x14] sm:$0xf]
        %v297 = vld [vmem:[%s280 + $0x18] sm:$0xf]
        %v298 = vld [vmem:[%s280 + $0x1c] sm:$0xf]
        %v299 = vld [vmem:[%s280 + $0x20] sm:$0xf]
        %v300 = vld [vmem:[%s280 + $0x24] sm:$0xf]
        %v301 = vld [vmem:[%s280 + $0x28] sm:$0xf]
        %v302 = vld [vmem:[%s280 + $0x2c] sm:$0xf]
        %v303 = vld [vmem:[%s280 + $0x30] sm:$0xf]
        %v304 = vld [vmem:[%s280 + $0x34] sm:$0xf]
        %v305 = vld [vmem:[%s280 + $0x38] sm:$0xf]
        %v306 = vld [vmem:[%s280 + $0x3c] sm:$0xf]
        %v307 = vld [vmem:[%s247] sm:$0xff]
        %v308 = vld [vmem:[%s247 + $0x8] sm:$0xff]
        %v309 = vld [vmem:[%s247 + $0x10] sm:$0xff]
        %v310 = vld [vmem:[%s247 + $0x18] sm:$0xff]
        %v311 = vld [vmem:[%s247 + $0x20] sm:$0xff]
        %v312 = vld [vmem:[%s247 + $0x28] sm:$0xff]
        %v313 = vld [vmem:[%s247 + $0x30] sm:$0xff]
        %v314 = vld [vmem:[%s247 + $0x38] sm:$0xff]
        %v315 = vld [vmem:[%s247 + $0x40] sm:$0xff]
        %v316 = vld [vmem:[%s286] sm:$0x3]
        %v318 = vlaneseq
        %v319 = vshrl.u32 %v318, 7
        %v320 = vsub.s32 0, %v319
        %v321 = vrot.slane %v316, %v320
        %v322 = vlaneseq
        %v323 = vshrl.u32 %v322, 7
        %v324 = vsub.s32 1, %v323
        %v325 = vrot.slane %v316, %v324
        %v344 = vunpack.c.l.b16 %v291
        %v345 = vunpack.c.l.b16 %v292
        %v346 = vunpack.c.l.b16 %v293
        %v347 = vunpack.c.l.b16 %v294
        %v348 = vunpack.c.l.b16 %v295
        %v349 = vunpack.c.l.b16 %v296
        %v350 = vunpack.c.l.b16 %v297
        %v351 = vunpack.c.l.b16 %v298
        %v352 = vunpack.c.l.b16 %v299
        %v353 = vunpack.c.l.b16 %v300
        %v354 = vunpack.c.l.b16 %v301
        %v355 = vunpack.c.l.b16 %v302
        %v356 = vunpack.c.l.b16 %v303
        %v357 = vunpack.c.l.b16 %v304
        %v358 = vunpack.c.l.b16 %v305
        %v359 = vunpack.c.l.b16 %v306
        %v360 = vpack.c.b16 %v345, %v344
        %v361 = vpack.c.b16 %v347, %v346
        %v362 = vpack.c.b16 %v349, %v348
        %v363 = vpack.c.b16 %v351, %v350
        %v364 = vpack.c.b16 %v353, %v352
        %v365 = vpack.c.b16 %v355, %v354
        %v366 = vpack.c.b16 %v357, %v356
        %v367 = vpack.c.b16 %v359, %v358
        %v377 = vunpack.c.l.b16 %v307
        %v378 = vunpack.c.h.b16 %v307
        %v379 = vunpack.c.l.b16 %v308
        %v380 = vunpack.c.h.b16 %v308
        %v381 = vunpack.c.l.b16 %v309
        %v382 = vunpack.c.h.b16 %v309
        %v383 = vunpack.c.l.b16 %v310
        %v384 = vunpack.c.h.b16 %v310
        %v385 = vunpack.c.l.b16 %v311
        %v386 = vunpack.c.h.b16 %v311
        %v387 = vunpack.c.l.b16 %v312
        %v388 = vunpack.c.h.b16 %v312
        %v389 = vunpack.c.l.b16 %v313
        %v390 = vunpack.c.h.b16 %v313
        %v391 = vunpack.c.l.b16 %v314
        %v392 = vunpack.c.h.b16 %v314
        %v393 = vunpack.c.l.b16 %v315
        %v394 = vunpack.c.h.b16 %v315
        %v395 = vpack.c.b16 %v379, %v377
        %v396 = vpack.c.b16 %v380, %v378
        %v397 = vpack.c.b16 %v383, %v381
        %v398 = vpack.c.b16 %v384, %v382
        %v399 = vpack.c.b16 %v387, %v385
        %v400 = vpack.c.b16 %v388, %v386
        %v401 = vpack.c.b16 %v391, %v389
        %v402 = vpack.c.b16 %v392, %v390
        %v403 = vpack.c.b16 %v393, %v393
        %v404 = vpack.c.b16 %v394, %v394
        %vm413 = vcmask 588800
        %v415 = vsel %vm413, %v360, 0
        %v418 = vsel %vm413, %v361, 0
        %v421 = vsel %vm413, %v362, 0
        %v424 = vsel %vm413, %v363, 0
        %v427 = vsel %vm413, %v364, 0
        %v430 = vsel %vm413, %v365, 0
        %v433 = vsel %vm413, %v366, 0
        %v436 = vsel %vm413, %v367, 0
        %vm438 = vcmask 1043456
        %v440 = vsel %vm438, %v403, 0
        %v443 = vsel %vm438, %v404, 0
        %445 = vmatprep.subr.bf16.mxu0 %v396
        %446 = vmatpush1.bf16.msra.mxu0 %v395
        %447 = vmatprep.subr.bf16.mxu0 %v398
        %448 = vmatpush1.bf16.msra.mxu0 %v397
        %449 = vmatprep.subr.bf16.mxu0 %v400
        %450 = vmatpush1.bf16.msra.mxu0 %v399
        %451 = vmatprep.subr.bf16.mxu0 %v402
        %452 = vmatpush1.bf16.msra.mxu0 %v401
        %453 = vmatprep.subr.bf16.mxu0 %v443
        %454 = vmatpush1.bf16.msra.mxu0 %v440
        %455 = vmatprep.subr.bf16.mxu0 0
        %456 = vmatpush1.bf16.msra.mxu0 0
        %457 = vmatprep.subr.bf16.mxu0 0
        %458 = vmatpush1.bf16.msra.mxu0 0
        %459 = vmatprep.subr.bf16.mxu0 0
        %460 = vmatpush1.bf16.msra.mxu0 0
        %461 = vmatprep.subr.bf16.mxu0 0
        %462 = vmatpush1.bf16.msra.mxu0 0
        %463 = vmatprep.subr.bf16.mxu0 0
        %464 = vmatpush1.bf16.msra.mxu0 0
        %465 = vmatprep.subr.bf16.mxu0 0
        %466 = vmatpush1.bf16.msra.mxu0 0
        %467 = vmatprep.subr.bf16.mxu0 0
        %468 = vmatpush1.bf16.msra.mxu0 0
        %469 = vmatprep.subr.bf16.mxu0 0
        %470 = vmatpush1.bf16.msra.mxu0 0
        %471 = vmatprep.subr.bf16.mxu0 0
        %472 = vmatpush1.bf16.msra.mxu0 0
        %473 = vmatprep.subr.bf16.mxu0 0
        %474 = vmatpush1.bf16.msra.mxu0 0
        %475 = vmatprep.subr.bf16.mxu0 0
        %476 = vmatpush1.bf16.msra.mxu0 0
        %477 = vmatprep.mubr.bf16.mxu0 0
        %478 = vmatmul.mubr.bf16.gmra.mrb[0].mxu0 %v415
        %v479 = vpop.f32.mrb[0].mxu0
        %v480 = vadd.f32 %v321, %v479
        %v481 = vpop.f32.mrb[0].mxu0
        %v482 = vadd.f32 %v325, %v481
        %v483 = vpop.f32.mrb[0].mxu0
        %v484 = vadd.f32 %v321, %v483
        %v485 = vpop.f32.mrb[0].mxu0
        %v486 = vadd.f32 %v325, %v485
        %487 = vmatprep.mubr.bf16.mxu0 0
        %488 = vmatmul.mubr.bf16.gmra.mrb[0].mxu0 %v418
        %v489 = vpop.f32.mrb[0].mxu0
        %v490 = vadd.f32 %v321, %v489
        %v491 = vpop.f32.mrb[0].mxu0
        %v492 = vadd.f32 %v325, %v491
        %v493 = vpop.f32.mrb[0].mxu0
        %v494 = vadd.f32 %v321, %v493
        %v495 = vpop.f32.mrb[0].mxu0
        %v496 = vadd.f32 %v325, %v495
        %497 = vmatprep.mubr.bf16.mxu0 0
        %498 = vmatmul.mubr.bf16.gmra.mrb[0].mxu0 %v421
        %v499 = vpop.f32.mrb[0].mxu0
        %v500 = vadd.f32 %v321, %v499
        %v501 = vpop.f32.mrb[0].mxu0
        %v502 = vadd.f32 %v325, %v501
        %v503 = vpop.f32.mrb[0].mxu0
        %v504 = vadd.f32 %v321, %v503
        %v505 = vpop.f32.mrb[0].mxu0
        %v506 = vadd.f32 %v325, %v505
        %507 = vmatprep.mubr.bf16.mxu0 0
        %508 = vmatmul.mubr.bf16.gmra.mrb[0].mxu0 %v424
        %v509 = vpop.f32.mrb[0].mxu0
        %v510 = vadd.f32 %v321, %v509
        %v511 = vpop.f32.mrb[0].mxu0
        %v512 = vadd.f32 %v325, %v511
        %v513 = vpop.f32.mrb[0].mxu0
        %v514 = vadd.f32 %v321, %v513
        %v515 = vpop.f32.mrb[0].mxu0
        %v516 = vadd.f32 %v325, %v515
        %517 = vmatprep.mubr.bf16.mxu0 0
        %518 = vmatmul.mubr.bf16.gmra.mrb[0].mxu0 %v427
        %v519 = vpop.f32.mrb[0].mxu0
        %v520 = vadd.f32 %v321, %v519
        %v521 = vpop.f32.mrb[0].mxu0
        %v522 = vadd.f32 %v325, %v521
        %v523 = vpop.f32.mrb[0].mxu0
        %v524 = vadd.f32 %v321, %v523
        %v525 = vpop.f32.mrb[0].mxu0
        %v526 = vadd.f32 %v325, %v525
        %527 = vmatprep.mubr.bf16.mxu0 0
        %528 = vmatmul.mubr.bf16.gmra.mrb[0].mxu0 %v430
        %v529 = vpop.f32.mrb[0].mxu0
        %v530 = vadd.f32 %v321, %v529
        %v531 = vpop.f32.mrb[0].mxu0
        %v532 = vadd.f32 %v325, %v531
        %v533 = vpop.f32.mrb[0].mxu0
        %v534 = vadd.f32 %v321, %v533
        %v535 = vpop.f32.mrb[0].mxu0
        %v536 = vadd.f32 %v325, %v535
        %537 = vmatprep.mubr.bf16.mxu0 0
        %538 = vmatmul.mubr.bf16.gmra.mrb[0].mxu0 %v433
        %v539 = vpop.f32.mrb[0].mxu0
        %v540 = vadd.f32 %v321, %v539
        %v541 = vpop.f32.mrb[0].mxu0
        %v542 = vadd.f32 %v325, %v541
        %v543 = vpop.f32.mrb[0].mxu0
        %v544 = vadd.f32 %v321, %v543
        %v545 = vpop.f32.mrb[0].mxu0
        %v546 = vadd.f32 %v325, %v545
        %547 = vmatprep.mubr.bf16.mxu0 0
        %548 = vmatmul.mubr.bf16.gmra.mrb[0].mxu0 %v436
        %v549 = vpop.f32.mrb[0].mxu0
        %v550 = vadd.f32 %v321, %v549
        %v551 = vpop.f32.mrb[0].mxu0
        %v552 = vadd.f32 %v325, %v551
        %v553 = vpop.f32.mrb[0].mxu0
        %v554 = vadd.f32 %v321, %v553
        %v555 = vpop.f32.mrb[0].mxu0
        %v556 = vadd.f32 %v325, %v555
        %557 = vdwg.mxu0
        %558 = vst [vmem:[%s275] sm:$0xff] %v480
        %559 = vst [vmem:[%s275 + $0x8] sm:$0xff] %v482
        %560 = vst [vmem:[%s275 + $0x10] sm:$0xff] %v484
        %561 = vst [vmem:[%s275 + $0x18] sm:$0xff] %v486
        %562 = vst [vmem:[%s275 + $0x20] sm:$0xff] %v490
        %563 = vst [vmem:[%s275 + $0x28] sm:$0xff] %v492
        %564 = vst [vmem:[%s275 + $0x30] sm:$0xff] %v494
        %565 = vst [vmem:[%s275 + $0x38] sm:$0xff] %v496
        %566 = vst [vmem:[%s275 + $0x40] sm:$0xff] %v500
        %567 = vst [vmem:[%s275 + $0x48] sm:$0xff] %v502
        %568 = vst [vmem:[%s275 + $0x50] sm:$0xff] %v504
        %569 = vst [vmem:[%s275 + $0x58] sm:$0xff] %v506
        %570 = vst [vmem:[%s275 + $0x60] sm:$0xff] %v510
        %571 = vst [vmem:[%s275 + $0x68] sm:$0xff] %v512
        %572 = vst [vmem:[%s275 + $0x70] sm:$0xff] %v514
        %573 = vst [vmem:[%s275 + $0x78] sm:$0xff] %v516
        %574 = vst [vmem:[%s275 + $0x80] sm:$0xff] %v520
        %575 = vst [vmem:[%s275 + $0x88] sm:$0xff] %v522
        %576 = vst [vmem:[%s275 + $0x90] sm:$0xff] %v524
        %577 = vst [vmem:[%s275 + $0x98] sm:$0xff] %v526
        %578 = vst [vmem:[%s275 + $0xa0] sm:$0xff] %v530
        %579 = vst [vmem:[%s275 + $0xa8] sm:$0xff] %v532
        %580 = vst [vmem:[%s275 + $0xb0] sm:$0xff] %v534
        %581 = vst [vmem:[%s275 + $0xb8] sm:$0xff] %v536
        %582 = vst [vmem:[%s275 + $0xc0] sm:$0xff] %v540
        %583 = vst [vmem:[%s275 + $0xc8] sm:$0xff] %v542
        %584 = vst [vmem:[%s275 + $0xd0] sm:$0xff] %v544
        %585 = vst [vmem:[%s275 + $0xd8] sm:$0xff] %v546
        %586 = vst [vmem:[%s275 + $0xe0] sm:$0xff] %v550
        %587 = vst [vmem:[%s275 + $0xe8] sm:$0xff] %v552
        %588 = vst [vmem:[%s275 + $0xf0] sm:$0xff] %v554
        %589 = vst [vmem:[%s275 + $0xf8] sm:$0xff] %v556
        %s590 = sand.u32 %s114, 1
        %s591 = sand.u32 %s114, 1
        %s592 = smul.addr %s591, 256
        %s593 = scalar_lea.vmem [#allocation3], %s592
        // Predicated region
        $region71: #{decoder_forward.9} parent=65 // pred_check
          %p594 = pneg %p124
        $region72: #{decoder_forward.9} parent=65 // pred_check_branch
          %596 = sbr.rel (%p594) target = $region74
        $region73: #{decoder_forward.9} parent=65 // pred_region
          %s597 = smul.u32 16, %s18
          %s598 = smul.u32 2, %s19
          %s599 = smul.addr %s597, 4
          %s600 = sadd.s32 %s598, %s599
          %s601 = smul.addr %s600, 8
          %s602 = scalar_lea.vmem %s3, %s601
          // Predicated region
          $region75: #{decoder_forward.9} parent=73 // pred_check
            _
          $region76: #{decoder_forward.9} parent=73 // pred_check_branch
            %604 = sbr.rel (0) target = $region78
          $region77: #{decoder_forward.9} parent=73 // pred_region
            // Predicated region
            $region79: #{decoder_forward.9} parent=77 // pred_check
              _
            $region80: #{decoder_forward.9} parent=77 // pred_check_branch
              %606 = sbr.rel (0) target = $region82
            $region81: #{decoder_forward.9} parent=77 // pred_region
              loop: start=0, step=1, limit=1
              $region83: #{decoder_forward.9} parent=81 // loop_pre_header
                _
              $region84: #{decoder_forward.9} parent=81 // loop_header
                %s608 = sphi 0, %s612
                %p609 = scmp.ge.s32.totalorder %s608, 1
                %s613 = sphi %s593, %s593
                %s614 = sphi %s602, %s602
              $region85: #{decoder_forward.9} parent=81 // loop_header_branch
                %611 = sbr.rel (%p609) target = $region89
              $region86: #{decoder_forward.9} parent=81 // loop_body
                %v615 = vld [vmem:[%s613] sm:$0xff]
                %616 = vst [vmem:[%s614] sm:$0xff] %v615
                %v617 = vld [vmem:[%s613 + $0x8] sm:$0xff]
                %618 = vst [vmem:[%s614 + $0x8] sm:$0xff] %v617
                %v619 = vld [vmem:[%s613 + $0x10] sm:$0xff]
                %620 = vst [vmem:[%s614 + $0x20] sm:$0xff] %v619
                %v621 = vld [vmem:[%s613 + $0x18] sm:$0xff]
                %622 = vst [vmem:[%s614 + $0x28] sm:$0xff] %v621
                %v623 = vld [vmem:[%s613 + $0x20] sm:$0xff]
                %624 = vst [vmem:[%s614 + $0x40] sm:$0xff] %v623
                %v625 = vld [vmem:[%s613 + $0x28] sm:$0xff]
                %626 = vst [vmem:[%s614 + $0x48] sm:$0xff] %v625
                %v627 = vld [vmem:[%s613 + $0x30] sm:$0xff]
                %628 = vst [vmem:[%s614 + $0x60] sm:$0xff] %v627
                %v629 = vld [vmem:[%s613 + $0x38] sm:$0xff]
                %630 = vst [vmem:[%s614 + $0x68] sm:$0xff] %v629
                %v631 = vld [vmem:[%s613 + $0x40] sm:$0xff]
                %632 = vst [vmem:[%s614 + $0x80] sm:$0xff] %v631
                %v633 = vld [vmem:[%s613 + $0x48] sm:$0xff]
                %634 = vst [vmem:[%s614 + $0x88] sm:$0xff] %v633
                %v635 = vld [vmem:[%s613 + $0x50] sm:$0xff]
                %636 = vst [vmem:[%s614 + $0xa0] sm:$0xff] %v635
                %v637 = vld [vmem:[%s613 + $0x58] sm:$0xff]
                %638 = vst [vmem:[%s614 + $0xa8] sm:$0xff] %v637
                %v639 = vld [vmem:[%s613 + $0x60] sm:$0xff]
                %640 = vst [vmem:[%s614 + $0xc0] sm:$0xff] %v639
                %v641 = vld [vmem:[%s613 + $0x68] sm:$0xff]
                %642 = vst [vmem:[%s614 + $0xc8] sm:$0xff] %v641
                %v643 = vld [vmem:[%s613 + $0x70] sm:$0xff]
                %644 = vst [vmem:[%s614 + $0xe0] sm:$0xff] %v643
                %v645 = vld [vmem:[%s613 + $0x78] sm:$0xff]
                %646 = vst [vmem:[%s614 + $0xe8] sm:$0xff] %v645
                %v647 = vld [vmem:[%s613 + $0x80] sm:$0xff]
                %648 = vst [vmem:[%s614 + $0x100] sm:$0xff] %v647
                %v649 = vld [vmem:[%s613 + $0x88] sm:$0xff]
                %650 = vst [vmem:[%s614 + $0x108] sm:$0xff] %v649
                %v651 = vld [vmem:[%s613 + $0x90] sm:$0xff]
                %652 = vst [vmem:[%s614 + $0x120] sm:$0xff] %v651
                %v653 = vld [vmem:[%s613 + $0x98] sm:$0xff]
                %654 = vst [vmem:[%s614 + $0x128] sm:$0xff] %v653
                %v655 = vld [vmem:[%s613 + $0xa0] sm:$0xff]
                %656 = vst [vmem:[%s614 + $0x140] sm:$0xff] %v655
                %v657 = vld [vmem:[%s613 + $0xa8] sm:$0xff]
                %658 = vst [vmem:[%s614 + $0x148] sm:$0xff] %v657
                %v659 = vld [vmem:[%s613 + $0xb0] sm:$0xff]
                %660 = vst [vmem:[%s614 + $0x160] sm:$0xff] %v659
                %v661 = vld [vmem:[%s613 + $0xb8] sm:$0xff]
                %662 = vst [vmem:[%s614 + $0x168] sm:$0xff] %v661
                %v663 = vld [vmem:[%s613 + $0xc0] sm:$0xff]
                %664 = vst [vmem:[%s614 + $0x180] sm:$0xff] %v663
                %v665 = vld [vmem:[%s613 + $0xc8] sm:$0xff]
                %666 = vst [vmem:[%s614 + $0x188] sm:$0xff] %v665
                %v667 = vld [vmem:[%s613 + $0xd0] sm:$0xff]
                %668 = vst [vmem:[%s614 + $0x1a0] sm:$0xff] %v667
                %v669 = vld [vmem:[%s613 + $0xd8] sm:$0xff]
                %670 = vst [vmem:[%s614 + $0x1a8] sm:$0xff] %v669
                %v671 = vld [vmem:[%s613 + $0xe0] sm:$0xff]
                %672 = vst [vmem:[%s614 + $0x1c0] sm:$0xff] %v671
                %v673 = vld [vmem:[%s613 + $0xe8] sm:$0xff]
                %674 = vst [vmem:[%s614 + $0x1c8] sm:$0xff] %v673
                %v675 = vld [vmem:[%s613 + $0xf0] sm:$0xff]
                %676 = vst [vmem:[%s614 + $0x1e0] sm:$0xff] %v675
                %v677 = vld [vmem:[%s613 + $0xf8] sm:$0xff]
                %678 = vst [vmem:[%s614 + $0x1e8] sm:$0xff] %v677
              $region87: #{decoder_forward.9} parent=81 // loop_footer
                %s612 = sadd.s32 1, %s608
              $region88: #{decoder_forward.9} parent=81 // loop_footer_branch
                %607 = sbr.rel target = $region84
              $region89: #{decoder_forward.9} parent=81 // loop_exit
                _
            $region82: #{decoder_forward.9} parent=77 // pred_fallthru
              _
            // Predicated region
            $region90: #{decoder_forward.9} parent=77 // pred_check
              _
            $region91: #{decoder_forward.9} parent=77 // pred_check_branch
              %680 = sbr.rel target = $region93
            $region92: #{decoder_forward.9} parent=77 // pred_region
              _
            $region93: #{decoder_forward.9} parent=77 // pred_fallthru
              _
          $region78: #{decoder_forward.9} parent=73 // pred_fallthru
            _
          %681 = vnop
        $region74: #{decoder_forward.9} parent=65 // pred_fallthru
          _
      $region66: #{decoder_forward.9} parent=5 // pred_fallthru
        _
      %p682 = scmp.le.s32.totalorder 2, %s9
      // Predicated region
      $region94: #{decoder_forward.9} parent=5 // pred_check
        %p683 = pneg %p682
      $region95: #{decoder_forward.9} parent=5 // pred_check_branch
        %685 = sbr.rel (%p683) target = $region97
      $region96: #{decoder_forward.9} parent=5 // pred_region
        %s686 = ssub.s32 %s9, 2
        // Predicated region
        $region98: #{decoder_forward.9} parent=96 // pred_check
          %p687 = pneg %p130
        $region99: #{decoder_forward.9} parent=96 // pred_check_branch
          %689 = sbr.rel (%p687) target = $region101
        $region100: #{decoder_forward.9} parent=96 // pred_region
          %s690 = sand.u32 %s115, 1
          %s691 = sand.u32 %s115, 1
          %s692 = smul.addr %s691, 256
          %s693 = scalar_lea.vmem [#allocation3], %s692
        $region101: #{decoder_forward.9} parent=96 // pred_fallthru
          _
      $region97: #{decoder_forward.9} parent=5 // pred_fallthru
        _
    $region6: #{decoder_forward.9} parent=1 // loop_footer
      %s13 = sadd.s32 1, %s9
    $region7: #{decoder_forward.9} parent=1 // loop_footer_branch
      %8 = sbr.rel target = $region3
    $region8: #{decoder_forward.9} parent=1 // loop_exit
      _

</llo_original>
